<compile_context>
chip_gen: v5e
topology: v5e:2x2
jax: 0.10.0
libtpu: 0.0.40
codegen_flags: <defaults>
</compile_context>

<pallas_src>
import functools

import jax
import jax.numpy as jnp
from jax.experimental import pallas as pl
from jax.experimental.pallas import tpu as pltpu

NEG = -1e30  # stands in for float('-inf'); exp underflows to exactly 0 in f32


def transformer_block_kernel(
    x_ref, memkv_ref, qmask_ref, kmask_ref,
    g1_ref, be1_ref, wq_ref, wkv_ref, g2_ref, be2_ref,
    w1_ref, b1_ref, w2_ref, b2_ref,
    out_ref, attnw_ref, kvout_ref,
    *, num_heads, dim_head, window_size):
  Bb, N, D = x_ref.shape
  M = memkv_ref.shape[2]
  J = M + N
  H = num_heads
  Dh = dim_head
  Dh2 = 2 * Dh
  R = Bb * N                      # all rows in this block feed the MXU at once

  # ---- norm1 (pre-LN), LayerNorm eps=1e-5, biased variance, on (R, D) ----
  x = x_ref[...].reshape(R, D)    # leading-dim merge: free (layout unchanged)
  mu = jnp.mean(x, axis=-1, keepdims=True)
  var = jnp.mean((x - mu) ** 2, axis=-1, keepdims=True)
  xn = (x - mu) * jax.lax.rsqrt(var + 1e-5) * g1_ref[...] + be1_ref[...]
  xn_bf = xn.astype(jnp.bfloat16)

  # ---- q / kv projections: single (R, D) x (D, .) bf16 MXU matmuls ----
  q = jnp.dot(xn_bf, wq_ref[...], preferred_element_type=jnp.float32)    # (R, D)
  kv = jnp.dot(xn_bf, wkv_ref[...], preferred_element_type=jnp.float32)  # (R, 2D)
  # Bulk writeback of the freshly projected kv (natural matmul layout); the
  # concat with the unchanged mem_kv rows is done in the XLA wrapper.
  kvout_ref[...] = kv.reshape(Bb, N, 2 * D)

  scale = float(Dh) ** -0.5
  q_bf = (q * scale).astype(jnp.bfloat16).reshape(Bb, N, D)   # scale once
  kv_bf = kv.astype(jnp.bfloat16).reshape(Bb, N, 2 * D)
  mem_bf = memkv_ref[...].astype(jnp.bfloat16)                # (Bb, H, M, 2Dh)

  # ---- mask (causal + exact-window + query/key), hoisted out of head loop ----
  qkeep = qmask_ref[...] > 0.5                                # (Bb, N, 1)
  kkeep = kmask_ref[...] > 0.5                                # (Bb, 1, J)
  ti = jax.lax.broadcasted_iota(jnp.int32, (N, J), 0)         # query index i
  tj = jax.lax.broadcasted_iota(jnp.int32, (N, J), 1)         # key index j
  cw = ((J + ti) < (N + tj)) | ((J + ti) > (N + tj + window_size))
  masked = cw[None] | (~kkeep) | (~qkeep)                     # (Bb, N, J) bool

  attn_sum = jnp.zeros((Bb, N, J), jnp.float32)
  head_outs = []
  for h in range(H):  # static unroll; H is small
    q_h = q_bf[:, :, h * Dh:(h + 1) * Dh]                     # (Bb, N, Dh)
    k_mem = mem_bf[:, h, :, :Dh]                              # (Bb, M, Dh)
    v_mem = mem_bf[:, h, :, Dh:]                              # (Bb, M, Dh)
    k_new = kv_bf[:, :, h * Dh2:h * Dh2 + Dh]                 # (Bb, N, Dh)
    v_new = kv_bf[:, :, h * Dh2 + Dh:(h + 1) * Dh2]           # (Bb, N, Dh)

    # scores in two pieces (mem keys | new keys), lane-axis concat is cheap
    sim = jnp.concatenate(
        [jnp.einsum('bie,bje->bij', q_h, k_mem,
                    preferred_element_type=jnp.float32),
         jnp.einsum('bie,bje->bij', q_h, k_new,
                    preferred_element_type=jnp.float32)],
        axis=-1)                                              # (Bb, N, J) f32
    sim = jnp.where(masked, NEG, sim)                         # single select

    m = jnp.max(sim, axis=-1, keepdims=True)
    p = jnp.exp(sim - m)
    attn = p * pl.reciprocal(jnp.sum(p, axis=-1, keepdims=True), approx=False)
    attn_sum = attn_sum + attn
    attn_bf = attn.astype(jnp.bfloat16)
    o_h = (jnp.einsum('bij,bje->bie', attn_bf[:, :, :M], v_mem,
                      preferred_element_type=jnp.float32) +
           jnp.einsum('bij,bje->bie', attn_bf[:, :, M:], v_new,
                      preferred_element_type=jnp.float32))    # (Bb, N, Dh)
    head_outs.append(o_h)

  attnw_ref[...] = attn_sum * (1.0 / H)                       # mean over heads
  h_att = jnp.concatenate(head_outs, axis=-1).reshape(R, D)   # 'h n d -> n (h d)'
  hres = h_att + x                                            # residual

  # ---- norm2 + FFN (Linear-ReLU-Linear), bf16 operands, f32 accumulate ----
  mu2 = jnp.mean(hres, axis=-1, keepdims=True)
  var2 = jnp.mean((hres - mu2) ** 2, axis=-1, keepdims=True)
  hn = (hres - mu2) * jax.lax.rsqrt(var2 + 1e-5) * g2_ref[...] + be2_ref[...]
  ff = jnp.maximum(
      jnp.dot(hn.astype(jnp.bfloat16), w1_ref[...],
              preferred_element_type=jnp.float32) + b1_ref[...], 0.0)
  ff = jnp.dot(ff.astype(jnp.bfloat16), w2_ref[...],
               preferred_element_type=jnp.float32) + b2_ref[...]
  out_ref[...] = (ff + hres).reshape(Bb, N, D)


def _pick_block_batch(batch, seq):
  """Largest divisor of `batch` keeping <=128 rows/block and >=2 grid steps."""
  best = 1
  for bb in range(1, batch + 1):
    if batch % bb:
      continue
    if bb * seq > 128:
      continue
    if batch // bb < 2 and batch >= 2:
      continue  # keep >=2 parallel grid steps (v7x has 2 TensorCores)
    best = bb
  return best


def transformer_block(x, mem_kv, query_mask, key_mask, params,
                      *, num_heads, dim_head, window_size, block_batch=None):
  B, N, D = x.shape
  H, Dh = num_heads, dim_head
  M = mem_kv.shape[2]
  J = M + N
  assert D == H * Dh
  assert mem_kv.shape == (B, H, M, 2 * Dh)

  Bb = _pick_block_batch(B, N) if block_batch is None else block_batch
  assert B % Bb == 0

  qm = query_mask[:, :, None].astype(jnp.float32)   # (B, N, 1)
  km = key_mask[:, None, :].astype(jnp.float32)     # (B, 1, J)

  g1, be1, wq, wkv, g2, be2, w1, b1, w2, b2 = params
  bf = jnp.bfloat16
  kparams = (g1, be1, wq.astype(bf), wkv.astype(bf), g2, be2,
             w1.astype(bf), b1, w2.astype(bf), b2)   # bf16 weights: half the DMA

  kernel = functools.partial(
      transformer_block_kernel,
      num_heads=H, dim_head=Dh, window_size=window_size)

  def full_spec(shape):
    return pl.BlockSpec(shape, lambda b, n=len(shape): (0,) * n)

  in_specs = [
      pl.BlockSpec((Bb, N, D), lambda b: (b, 0, 0)),             # x
      pl.BlockSpec((Bb, H, M, 2 * Dh), lambda b: (b, 0, 0, 0)),  # mem_kv
      pl.BlockSpec((Bb, N, 1), lambda b: (b, 0, 0)),             # query mask
      pl.BlockSpec((Bb, 1, J), lambda b: (b, 0, 0)),             # key mask
      full_spec((1, D)), full_spec((1, D)),                      # norm1 gamma/beta
      full_spec((D, D)), full_spec((D, 2 * D)),                  # to_q, to_kv
      full_spec((1, D)), full_spec((1, D)),                      # norm2 gamma/beta
      full_spec((D, 4 * D)), full_spec((1, 4 * D)),              # FFN w1, b1
      full_spec((4 * D, D)), full_spec((1, D)),                  # FFN w2, b2
  ]
  out_specs = [
      pl.BlockSpec((Bb, N, D), lambda b: (b, 0, 0)),             # out
      pl.BlockSpec((Bb, N, J), lambda b: (b, 0, 0)),             # attn weights
      pl.BlockSpec((Bb, N, 2 * D), lambda b: (b, 0, 0)),         # new kv proj
  ]
  out_shape = (
      jax.ShapeDtypeStruct((B, N, D), jnp.float32),
      jax.ShapeDtypeStruct((B, N, J), jnp.float32),
      jax.ShapeDtypeStruct((B, N, 2 * D), jnp.float32),
  )
  out, attn_w, kv_proj = pl.pallas_call(
      kernel,
      out_shape=out_shape,
      grid_spec=pltpu.PrefetchScalarGridSpec(
          num_scalar_prefetch=0,
          grid=(B // Bb,),
          in_specs=in_specs,
          out_specs=out_specs),
      compiler_params=pltpu.CompilerParams(
          dimension_semantics=("parallel",)),
  )(x, mem_kv, qm, km, *kparams)

  # mem_kv writeback is pure data movement: concat the unchanged input rows
  # with the kernel's kv projection in XLA instead of re-storing them in-kernel.
  kv_new = kv_proj.reshape(B, N, H, 2 * Dh).transpose(0, 2, 1, 3)  # (B,H,N,2Dh)
  new_mem = jnp.concatenate([mem_kv, kv_new], axis=2)              # (B,H,J,2Dh)
  return out, attn_w, new_mem


def reference(x, mem_kv, query_mask, key_mask, params,
              *, num_heads, dim_head, window_size):
  """Plain-JAX (f32) replica of the PyTorch forward (for validation)."""
  g1, be1, wq, wkv, g2, be2, w1, b1, w2, b2 = params
  H, Dh = num_heads, dim_head

  def ln(t, g, be):
    mu = jnp.mean(t, -1, keepdims=True)
    v = jnp.mean((t - mu) ** 2, -1, keepdims=True)
    return (t - mu) / jnp.sqrt(v + 1e-5) * g + be

  B, N, D = x.shape
  xn = ln(x, g1, be1)
  q = (xn @ wq).reshape(B, N, H, Dh).transpose(0, 2, 1, 3)
  kv = (xn @ wkv).reshape(B, N, H, 2 * Dh).transpose(0, 2, 1, 3)
  mem = jnp.concatenate([mem_kv, kv], axis=2)
  k, v = mem[..., :Dh], mem[..., Dh:]
  J = k.shape[2]
  sim = jnp.einsum('bhie,bhje->bhij', q * Dh ** -0.5, k)
  sim = jnp.where(key_mask[:, None, None, :] > 0.5, sim, NEG)
  sim = jnp.where(query_mask[:, None, :, None] > 0.5, sim, NEG)
  ti = jnp.arange(N)[:, None] + J
  tj = jnp.arange(J)[None, :] + N
  cw = (ti < tj) | (ti > tj + window_size)
  sim = jnp.where(cw[None, None], NEG, sim)
  attn = jax.nn.softmax(sim, axis=-1)
  attn_w = attn.mean(axis=1)
  o = jnp.einsum('bhij,bhje->bhie', attn, v).transpose(0, 2, 1, 3).reshape(B, N, D)
  hres = o + x
  hn = ln(hres, g2, be2)
  ff = jax.nn.relu(hn @ w1 + b1) @ w2 + b2
  return ff + hres, attn_w, mem


if __name__ == "__main__":
  # cfg: num_heads=4, dim_head=8 (-> dim=32), window_size=4, layer_norm='pre',
  # positional_encoding=None, dropout=0.0.  seq=8, mem len=8 -> 16 keys.
  # batch=8 so the kernel folds Bb=4 batches per block (32 MXU rows, grid=2).
  B, H, Dh, N, M, W = 8, 4, 8, 8, 8, 4
  D = H * Dh
  J = M + N

  key = jax.random.PRNGKey(0)
  ks = jax.random.split(key, 12)
  x = jax.random.normal(ks[0], (B, N, D), jnp.float32)
  mem_kv = jax.random.normal(ks[1], (B, H, M, 2 * Dh), jnp.float32)
  # one fully-masked query row and a couple of masked keys (no row loses all
  # of its in-window keys); fully-masked rows give uniform 1/J weights in both
  # kernel and reference (NEG stand-in for -inf), matching the prior semantics.
  query_mask = jnp.ones((B, N), jnp.float32).at[2, 3].set(0.0)
  key_mask = jnp.ones((B, J), jnp.float32).at[1, 5].set(0.0).at[3, 12].set(0.0)

  def wgt(k, shape, s=0.08):
    return s * jax.random.normal(k, shape, jnp.float32)

  params = (
      1.0 + 0.1 * jax.random.normal(ks[2], (1, D), jnp.float32),   # norm1 gamma
      0.1 * jax.random.normal(ks[3], (1, D), jnp.float32),         # norm1 beta
      wgt(ks[4], (D, D)),                                          # to_q  (in,out)
      wgt(ks[5], (D, 2 * D)),                                      # to_kv (in,out)
      1.0 + 0.1 * jax.random.normal(ks[6], (1, D), jnp.float32),   # norm2 gamma
      0.1 * jax.random.normal(ks[7], (1, D), jnp.float32),         # norm2 beta
      wgt(ks[8], (D, 4 * D)),                                      # FFN w1
      0.05 * jax.random.normal(ks[9], (1, 4 * D), jnp.float32),    # FFN b1
      wgt(ks[10], (4 * D, D)),                                     # FFN w2
      0.05 * jax.random.normal(ks[11], (1, D), jnp.float32),       # FFN b2
  )

  out, attn_w, new_mem = transformer_block(
      x, mem_kv, query_mask, key_mask, params,
      num_heads=H, dim_head=Dh, window_size=W)
  jax.block_until_ready((out, attn_w, new_mem))

  r_out, r_attn, r_mem = reference(
      x, mem_kv, query_mask, key_mask, params,
      num_heads=H, dim_head=Dh, window_size=W)
  # Tolerances account for bf16 MXU operands in the kernel vs the pure-f32
  # reference (softmax / LayerNorm math stays f32 in the kernel).
  assert jnp.allclose(out, r_out, atol=1e-1, rtol=1e-1), "output mismatch"
  assert jnp.allclose(attn_w, r_attn, atol=2e-2, rtol=2e-2), "attn mismatch"
  assert jnp.allclose(new_mem, r_mem, atol=2e-2, rtol=2e-2), "mem_kv mismatch"
  print("KERNEL_OK")
</pallas_src>

<mosaic_0001>
module attributes {stable_mosaic.version = 11 : i64} {
  func.func @transformer_block_kernel(%arg0: i32, %arg1: memref<4x8x32xf32, #tpu.memory_space<vmem>>, %arg2: memref<4x4x8x16xf32, #tpu.memory_space<vmem>>, %arg3: memref<4x8x1xf32, #tpu.memory_space<vmem>>, %arg4: memref<4x1x16xf32, #tpu.memory_space<vmem>>, %arg5: memref<1x32xf32, #tpu.memory_space<vmem>>, %arg6: memref<1x32xf32, #tpu.memory_space<vmem>>, %arg7: memref<32x32xbf16, #tpu.memory_space<vmem>>, %arg8: memref<32x64xbf16, #tpu.memory_space<vmem>>, %arg9: memref<1x32xf32, #tpu.memory_space<vmem>>, %arg10: memref<1x32xf32, #tpu.memory_space<vmem>>, %arg11: memref<32x128xbf16, #tpu.memory_space<vmem>>, %arg12: memref<1x128xf32, #tpu.memory_space<vmem>>, %arg13: memref<128x32xbf16, #tpu.memory_space<vmem>>, %arg14: memref<1x32xf32, #tpu.memory_space<vmem>>, %arg15: memref<4x8x32xf32, #tpu.memory_space<vmem>>, %arg16: memref<4x8x16xf32, #tpu.memory_space<vmem>>, %arg17: memref<4x8x64xf32, #tpu.memory_space<vmem>>) attributes {dimension_semantics = [#tpu.dimension_semantics<parallel>], iteration_bounds = array<i64: 2>, scalar_prefetch = 0 : i64, scratch_operands = 0 : i64, tpu.core_type = #tpu.core_type<tc>, window_params = [{transform_indices = @transform_0, window_bounds = array<i64: 4, 8, 32>}, {transform_indices = @transform_1, window_bounds = array<i64: 4, 4, 8, 16>}, {transform_indices = @transform_2, window_bounds = array<i64: 4, 8, 1>}, {transform_indices = @transform_3, window_bounds = array<i64: 4, 1, 16>}, {pipeline_mode = #tpu.pipeline_mode<synchronous>, transform_indices = @transform_4, window_bounds = array<i64: 1, 32>}, {pipeline_mode = #tpu.pipeline_mode<synchronous>, transform_indices = @transform_5, window_bounds = array<i64: 1, 32>}, {pipeline_mode = #tpu.pipeline_mode<synchronous>, transform_indices = @transform_6, window_bounds = array<i64: 32, 32>}, {pipeline_mode = #tpu.pipeline_mode<synchronous>, transform_indices = @transform_7, window_bounds = array<i64: 32, 64>}, {pipeline_mode = #tpu.pipeline_mode<synchronous>, transform_indices = @transform_8, window_bounds = array<i64: 1, 32>}, {pipeline_mode = #tpu.pipeline_mode<synchronous>, transform_indices = @transform_9, window_bounds = array<i64: 1, 32>}, {pipeline_mode = #tpu.pipeline_mode<synchronous>, transform_indices = @transform_10, window_bounds = array<i64: 32, 128>}, {pipeline_mode = #tpu.pipeline_mode<synchronous>, transform_indices = @transform_11, window_bounds = array<i64: 1, 128>}, {pipeline_mode = #tpu.pipeline_mode<synchronous>, transform_indices = @transform_12, window_bounds = array<i64: 128, 32>}, {pipeline_mode = #tpu.pipeline_mode<synchronous>, transform_indices = @transform_13, window_bounds = array<i64: 1, 32>}, {transform_indices = @transform_14, window_bounds = array<i64: 4, 8, 32>}, {transform_indices = @transform_15, window_bounds = array<i64: 4, 8, 16>}, {transform_indices = @transform_16, window_bounds = array<i64: 4, 8, 64>}]} {
    %c0 = arith.constant 0 : index
    %c0_0 = arith.constant 0 : index
    %c0_1 = arith.constant 0 : index
    %0 = vector.load %arg1[%c0, %c0_0, %c0_1] : memref<4x8x32xf32, #tpu.memory_space<vmem>>, vector<4x8x32xf32>
    %1 = vector.shape_cast %0 : vector<4x8x32xf32> to vector<32x32xf32>
    %cst = arith.constant dense<0.000000e+00> : vector<32xf32>
    %2 = vector.multi_reduction <add>, %1, %cst [1] : vector<32x32xf32> to vector<32xf32>
    %3 = vector.shape_cast %2 : vector<32xf32> to vector<32x1xf32>
    %cst_2 = arith.constant 3.200000e+01 : f32
    %4 = vector.broadcast %cst_2 : f32 to vector<32x1xf32>
    %5 = arith.divf %3, %4 : vector<32x1xf32>
    %6 = vector.broadcast %5 : vector<32x1xf32> to vector<32x32xf32>
    %7 = arith.subf %1, %6 : vector<32x32xf32>
    %8 = arith.mulf %7, %7 : vector<32x32xf32>
    %cst_3 = arith.constant dense<0.000000e+00> : vector<32xf32>
    %9 = vector.multi_reduction <add>, %8, %cst_3 [1] : vector<32x32xf32> to vector<32xf32>
    %10 = vector.shape_cast %9 : vector<32xf32> to vector<32x1xf32>
    %cst_4 = arith.constant 3.200000e+01 : f32
    %11 = vector.broadcast %cst_4 : f32 to vector<32x1xf32>
    %12 = arith.divf %10, %11 : vector<32x1xf32>
    %13 = vector.broadcast %5 : vector<32x1xf32> to vector<32x32xf32>
    %14 = arith.subf %1, %13 : vector<32x32xf32>
    %cst_5 = arith.constant 9.99999974E-6 : f32
    %15 = vector.broadcast %cst_5 : f32 to vector<32x1xf32>
    %16 = arith.addf %12, %15 : vector<32x1xf32>
    %17 = math.rsqrt %16 : vector<32x1xf32>
    %18 = vector.broadcast %17 : vector<32x1xf32> to vector<32x32xf32>
    %19 = arith.mulf %14, %18 : vector<32x32xf32>
    %c0_6 = arith.constant 0 : index
    %c0_7 = arith.constant 0 : index
    %20 = vector.load %arg5[%c0_6, %c0_7] : memref<1x32xf32, #tpu.memory_space<vmem>>, vector<1x32xf32>
    %21 = vector.broadcast %20 : vector<1x32xf32> to vector<32x32xf32>
    %22 = arith.mulf %19, %21 : vector<32x32xf32>
    %c0_8 = arith.constant 0 : index
    %c0_9 = arith.constant 0 : index
    %23 = vector.load %arg6[%c0_8, %c0_9] : memref<1x32xf32, #tpu.memory_space<vmem>>, vector<1x32xf32>
    %24 = vector.broadcast %23 : vector<1x32xf32> to vector<32x32xf32>
    %25 = arith.addf %22, %24 : vector<32x32xf32>
    %26 = arith.truncf %25 : vector<32x32xf32> to vector<32x32xbf16>
    %c0_10 = arith.constant 0 : index
    %c0_11 = arith.constant 0 : index
    %27 = vector.load %arg7[%c0_10, %c0_11] : memref<32x32xbf16, #tpu.memory_space<vmem>>, vector<32x32xbf16>
    %cst_12 = arith.constant dense<0.000000e+00> : vector<32x32xf32>
    %28 = tpu.matmul %26, %27, %cst_12 {dimension_numbers = #tpu.dot_dimension_numbers<[1], [0], [0], [1], [0, 0, 1, 1], [], []>} : vector<32x32xbf16>, vector<32x32xbf16>, vector<32x32xf32> -> vector<32x32xf32>
    %c0_13 = arith.constant 0 : index
    %c0_14 = arith.constant 0 : index
    %29 = vector.load %arg8[%c0_13, %c0_14] : memref<32x64xbf16, #tpu.memory_space<vmem>>, vector<32x64xbf16>
    %cst_15 = arith.constant dense<0.000000e+00> : vector<32x64xf32>
    %30 = tpu.matmul %26, %29, %cst_15 {dimension_numbers = #tpu.dot_dimension_numbers<[1], [0], [0], [1], [0, 0, 1, 1], [], []>} : vector<32x32xbf16>, vector<32x64xbf16>, vector<32x64xf32> -> vector<32x64xf32>
    %31 = vector.shape_cast %30 : vector<32x64xf32> to vector<4x8x64xf32>
    %c0_16 = arith.constant 0 : index
    %c0_17 = arith.constant 0 : index
    %c0_18 = arith.constant 0 : index
    %32 = vector.load %arg17[%c0_16, %c0_17, %c0_18] : memref<4x8x64xf32, #tpu.memory_space<vmem>>, vector<4x8x64xf32>
    tpu.vector_store %arg17[%c0_16, %c0_17, %c0_18], %31 {strides = array<i32>} : memref<4x8x64xf32, #tpu.memory_space<vmem>>, vector<4x8x64xf32>,
    %cst_19 = arith.constant 0.353553385 : f32
    %33 = vector.broadcast %cst_19 : f32 to vector<32x32xf32>
    %34 = arith.mulf %28, %33 : vector<32x32xf32>
    %35 = arith.truncf %34 : vector<32x32xf32> to vector<32x32xbf16>
    %36 = vector.shape_cast %35 : vector<32x32xbf16> to vector<4x8x32xbf16>
    %37 = arith.truncf %30 : vector<32x64xf32> to vector<32x64xbf16>
    %38 = vector.shape_cast %37 : vector<32x64xbf16> to vector<4x8x64xbf16>
    %c0_20 = arith.constant 0 : index
    %c0_21 = arith.constant 0 : index
    %c0_22 = arith.constant 0 : index
    %c0_23 = arith.constant 0 : index
    %39 = vector.load %arg2[%c0_20, %c0_21, %c0_22, %c0_23] : memref<4x4x8x16xf32, #tpu.memory_space<vmem>>, vector<4x4x8x16xf32>
    %40 = arith.truncf %39 : vector<4x4x8x16xf32> to vector<4x4x8x16xbf16>
    %c0_24 = arith.constant 0 : index
    %c0_25 = arith.constant 0 : index
    %c0_26 = arith.constant 0 : index
    %41 = vector.load %arg3[%c0_24, %c0_25, %c0_26] : memref<4x8x1xf32, #tpu.memory_space<vmem>>, vector<4x8x1xf32>
    %cst_27 = arith.constant 5.000000e-01 : f32
    %42 = vector.broadcast %cst_27 : f32 to vector<4x8x1xf32>
    %43 = arith.cmpf ogt, %41, %42 : vector<4x8x1xf32>
    %c0_28 = arith.constant 0 : index
    %c0_29 = arith.constant 0 : index
    %c0_30 = arith.constant 0 : index
    %44 = vector.load %arg4[%c0_28, %c0_29, %c0_30] : memref<4x1x16xf32, #tpu.memory_space<vmem>>, vector<4x1x16xf32>
    %cst_31 = arith.constant 5.000000e-01 : f32
    %45 = vector.broadcast %cst_31 : f32 to vector<4x1x16xf32>
    %46 = arith.cmpf ogt, %44, %45 : vector<4x1x16xf32>
    %47 = tpu.iota {dimensions = array<i32: 0>} : vector<8x16xi32>
    %48 = tpu.iota {dimensions = array<i32: 1>} : vector<8x16xi32>
    %c16_i32 = arith.constant 16 : i32
    %49 = vector.broadcast %c16_i32 : i32 to vector<8x16xi32>
    %50 = arith.addi %49, %47 : vector<8x16xi32>
    %c8_i32 = arith.constant 8 : i32
    %51 = vector.broadcast %c8_i32 : i32 to vector<8x16xi32>
    %52 = arith.addi %51, %48 : vector<8x16xi32>
    %53 = arith.cmpi slt, %50, %52 : vector<8x16xi32>
    %c16_i32_32 = arith.constant 16 : i32
    %54 = vector.broadcast %c16_i32_32 : i32 to vector<8x16xi32>
    %55 = arith.addi %54, %47 : vector<8x16xi32>
    %c8_i32_33 = arith.constant 8 : i32
    %56 = vector.broadcast %c8_i32_33 : i32 to vector<8x16xi32>
    %57 = arith.addi %56, %48 : vector<8x16xi32>
    %c4_i32 = arith.constant 4 : i32
    %58 = vector.broadcast %c4_i32 : i32 to vector<8x16xi32>
    %59 = arith.addi %57, %58 : vector<8x16xi32>
    %60 = arith.cmpi sgt, %55, %59 : vector<8x16xi32>
    %61 = arith.ori %53, %60 : vector<8x16xi1>
    %62 = vector.shape_cast %61 : vector<8x16xi1> to vector<1x8x16xi1>
    %cst_34 = arith.constant dense<true> : vector<4x1x16xi1>
    %63 = arith.xori %46, %cst_34 : vector<4x1x16xi1>
    %64 = vector.broadcast %62 : vector<1x8x16xi1> to vector<4x8x16xi1>
    %65 = vector.broadcast %63 : vector<4x1x16xi1> to vector<4x8x16xi1>
    %66 = arith.ori %64, %65 : vector<4x8x16xi1>
    %cst_35 = arith.constant dense<true> : vector<4x8x1xi1>
    %67 = arith.xori %43, %cst_35 : vector<4x8x1xi1>
    %68 = vector.broadcast %67 : vector<4x8x1xi1> to vector<4x8x16xi1>
    %69 = arith.ori %66, %68 : vector<4x8x16xi1>
    %cst_36 = arith.constant 0.000000e+00 : f32
    %70 = vector.broadcast %cst_36 : f32 to vector<4x8x16xf32>
    %71 = vector.extract_strided_slice %36 {offsets = [0, 0, 0], sizes = [4, 8, 8], strides = [1, 1, 1]} : vector<4x8x32xbf16> to vector<4x8x8xbf16>
    %72 = vector.extract_strided_slice %40 {offsets = [0, 0, 0, 0], sizes = [4, 1, 8, 8], strides = [1, 1, 1, 1]} : vector<4x4x8x16xbf16> to vector<4x1x8x8xbf16>
    %73 = vector.shape_cast %72 : vector<4x1x8x8xbf16> to vector<4x8x8xbf16>
    %74 = vector.extract_strided_slice %40 {offsets = [0, 0, 0, 8], sizes = [4, 1, 8, 8], strides = [1, 1, 1, 1]} : vector<4x4x8x16xbf16> to vector<4x1x8x8xbf16>
    %75 = vector.shape_cast %74 : vector<4x1x8x8xbf16> to vector<4x8x8xbf16>
    %76 = vector.extract_strided_slice %38 {offsets = [0, 0, 0], sizes = [4, 8, 8], strides = [1, 1, 1]} : vector<4x8x64xbf16> to vector<4x8x8xbf16>
    %77 = vector.extract_strided_slice %38 {offsets = [0, 0, 8], sizes = [4, 8, 8], strides = [1, 1, 1]} : vector<4x8x64xbf16> to vector<4x8x8xbf16>
    "tpu.trace_start"() <{level = 10 : i32, message = "bie,bje->bij"}> : () -> ()
    %cst_37 = arith.constant dense<0.000000e+00> : vector<4x8x8xf32>
    %78 = tpu.matmul %71, %73, %cst_37 {dimension_numbers = #tpu.dot_dimension_numbers<[2], [2], [1], [1], [0, 0, 0, 1, 1, 1], [0], [0]>} : vector<4x8x8xbf16>, vector<4x8x8xbf16>, vector<4x8x8xf32> -> vector<4x8x8xf32>
    %cst_38 = arith.constant dense<0.000000e+00> : vector<4x8x8xf32>
    %79 = tpu.matmul %71, %76, %cst_38 {dimension_numbers = #tpu.dot_dimension_numbers<[2], [2], [1], [1], [0, 0, 0, 1, 1, 1], [0], [0]>} : vector<4x8x8xbf16>, vector<4x8x8xbf16>, vector<4x8x8xf32> -> vector<4x8x8xf32>
    "tpu.trace_stop"() : () -> ()
    %80 = tpu.concatenate %78, %79 in 2 : vector<4x8x8xf32>, vector<4x8x8xf32> -> vector<4x8x16xf32>
    %cst_39 = arith.constant -1.000000e+30 : f32
    %81 = vector.broadcast %cst_39 : f32 to vector<4x8x16xf32>
    %82 = arith.select %69, %81, %80 : vector<4x8x16xi1>, vector<4x8x16xf32>
    %cst_40 = arith.constant dense<0xFF800000> : vector<4x8xf32>
    %83 = vector.multi_reduction <maximumf>, %82, %cst_40 [2] : vector<4x8x16xf32> to vector<4x8xf32>
    %84 = vector.shape_cast %83 : vector<4x8xf32> to vector<4x8x1xf32>
    %85 = vector.broadcast %84 : vector<4x8x1xf32> to vector<4x8x16xf32>
    %86 = arith.subf %82, %85 : vector<4x8x16xf32>
    %87 = math.exp %86 : vector<4x8x16xf32>
    %cst_41 = arith.constant dense<0.000000e+00> : vector<4x8xf32>
    %88 = vector.multi_reduction <add>, %87, %cst_41 [2] : vector<4x8x16xf32> to vector<4x8xf32>
    %89 = vector.shape_cast %88 : vector<4x8xf32> to vector<4x8x1xf32>
    %90 = tpu.reciprocal %89 : vector<4x8x1xf32> -> vector<4x8x1xf32>
    %91 = vector.broadcast %90 : vector<4x8x1xf32> to vector<4x8x16xf32>
    %92 = arith.mulf %87, %91 : vector<4x8x16xf32>
    %93 = arith.addf %70, %92 : vector<4x8x16xf32>
    %94 = arith.truncf %92 : vector<4x8x16xf32> to vector<4x8x16xbf16>
    %95 = vector.extract_strided_slice %94 {offsets = [0, 0, 0], sizes = [4, 8, 8], strides = [1, 1, 1]} : vector<4x8x16xbf16> to vector<4x8x8xbf16>
    "tpu.trace_start"() <{level = 10 : i32, message = "bij,bje->bie"}> : () -> ()
    %cst_42 = arith.constant dense<0.000000e+00> : vector<4x8x8xf32>
    %96 = tpu.matmul %95, %75, %cst_42 {dimension_numbers = #tpu.dot_dimension_numbers<[2], [1], [1], [2], [0, 0, 0, 1, 1, 2], [0], [0]>} : vector<4x8x8xbf16>, vector<4x8x8xbf16>, vector<4x8x8xf32> -> vector<4x8x8xf32>
    "tpu.trace_stop"() : () -> ()
    %97 = vector.extract_strided_slice %94 {offsets = [0, 0, 8], sizes = [4, 8, 8], strides = [1, 1, 1]} : vector<4x8x16xbf16> to vector<4x8x8xbf16>
    "tpu.trace_start"() <{level = 10 : i32, message = "bij,bje->bie"}> : () -> ()
    %cst_43 = arith.constant dense<0.000000e+00> : vector<4x8x8xf32>
    %98 = tpu.matmul %97, %77, %cst_43 {dimension_numbers = #tpu.dot_dimension_numbers<[2], [1], [1], [2], [0, 0, 0, 1, 1, 2], [0], [0]>} : vector<4x8x8xbf16>, vector<4x8x8xbf16>, vector<4x8x8xf32> -> vector<4x8x8xf32>
    "tpu.trace_stop"() : () -> ()
    %99 = arith.addf %96, %98 : vector<4x8x8xf32>
    %100 = vector.extract_strided_slice %36 {offsets = [0, 0, 8], sizes = [4, 8, 8], strides = [1, 1, 1]} : vector<4x8x32xbf16> to vector<4x8x8xbf16>
    %101 = vector.extract_strided_slice %40 {offsets = [0, 1, 0, 0], sizes = [4, 1, 8, 8], strides = [1, 1, 1, 1]} : vector<4x4x8x16xbf16> to vector<4x1x8x8xbf16>
    %102 = vector.shape_cast %101 : vector<4x1x8x8xbf16> to vector<4x8x8xbf16>
    %103 = vector.extract_strided_slice %40 {offsets = [0, 1, 0, 8], sizes = [4, 1, 8, 8], strides = [1, 1, 1, 1]} : vector<4x4x8x16xbf16> to vector<4x1x8x8xbf16>
    %104 = vector.shape_cast %103 : vector<4x1x8x8xbf16> to vector<4x8x8xbf16>
    %105 = vector.extract_strided_slice %38 {offsets = [0, 0, 16], sizes = [4, 8, 8], strides = [1, 1, 1]} : vector<4x8x64xbf16> to vector<4x8x8xbf16>
    %106 = vector.extract_strided_slice %38 {offsets = [0, 0, 24], sizes = [4, 8, 8], strides = [1, 1, 1]} : vector<4x8x64xbf16> to vector<4x8x8xbf16>
    "tpu.trace_start"() <{level = 10 : i32, message = "bie,bje->bij"}> : () -> ()
    %cst_44 = arith.constant dense<0.000000e+00> : vector<4x8x8xf32>
    %107 = tpu.matmul %100, %102, %cst_44 {dimension_numbers = #tpu.dot_dimension_numbers<[2], [2], [1], [1], [0, 0, 0, 1, 1, 1], [0], [0]>} : vector<4x8x8xbf16>, vector<4x8x8xbf16>, vector<4x8x8xf32> -> vector<4x8x8xf32>
    %cst_45 = arith.constant dense<0.000000e+00> : vector<4x8x8xf32>
    %108 = tpu.matmul %100, %105, %cst_45 {dimension_numbers = #tpu.dot_dimension_numbers<[2], [2], [1], [1], [0, 0, 0, 1, 1, 1], [0], [0]>} : vector<4x8x8xbf16>, vector<4x8x8xbf16>, vector<4x8x8xf32> -> vector<4x8x8xf32>
    "tpu.trace_stop"() : () -> ()
    %109 = tpu.concatenate %107, %108 in 2 : vector<4x8x8xf32>, vector<4x8x8xf32> -> vector<4x8x16xf32>
    %cst_46 = arith.constant -1.000000e+30 : f32
    %110 = vector.broadcast %cst_46 : f32 to vector<4x8x16xf32>
    %111 = arith.select %69, %110, %109 : vector<4x8x16xi1>, vector<4x8x16xf32>
    %cst_47 = arith.constant dense<0xFF800000> : vector<4x8xf32>
    %112 = vector.multi_reduction <maximumf>, %111, %cst_47 [2] : vector<4x8x16xf32> to vector<4x8xf32>
    %113 = vector.shape_cast %112 : vector<4x8xf32> to vector<4x8x1xf32>
    %114 = vector.broadcast %113 : vector<4x8x1xf32> to vector<4x8x16xf32>
    %115 = arith.subf %111, %114 : vector<4x8x16xf32>
    %116 = math.exp %115 : vector<4x8x16xf32>
    %cst_48 = arith.constant dense<0.000000e+00> : vector<4x8xf32>
    %117 = vector.multi_reduction <add>, %116, %cst_48 [2] : vector<4x8x16xf32> to vector<4x8xf32>
    %118 = vector.shape_cast %117 : vector<4x8xf32> to vector<4x8x1xf32>
    %119 = tpu.reciprocal %118 : vector<4x8x1xf32> -> vector<4x8x1xf32>
    %120 = vector.broadcast %119 : vector<4x8x1xf32> to vector<4x8x16xf32>
    %121 = arith.mulf %116, %120 : vector<4x8x16xf32>
    %122 = arith.addf %93, %121 : vector<4x8x16xf32>
    %123 = arith.truncf %121 : vector<4x8x16xf32> to vector<4x8x16xbf16>
    %124 = vector.extract_strided_slice %123 {offsets = [0, 0, 0], sizes = [4, 8, 8], strides = [1, 1, 1]} : vector<4x8x16xbf16> to vector<4x8x8xbf16>
    "tpu.trace_start"() <{level = 10 : i32, message = "bij,bje->bie"}> : () -> ()
    %cst_49 = arith.constant dense<0.000000e+00> : vector<4x8x8xf32>
    %125 = tpu.matmul %124, %104, %cst_49 {dimension_numbers = #tpu.dot_dimension_numbers<[2], [1], [1], [2], [0, 0, 0, 1, 1, 2], [0], [0]>} : vector<4x8x8xbf16>, vector<4x8x8xbf16>, vector<4x8x8xf32> -> vector<4x8x8xf32>
    "tpu.trace_stop"() : () -> ()
    %126 = vector.extract_strided_slice %123 {offsets = [0, 0, 8], sizes = [4, 8, 8], strides = [1, 1, 1]} : vector<4x8x16xbf16> to vector<4x8x8xbf16>
    "tpu.trace_start"() <{level = 10 : i32, message = "bij,bje->bie"}> : () -> ()
    %cst_50 = arith.constant dense<0.000000e+00> : vector<4x8x8xf32>
    %127 = tpu.matmul %126, %106, %cst_50 {dimension_numbers = #tpu.dot_dimension_numbers<[2], [1], [1], [2], [0, 0, 0, 1, 1, 2], [0], [0]>} : vector<4x8x8xbf16>, vector<4x8x8xbf16>, vector<4x8x8xf32> -> vector<4x8x8xf32>
    "tpu.trace_stop"() : () -> ()
    %128 = arith.addf %125, %127 : vector<4x8x8xf32>
    %129 = vector.extract_strided_slice %36 {offsets = [0, 0, 16], sizes = [4, 8, 8], strides = [1, 1, 1]} : vector<4x8x32xbf16> to vector<4x8x8xbf16>
    %130 = vector.extract_strided_slice %40 {offsets = [0, 2, 0, 0], sizes = [4, 1, 8, 8], strides = [1, 1, 1, 1]} : vector<4x4x8x16xbf16> to vector<4x1x8x8xbf16>
    %131 = vector.shape_cast %130 : vector<4x1x8x8xbf16> to vector<4x8x8xbf16>
    %132 = vector.extract_strided_slice %40 {offsets = [0, 2, 0, 8], sizes = [4, 1, 8, 8], strides = [1, 1, 1, 1]} : vector<4x4x8x16xbf16> to vector<4x1x8x8xbf16>
    %133 = vector.shape_cast %132 : vector<4x1x8x8xbf16> to vector<4x8x8xbf16>
    %134 = vector.extract_strided_slice %38 {offsets = [0, 0, 32], sizes = [4, 8, 8], strides = [1, 1, 1]} : vector<4x8x64xbf16> to vector<4x8x8xbf16>
    %135 = vector.extract_strided_slice %38 {offsets = [0, 0, 40], sizes = [4, 8, 8], strides = [1, 1, 1]} : vector<4x8x64xbf16> to vector<4x8x8xbf16>
    "tpu.trace_start"() <{level = 10 : i32, message = "bie,bje->bij"}> : () -> ()
    %cst_51 = arith.constant dense<0.000000e+00> : vector<4x8x8xf32>
    %136 = tpu.matmul %129, %131, %cst_51 {dimension_numbers = #tpu.dot_dimension_numbers<[2], [2], [1], [1], [0, 0, 0, 1, 1, 1], [0], [0]>} : vector<4x8x8xbf16>, vector<4x8x8xbf16>, vector<4x8x8xf32> -> vector<4x8x8xf32>
    %cst_52 = arith.constant dense<0.000000e+00> : vector<4x8x8xf32>
    %137 = tpu.matmul %129, %134, %cst_52 {dimension_numbers = #tpu.dot_dimension_numbers<[2], [2], [1], [1], [0, 0, 0, 1, 1, 1], [0], [0]>} : vector<4x8x8xbf16>, vector<4x8x8xbf16>, vector<4x8x8xf32> -> vector<4x8x8xf32>
    "tpu.trace_stop"() : () -> ()
    %138 = tpu.concatenate %136, %137 in 2 : vector<4x8x8xf32>, vector<4x8x8xf32> -> vector<4x8x16xf32>
    %cst_53 = arith.constant -1.000000e+30 : f32
    %139 = vector.broadcast %cst_53 : f32 to vector<4x8x16xf32>
    %140 = arith.select %69, %139, %138 : vector<4x8x16xi1>, vector<4x8x16xf32>
    %cst_54 = arith.constant dense<0xFF800000> : vector<4x8xf32>
    %141 = vector.multi_reduction <maximumf>, %140, %cst_54 [2] : vector<4x8x16xf32> to vector<4x8xf32>
    %142 = vector.shape_cast %141 : vector<4x8xf32> to vector<4x8x1xf32>
    %143 = vector.broadcast %142 : vector<4x8x1xf32> to vector<4x8x16xf32>
    %144 = arith.subf %140, %143 : vector<4x8x16xf32>
    %145 = math.exp %144 : vector<4x8x16xf32>
    %cst_55 = arith.constant dense<0.000000e+00> : vector<4x8xf32>
    %146 = vector.multi_reduction <add>, %145, %cst_55 [2] : vector<4x8x16xf32> to vector<4x8xf32>
    %147 = vector.shape_cast %146 : vector<4x8xf32> to vector<4x8x1xf32>
    %148 = tpu.reciprocal %147 : vector<4x8x1xf32> -> vector<4x8x1xf32>
    %149 = vector.broadcast %148 : vector<4x8x1xf32> to vector<4x8x16xf32>
    %150 = arith.mulf %145, %149 : vector<4x8x16xf32>
    %151 = arith.addf %122, %150 : vector<4x8x16xf32>
    %152 = arith.truncf %150 : vector<4x8x16xf32> to vector<4x8x16xbf16>
    %153 = vector.extract_strided_slice %152 {offsets = [0, 0, 0], sizes = [4, 8, 8], strides = [1, 1, 1]} : vector<4x8x16xbf16> to vector<4x8x8xbf16>
    "tpu.trace_start"() <{level = 10 : i32, message = "bij,bje->bie"}> : () -> ()
    %cst_56 = arith.constant dense<0.000000e+00> : vector<4x8x8xf32>
    %154 = tpu.matmul %153, %133, %cst_56 {dimension_numbers = #tpu.dot_dimension_numbers<[2], [1], [1], [2], [0, 0, 0, 1, 1, 2], [0], [0]>} : vector<4x8x8xbf16>, vector<4x8x8xbf16>, vector<4x8x8xf32> -> vector<4x8x8xf32>
    "tpu.trace_stop"() : () -> ()
    %155 = vector.extract_strided_slice %152 {offsets = [0, 0, 8], sizes = [4, 8, 8], strides = [1, 1, 1]} : vector<4x8x16xbf16> to vector<4x8x8xbf16>
    "tpu.trace_start"() <{level = 10 : i32, message = "bij,bje->bie"}> : () -> ()
    %cst_57 = arith.constant dense<0.000000e+00> : vector<4x8x8xf32>
    %156 = tpu.matmul %155, %135, %cst_57 {dimension_numbers = #tpu.dot_dimension_numbers<[2], [1], [1], [2], [0, 0, 0, 1, 1, 2], [0], [0]>} : vector<4x8x8xbf16>, vector<4x8x8xbf16>, vector<4x8x8xf32> -> vector<4x8x8xf32>
    "tpu.trace_stop"() : () -> ()
    %157 = arith.addf %154, %156 : vector<4x8x8xf32>
    %158 = vector.extract_strided_slice %36 {offsets = [0, 0, 24], sizes = [4, 8, 8], strides = [1, 1, 1]} : vector<4x8x32xbf16> to vector<4x8x8xbf16>
    %159 = vector.extract_strided_slice %40 {offsets = [0, 3, 0, 0], sizes = [4, 1, 8, 8], strides = [1, 1, 1, 1]} : vector<4x4x8x16xbf16> to vector<4x1x8x8xbf16>
    %160 = vector.shape_cast %159 : vector<4x1x8x8xbf16> to vector<4x8x8xbf16>
    %161 = vector.extract_strided_slice %40 {offsets = [0, 3, 0, 8], sizes = [4, 1, 8, 8], strides = [1, 1, 1, 1]} : vector<4x4x8x16xbf16> to vector<4x1x8x8xbf16>
    %162 = vector.shape_cast %161 : vector<4x1x8x8xbf16> to vector<4x8x8xbf16>
    %163 = vector.extract_strided_slice %38 {offsets = [0, 0, 48], sizes = [4, 8, 8], strides = [1, 1, 1]} : vector<4x8x64xbf16> to vector<4x8x8xbf16>
    %164 = vector.extract_strided_slice %38 {offsets = [0, 0, 56], sizes = [4, 8, 8], strides = [1, 1, 1]} : vector<4x8x64xbf16> to vector<4x8x8xbf16>
    "tpu.trace_start"() <{level = 10 : i32, message = "bie,bje->bij"}> : () -> ()
    %cst_58 = arith.constant dense<0.000000e+00> : vector<4x8x8xf32>
    %165 = tpu.matmul %158, %160, %cst_58 {dimension_numbers = #tpu.dot_dimension_numbers<[2], [2], [1], [1], [0, 0, 0, 1, 1, 1], [0], [0]>} : vector<4x8x8xbf16>, vector<4x8x8xbf16>, vector<4x8x8xf32> -> vector<4x8x8xf32>
    %cst_59 = arith.constant dense<0.000000e+00> : vector<4x8x8xf32>
    %166 = tpu.matmul %158, %163, %cst_59 {dimension_numbers = #tpu.dot_dimension_numbers<[2], [2], [1], [1], [0, 0, 0, 1, 1, 1], [0], [0]>} : vector<4x8x8xbf16>, vector<4x8x8xbf16>, vector<4x8x8xf32> -> vector<4x8x8xf32>
    "tpu.trace_stop"() : () -> ()
    %167 = tpu.concatenate %165, %166 in 2 : vector<4x8x8xf32>, vector<4x8x8xf32> -> vector<4x8x16xf32>
    %cst_60 = arith.constant -1.000000e+30 : f32
    %168 = vector.broadcast %cst_60 : f32 to vector<4x8x16xf32>
    %169 = arith.select %69, %168, %167 : vector<4x8x16xi1>, vector<4x8x16xf32>
    %cst_61 = arith.constant dense<0xFF800000> : vector<4x8xf32>
    %170 = vector.multi_reduction <maximumf>, %169, %cst_61 [2] : vector<4x8x16xf32> to vector<4x8xf32>
    %171 = vector.shape_cast %170 : vector<4x8xf32> to vector<4x8x1xf32>
    %172 = vector.broadcast %171 : vector<4x8x1xf32> to vector<4x8x16xf32>
    %173 = arith.subf %169, %172 : vector<4x8x16xf32>
    %174 = math.exp %173 : vector<4x8x16xf32>
    %cst_62 = arith.constant dense<0.000000e+00> : vector<4x8xf32>
    %175 = vector.multi_reduction <add>, %174, %cst_62 [2] : vector<4x8x16xf32> to vector<4x8xf32>
    %176 = vector.shape_cast %175 : vector<4x8xf32> to vector<4x8x1xf32>
    %177 = tpu.reciprocal %176 : vector<4x8x1xf32> -> vector<4x8x1xf32>
    %178 = vector.broadcast %177 : vector<4x8x1xf32> to vector<4x8x16xf32>
    %179 = arith.mulf %174, %178 : vector<4x8x16xf32>
    %180 = arith.addf %151, %179 : vector<4x8x16xf32>
    %181 = arith.truncf %179 : vector<4x8x16xf32> to vector<4x8x16xbf16>
    %182 = vector.extract_strided_slice %181 {offsets = [0, 0, 0], sizes = [4, 8, 8], strides = [1, 1, 1]} : vector<4x8x16xbf16> to vector<4x8x8xbf16>
    "tpu.trace_start"() <{level = 10 : i32, message = "bij,bje->bie"}> : () -> ()
    %cst_63 = arith.constant dense<0.000000e+00> : vector<4x8x8xf32>
    %183 = tpu.matmul %182, %162, %cst_63 {dimension_numbers = #tpu.dot_dimension_numbers<[2], [1], [1], [2], [0, 0, 0, 1, 1, 2], [0], [0]>} : vector<4x8x8xbf16>, vector<4x8x8xbf16>, vector<4x8x8xf32> -> vector<4x8x8xf32>
    "tpu.trace_stop"() : () -> ()
    %184 = vector.extract_strided_slice %181 {offsets = [0, 0, 8], sizes = [4, 8, 8], strides = [1, 1, 1]} : vector<4x8x16xbf16> to vector<4x8x8xbf16>
    "tpu.trace_start"() <{level = 10 : i32, message = "bij,bje->bie"}> : () -> ()
    %cst_64 = arith.constant dense<0.000000e+00> : vector<4x8x8xf32>
    %185 = tpu.matmul %184, %164, %cst_64 {dimension_numbers = #tpu.dot_dimension_numbers<[2], [1], [1], [2], [0, 0, 0, 1, 1, 2], [0], [0]>} : vector<4x8x8xbf16>, vector<4x8x8xbf16>, vector<4x8x8xf32> -> vector<4x8x8xf32>
    "tpu.trace_stop"() : () -> ()
    %186 = arith.addf %183, %185 : vector<4x8x8xf32>
    %cst_65 = arith.constant 2.500000e-01 : f32
    %187 = vector.broadcast %cst_65 : f32 to vector<4x8x16xf32>
    %188 = arith.mulf %180, %187 : vector<4x8x16xf32>
    %c0_66 = arith.constant 0 : index
    %c0_67 = arith.constant 0 : index
    %c0_68 = arith.constant 0 : index
    %189 = vector.load %arg16[%c0_66, %c0_67, %c0_68] : memref<4x8x16xf32, #tpu.memory_space<vmem>>, vector<4x8x16xf32>
    tpu.vector_store %arg16[%c0_66, %c0_67, %c0_68], %188 {strides = array<i32>} : memref<4x8x16xf32, #tpu.memory_space<vmem>>, vector<4x8x16xf32>,
    %190 = tpu.concatenate %99, %128, %157, %186 in 2 : vector<4x8x8xf32>, vector<4x8x8xf32>, vector<4x8x8xf32>, vector<4x8x8xf32> -> vector<4x8x32xf32>
    %191 = vector.shape_cast %190 : vector<4x8x32xf32> to vector<32x32xf32>
    %192 = arith.addf %191, %1 : vector<32x32xf32>
    %cst_69 = arith.constant dense<0.000000e+00> : vector<32xf32>
    %193 = vector.multi_reduction <add>, %192, %cst_69 [1] : vector<32x32xf32> to vector<32xf32>
    %194 = vector.shape_cast %193 : vector<32xf32> to vector<32x1xf32>
    %cst_70 = arith.constant 3.200000e+01 : f32
    %195 = vector.broadcast %cst_70 : f32 to vector<32x1xf32>
    %196 = arith.divf %194, %195 : vector<32x1xf32>
    %197 = vector.broadcast %196 : vector<32x1xf32> to vector<32x32xf32>
    %198 = arith.subf %192, %197 : vector<32x32xf32>
    %199 = arith.mulf %198, %198 : vector<32x32xf32>
    %cst_71 = arith.constant dense<0.000000e+00> : vector<32xf32>
    %200 = vector.multi_reduction <add>, %199, %cst_71 [1] : vector<32x32xf32> to vector<32xf32>
    %201 = vector.shape_cast %200 : vector<32xf32> to vector<32x1xf32>
    %cst_72 = arith.constant 3.200000e+01 : f32
    %202 = vector.broadcast %cst_72 : f32 to vector<32x1xf32>
    %203 = arith.divf %201, %202 : vector<32x1xf32>
    %204 = vector.broadcast %196 : vector<32x1xf32> to vector<32x32xf32>
    %205 = arith.subf %192, %204 : vector<32x32xf32>
    %cst_73 = arith.constant 9.99999974E-6 : f32
    %206 = vector.broadcast %cst_73 : f32 to vector<32x1xf32>
    %207 = arith.addf %203, %206 : vector<32x1xf32>
    %208 = math.rsqrt %207 : vector<32x1xf32>
    %209 = vector.broadcast %208 : vector<32x1xf32> to vector<32x32xf32>
    %210 = arith.mulf %205, %209 : vector<32x32xf32>
    %c0_74 = arith.constant 0 : index
    %c0_75 = arith.constant 0 : index
    %211 = vector.load %arg9[%c0_74, %c0_75] : memref<1x32xf32, #tpu.memory_space<vmem>>, vector<1x32xf32>
    %212 = vector.broadcast %211 : vector<1x32xf32> to vector<32x32xf32>
    %213 = arith.mulf %210, %212 : vector<32x32xf32>
    %c0_76 = arith.constant 0 : index
    %c0_77 = arith.constant 0 : index
    %214 = vector.load %arg10[%c0_76, %c0_77] : memref<1x32xf32, #tpu.memory_space<vmem>>, vector<1x32xf32>
    %215 = vector.broadcast %214 : vector<1x32xf32> to vector<32x32xf32>
    %216 = arith.addf %213, %215 : vector<32x32xf32>
    %217 = arith.truncf %216 : vector<32x32xf32> to vector<32x32xbf16>
    %c0_78 = arith.constant 0 : index
    %c0_79 = arith.constant 0 : index
    %218 = vector.load %arg11[%c0_78, %c0_79] : memref<32x128xbf16, #tpu.memory_space<vmem>>, vector<32x128xbf16>
    %cst_80 = arith.constant dense<0.000000e+00> : vector<32x128xf32>
    %219 = tpu.matmul %217, %218, %cst_80 {dimension_numbers = #tpu.dot_dimension_numbers<[1], [0], [0], [1], [0, 0, 1, 1], [], []>} : vector<32x32xbf16>, vector<32x128xbf16>, vector<32x128xf32> -> vector<32x128xf32>
    %c0_81 = arith.constant 0 : index
    %c0_82 = arith.constant 0 : index
    %220 = vector.load %arg12[%c0_81, %c0_82] : memref<1x128xf32, #tpu.memory_space<vmem>>, vector<1x128xf32>
    %221 = vector.broadcast %220 : vector<1x128xf32> to vector<32x128xf32>
    %222 = arith.addf %219, %221 : vector<32x128xf32>
    %cst_83 = arith.constant 0.000000e+00 : f32
    %223 = vector.broadcast %cst_83 : f32 to vector<32x128xf32>
    %224 = arith.maximumf %222, %223 : vector<32x128xf32>
    %225 = arith.truncf %224 : vector<32x128xf32> to vector<32x128xbf16>
    %c0_84 = arith.constant 0 : index
    %c0_85 = arith.constant 0 : index
    %226 = vector.load %arg13[%c0_84, %c0_85] : memref<128x32xbf16, #tpu.memory_space<vmem>>, vector<128x32xbf16>
    %cst_86 = arith.constant dense<0.000000e+00> : vector<32x32xf32>
    %227 = tpu.matmul %225, %226, %cst_86 {dimension_numbers = #tpu.dot_dimension_numbers<[1], [0], [0], [1], [0, 0, 1, 1], [], []>} : vector<32x128xbf16>, vector<128x32xbf16>, vector<32x32xf32> -> vector<32x32xf32>
    %c0_87 = arith.constant 0 : index
    %c0_88 = arith.constant 0 : index
    %228 = vector.load %arg14[%c0_87, %c0_88] : memref<1x32xf32, #tpu.memory_space<vmem>>, vector<1x32xf32>
    %229 = vector.broadcast %228 : vector<1x32xf32> to vector<32x32xf32>
    %230 = arith.addf %227, %229 : vector<32x32xf32>
    %231 = arith.addf %230, %192 : vector<32x32xf32>
    %232 = vector.shape_cast %231 : vector<32x32xf32> to vector<4x8x32xf32>
    %c0_89 = arith.constant 0 : index
    %c0_90 = arith.constant 0 : index
    %c0_91 = arith.constant 0 : index
    %233 = vector.load %arg15[%c0_89, %c0_90, %c0_91] : memref<4x8x32xf32, #tpu.memory_space<vmem>>, vector<4x8x32xf32>
    tpu.vector_store %arg15[%c0_89, %c0_90, %c0_91], %232 {strides = array<i32>} : memref<4x8x32xf32, #tpu.memory_space<vmem>>, vector<4x8x32xf32>,
    return
  }
  func.func @transform_0(%arg0: i32) -> (i32, i32, i32) {
    %c0_i32 = arith.constant 0 : i32
    %c0_i32_0 = arith.constant 0 : i32
    %c0_i32_1 = arith.constant 0 : i32
    return %arg0, %c0_i32, %c0_i32_0 : i32, i32, i32
  }
  func.func @transform_1(%arg0: i32) -> (i32, i32, i32, i32) {
    %c0_i32 = arith.constant 0 : i32
    %c0_i32_0 = arith.constant 0 : i32
    %c0_i32_1 = arith.constant 0 : i32
    %c0_i32_2 = arith.constant 0 : i32
    return %arg0, %c0_i32, %c0_i32_0, %c0_i32_1 : i32, i32, i32, i32
  }
  func.func @transform_2(%arg0: i32) -> (i32, i32, i32) {
    %c0_i32 = arith.constant 0 : i32
    %c0_i32_0 = arith.constant 0 : i32
    %c0_i32_1 = arith.constant 0 : i32
    return %arg0, %c0_i32, %c0_i32_0 : i32, i32, i32
  }
  func.func @transform_3(%arg0: i32) -> (i32, i32, i32) {
    %c0_i32 = arith.constant 0 : i32
    %c0_i32_0 = arith.constant 0 : i32
    %c0_i32_1 = arith.constant 0 : i32
    return %arg0, %c0_i32, %c0_i32_0 : i32, i32, i32
  }
  func.func @transform_4(%arg0: i32) -> (i32, i32) {
    %c0_i32 = arith.constant 0 : i32
    %c0_i32_0 = arith.constant 0 : i32
    %c0_i32_1 = arith.constant 0 : i32
    return %c0_i32, %c0_i32_0 : i32, i32
  }
  func.func @transform_5(%arg0: i32) -> (i32, i32) {
    %c0_i32 = arith.constant 0 : i32
    %c0_i32_0 = arith.constant 0 : i32
    %c0_i32_1 = arith.constant 0 : i32
    return %c0_i32, %c0_i32_0 : i32, i32
  }
  func.func @transform_6(%arg0: i32) -> (i32, i32) {
    %c0_i32 = arith.constant 0 : i32
    %c0_i32_0 = arith.constant 0 : i32
    %c0_i32_1 = arith.constant 0 : i32
    return %c0_i32, %c0_i32_0 : i32, i32
  }
  func.func @transform_7(%arg0: i32) -> (i32, i32) {
    %c0_i32 = arith.constant 0 : i32
    %c0_i32_0 = arith.constant 0 : i32
    %c0_i32_1 = arith.constant 0 : i32
    return %c0_i32, %c0_i32_0 : i32, i32
  }
  func.func @transform_8(%arg0: i32) -> (i32, i32) {
    %c0_i32 = arith.constant 0 : i32
    %c0_i32_0 = arith.constant 0 : i32
    %c0_i32_1 = arith.constant 0 : i32
    return %c0_i32, %c0_i32_0 : i32, i32
  }
  func.func @transform_9(%arg0: i32) -> (i32, i32) {
    %c0_i32 = arith.constant 0 : i32
    %c0_i32_0 = arith.constant 0 : i32
    %c0_i32_1 = arith.constant 0 : i32
    return %c0_i32, %c0_i32_0 : i32, i32
  }
  func.func @transform_10(%arg0: i32) -> (i32, i32) {
    %c0_i32 = arith.constant 0 : i32
    %c0_i32_0 = arith.constant 0 : i32
    %c0_i32_1 = arith.constant 0 : i32
    return %c0_i32, %c0_i32_0 : i32, i32
  }
  func.func @transform_11(%arg0: i32) -> (i32, i32) {
    %c0_i32 = arith.constant 0 : i32
    %c0_i32_0 = arith.constant 0 : i32
    %c0_i32_1 = arith.constant 0 : i32
    return %c0_i32, %c0_i32_0 : i32, i32
  }
  func.func @transform_12(%arg0: i32) -> (i32, i32) {
    %c0_i32 = arith.constant 0 : i32
    %c0_i32_0 = arith.constant 0 : i32
    %c0_i32_1 = arith.constant 0 : i32
    return %c0_i32, %c0_i32_0 : i32, i32
  }
  func.func @transform_13(%arg0: i32) -> (i32, i32) {
    %c0_i32 = arith.constant 0 : i32
    %c0_i32_0 = arith.constant 0 : i32
    %c0_i32_1 = arith.constant 0 : i32
    return %c0_i32, %c0_i32_0 : i32, i32
  }
  func.func @transform_14(%arg0: i32) -> (i32, i32, i32) {
    %c0_i32 = arith.constant 0 : i32
    %c0_i32_0 = arith.constant 0 : i32
    %c0_i32_1 = arith.constant 0 : i32
    return %arg0, %c0_i32, %c0_i32_0 : i32, i32, i32
  }
  func.func @transform_15(%arg0: i32) -> (i32, i32, i32) {
    %c0_i32 = arith.constant 0 : i32
    %c0_i32_0 = arith.constant 0 : i32
    %c0_i32_1 = arith.constant 0 : i32
    return %arg0, %c0_i32, %c0_i32_0 : i32, i32, i32
  }
  func.func @transform_16(%arg0: i32) -> (i32, i32, i32) {
    %c0_i32 = arith.constant 0 : i32
    %c0_i32_0 = arith.constant 0 : i32
    %c0_i32_1 = arith.constant 0 : i32
    return %arg0, %c0_i32, %c0_i32_0 : i32, i32, i32
  }
}

</mosaic_0001>

<llo_original>
// kernel: tpu_custom_call.1
$region0: #{tpu_custom_call.1}
  #allocation0 [shape = 'u32[]', space=smem, size = 0x4, offset = 0x4, fixed_abs, tag = 'smem constant byte address 0x4 - core index']
  #allocation1 [shape = 'u32[72,128]{1,0:T(1,128)}', space=vmem, size = 0x9000, scoped, tag = 'internal scratch']
  %s0 = inlined_call_operand.vmem [shape: f32[8,8,32], index: 0, kind: input, shape index: {}]
  %s1 = inlined_call_operand.hbm [shape: f32[8,4,8,16], index: 1, kind: input, shape index: {}]
  %s2 = inlined_call_operand.vmem [shape: f32[8,8,1], index: 2, kind: input, shape index: {}]
  %s3 = inlined_call_operand.vmem [shape: f32[8,1,16], index: 3, kind: input, shape index: {}]
  %s4 = inlined_call_operand.vmem [shape: f32[1,32], index: 4, kind: input, shape index: {}]
  %s5 = inlined_call_operand.vmem [shape: f32[1,32], index: 5, kind: input, shape index: {}]
  %s6 = inlined_call_operand.vmem [shape: bf16[32,32], index: 6, kind: input, shape index: {}]
  %s7 = inlined_call_operand.vmem [shape: bf16[32,64], index: 7, kind: input, shape index: {}]
  %s8 = inlined_call_operand.vmem [shape: f32[1,32], index: 8, kind: input, shape index: {}]
  %s9 = inlined_call_operand.vmem [shape: f32[1,32], index: 9, kind: input, shape index: {}]
  %s10 = inlined_call_operand.vmem [shape: bf16[32,128], index: 10, kind: input, shape index: {}]
  %s11 = inlined_call_operand.vmem [shape: f32[1,128], index: 11, kind: input, shape index: {}]
  %s12 = inlined_call_operand.vmem [shape: bf16[128,32], index: 12, kind: input, shape index: {}]
  %s13 = inlined_call_operand.vmem [shape: f32[1,32], index: 13, kind: input, shape index: {}]
  %s14 = inlined_call_operand.hbm [shape: f32[8,8,32], index: 14, kind: output, shape index: {0}]
  %s15 = inlined_call_operand.hbm [shape: f32[8,8,16], index: 15, kind: output, shape index: {1}]
  %s16 = inlined_call_operand.hbm [shape: f32[8,8,64], index: 16, kind: output, shape index: {2}]
  %17 = xla_tuple %s14, %s15, %s16
  %s18 = sld [smem:[#allocation0]]
  $region109: #{tpu_custom_call.1} parent=0
    _
  %s20 = ssub.s32 1, %s18
  %s21 = scalar_select 0, %s20, %s18
  $region1: #{tpu_custom_call.1} parent=0
    #allocation2 [shape = 'u8[131072]{0}', space=vmem, size = 0x20000, scoped, tag = 'input window, operand 1']
    #allocation3 [shape = 's32[2]{0}', space=sflag, size = 0x8, scoped, tag = 'scoped memory for tpu_custom_call.1']
    #allocation4 [shape = 's32[2]{0}', space=sflag, size = 0x8, scoped, tag = 'scoped memory for tpu_custom_call.1']
    #allocation5 [shape = 'u8[32768]{0}', space=vmem, size = 0x8000, scoped, tag = 'output window, operand 0']
    #allocation6 [shape = 'u8[32768]{0}', space=vmem, size = 0x8000, scoped, tag = 'output window, operand 1']
    #allocation7 [shape = 's32[2]{0}', space=sflag, size = 0x8, scoped, tag = 'scoped memory for tpu_custom_call.1']
    #allocation8 [shape = 'u8[32768]{0}', space=vmem, size = 0x8000, scoped, tag = 'output window, operand 2']
    %22 = vsyncpa [#allocation3], 0
    %s23 = scalar_lea.sflag [#allocation3], 1
    %24 = vsyncpa %s23, 0
    %25 = vsyncpa [#allocation4], 0
    %s26 = scalar_lea.sflag [#allocation4], 1
    %27 = vsyncpa %s26, 0
    %28 = vsyncpa [#allocation7], 0
    %s29 = scalar_lea.sflag [#allocation7], 1
    %30 = vsyncpa %s29, 0
    loop: start=0, step=1, limit=4
    $region2: #{tpu_custom_call.1} parent=1 // loop_pre_header
      _
    $region3: #{tpu_custom_call.1} parent=1 // loop_header
      %s32 = sphi 0, %s36
      %p33 = scmp.ge.s32.totalorder %s32, 4
      %s42 = sphi 0, %s44
      %s45 = sphi 0, %s42
      %s46 = sphi 0, %s45
      %s62 = sphi 0, %s46
      %s68 = sphi 0, %s70
      %s71 = sphi 0, %s68
      %s72 = sphi 0, %s71
      %s88 = sphi 0, %s72
      %s94 = sphi 0, %s96
      %s97 = sphi 0, %s94
      %s98 = sphi 0, %s97
      %s114 = sphi 0, %s98
      %s120 = sphi 0, %s122
      %s123 = sphi 0, %s120
      %s124 = sphi 0, %s123
      %s140 = sphi 0, %s124
      %s144 = sphi 0, %s144
      %s146 = sphi 0, %s144
      %s147 = sphi 0, %s146
      %s161 = sphi 0, %s147
      %s165 = sphi 0, %s165
      %s167 = sphi 0, %s165
      %s168 = sphi 0, %s167
      %s182 = sphi 0, %s168
      %s186 = sphi 0, %s186
      %s188 = sphi 0, %s186
      %s189 = sphi 0, %s188
      %s203 = sphi 0, %s189
      %s207 = sphi 0, %s207
      %s209 = sphi 0, %s207
      %s210 = sphi 0, %s209
      %s224 = sphi 0, %s210
      %s228 = sphi 0, %s228
      %s230 = sphi 0, %s228
      %s231 = sphi 0, %s230
      %s245 = sphi 0, %s231
      %s249 = sphi 0, %s249
      %s251 = sphi 0, %s249
      %s252 = sphi 0, %s251
      %s266 = sphi 0, %s252
      %s270 = sphi 0, %s270
      %s272 = sphi 0, %s270
      %s273 = sphi 0, %s272
      %s287 = sphi 0, %s273
      %s291 = sphi 0, %s291
      %s293 = sphi 0, %s291
      %s294 = sphi 0, %s293
      %s308 = sphi 0, %s294
      %s312 = sphi 0, %s312
      %s314 = sphi 0, %s312
      %s315 = sphi 0, %s314
      %s329 = sphi 0, %s315
      %s333 = sphi 0, %s333
      %s335 = sphi 0, %s333
      %s336 = sphi 0, %s335
      %s350 = sphi 0, %s336
      %s356 = sphi 0, %s358
      %s359 = sphi 0, %s356
      %s360 = sphi 0, %s359
      %s376 = sphi 0, %s360
      %s382 = sphi 0, %s384
      %s385 = sphi 0, %s382
      %s386 = sphi 0, %s385
      %s402 = sphi 0, %s386
      %s408 = sphi 0, %s410
      %s411 = sphi 0, %s408
      %s412 = sphi 0, %s411
      %s428 = sphi 0, %s412
    $region4: #{tpu_custom_call.1} parent=1 // loop_header_branch
      %35 = sbr.rel (%p33) target = $region8
    $region5: #{tpu_custom_call.1} parent=1 // loop_body
      %s37 = ssub.s32 %s32, 1
      %s38 = ssub.s32 %s32, 2
      %s39 = sadd.s32 %s32, 1
      %s40 = ssub.s32 %s32, %s39
      %p41 = scmp.eq.s32.totalorder %s40, 0
      %s43 = sadd.s32 %s42, 1
      %s44 = scalar_select %p41, %s42, %s43
      %p47 = pneg %p41
      %p48 = scmp.eq.s32.totalorder %s32, 1
      %p49 = por %p47, %p48
      %p50 = scmp.ne.s32.totalorder %s42, %s45
      %p51 = scmp.eq.s32.totalorder %s32, 0
      %p52 = por %p50, %p51
      %p53 = scmp.ne.s32.totalorder %s42, %s45
      %p54 = scmp.eq.s32.totalorder %s37, 1
      %p55 = por %p53, %p54
      %p56 = scmp.ne.s32.totalorder %s45, %s46
      %p57 = scmp.eq.s32.totalorder %s37, 0
      %p58 = por %p56, %p57
      %p59 = scmp.ne.s32.totalorder %s45, %s46
      %p60 = scmp.eq.s32.totalorder %s38, 1
      %p61 = por %p59, %p60
      %p63 = scmp.ne.s32.totalorder %s46, %s62
      %p64 = scmp.eq.s32.totalorder %s38, 0
      %p65 = por %p63, %p64
      %s66 = ssub.s32 %s32, %s39
      %p67 = scmp.eq.s32.totalorder %s66, 0
      %s69 = sadd.s32 %s68, 1
      %s70 = scalar_select %p67, %s68, %s69
      %p73 = pneg %p67
      %p74 = scmp.eq.s32.totalorder %s32, 1
      %p75 = por %p73, %p74
      %p76 = scmp.ne.s32.totalorder %s68, %s71
      %p77 = scmp.eq.s32.totalorder %s32, 0
      %p78 = por %p76, %p77
      %p79 = scmp.ne.s32.totalorder %s68, %s71
      %p80 = scmp.eq.s32.totalorder %s37, 1
      %p81 = por %p79, %p80
      %p82 = scmp.ne.s32.totalorder %s71, %s72
      %p83 = scmp.eq.s32.totalorder %s37, 0
      %p84 = por %p82, %p83
      %p85 = scmp.ne.s32.totalorder %s71, %s72
      %p86 = scmp.eq.s32.totalorder %s38, 1
      %p87 = por %p85, %p86
      %p89 = scmp.ne.s32.totalorder %s72, %s88
      %p90 = scmp.eq.s32.totalorder %s38, 0
      %p91 = por %p89, %p90
      %s92 = ssub.s32 %s32, %s39
      %p93 = scmp.eq.s32.totalorder %s92, 0
      %s95 = sadd.s32 %s94, 1
      %s96 = scalar_select %p93, %s94, %s95
      %p99 = pneg %p93
      %p100 = scmp.eq.s32.totalorder %s32, 1
      %p101 = por %p99, %p100
      %p102 = scmp.ne.s32.totalorder %s94, %s97
      %p103 = scmp.eq.s32.totalorder %s32, 0
      %p104 = por %p102, %p103
      %p105 = scmp.ne.s32.totalorder %s94, %s97
      %p106 = scmp.eq.s32.totalorder %s37, 1
      %p107 = por %p105, %p106
      %p108 = scmp.ne.s32.totalorder %s97, %s98
      %p109 = scmp.eq.s32.totalorder %s37, 0
      %p110 = por %p108, %p109
      %p111 = scmp.ne.s32.totalorder %s97, %s98
      %p112 = scmp.eq.s32.totalorder %s38, 1
      %p113 = por %p111, %p112
      %p115 = scmp.ne.s32.totalorder %s98, %s114
      %p116 = scmp.eq.s32.totalorder %s38, 0
      %p117 = por %p115, %p116
      %s118 = ssub.s32 %s32, %s39
      %p119 = scmp.eq.s32.totalorder %s118, 0
      %s121 = sadd.s32 %s120, 1
      %s122 = scalar_select %p119, %s120, %s121
      %p125 = pneg %p119
      %p126 = scmp.eq.s32.totalorder %s32, 1
      %p127 = por %p125, %p126
      %p128 = scmp.ne.s32.totalorder %s120, %s123
      %p129 = scmp.eq.s32.totalorder %s32, 0
      %p130 = por %p128, %p129
      %p131 = scmp.ne.s32.totalorder %s120, %s123
      %p132 = scmp.eq.s32.totalorder %s37, 1
      %p133 = por %p131, %p132
      %p134 = scmp.ne.s32.totalorder %s123, %s124
      %p135 = scmp.eq.s32.totalorder %s37, 0
      %p136 = por %p134, %p135
      %p137 = scmp.ne.s32.totalorder %s123, %s124
      %p138 = scmp.eq.s32.totalorder %s38, 1
      %p139 = por %p137, %p138
      %p141 = scmp.ne.s32.totalorder %s124, %s140
      %p142 = scmp.eq.s32.totalorder %s38, 0
      %p143 = por %p141, %p142
      %s145 = sadd.s32 %s144, 1
      %p148 = scmp.eq.s32.totalorder %s32, 1
      %p149 = scmp.ne.s32.totalorder %s144, %s146
      %p150 = scmp.eq.s32.totalorder %s32, 0
      %p151 = por %p149, %p150
      %p152 = scmp.ne.s32.totalorder %s144, %s146
      %p153 = scmp.eq.s32.totalorder %s37, 1
      %p154 = por %p152, %p153
      %p155 = scmp.ne.s32.totalorder %s146, %s147
      %p156 = scmp.eq.s32.totalorder %s37, 0
      %p157 = por %p155, %p156
      %p158 = scmp.ne.s32.totalorder %s146, %s147
      %p159 = scmp.eq.s32.totalorder %s38, 1
      %p160 = por %p158, %p159
      %p162 = scmp.ne.s32.totalorder %s147, %s161
      %p163 = scmp.eq.s32.totalorder %s38, 0
      %p164 = por %p162, %p163
      %s166 = sadd.s32 %s165, 1
      %p169 = scmp.eq.s32.totalorder %s32, 1
      %p170 = scmp.ne.s32.totalorder %s165, %s167
      %p171 = scmp.eq.s32.totalorder %s32, 0
      %p172 = por %p170, %p171
      %p173 = scmp.ne.s32.totalorder %s165, %s167
      %p174 = scmp.eq.s32.totalorder %s37, 1
      %p175 = por %p173, %p174
      %p176 = scmp.ne.s32.totalorder %s167, %s168
      %p177 = scmp.eq.s32.totalorder %s37, 0
      %p178 = por %p176, %p177
      %p179 = scmp.ne.s32.totalorder %s167, %s168
      %p180 = scmp.eq.s32.totalorder %s38, 1
      %p181 = por %p179, %p180
      %p183 = scmp.ne.s32.totalorder %s168, %s182
      %p184 = scmp.eq.s32.totalorder %s38, 0
      %p185 = por %p183, %p184
      %s187 = sadd.s32 %s186, 1
      %p190 = scmp.eq.s32.totalorder %s32, 1
      %p191 = scmp.ne.s32.totalorder %s186, %s188
      %p192 = scmp.eq.s32.totalorder %s32, 0
      %p193 = por %p191, %p192
      %p194 = scmp.ne.s32.totalorder %s186, %s188
      %p195 = scmp.eq.s32.totalorder %s37, 1
      %p196 = por %p194, %p195
      %p197 = scmp.ne.s32.totalorder %s188, %s189
      %p198 = scmp.eq.s32.totalorder %s37, 0
      %p199 = por %p197, %p198
      %p200 = scmp.ne.s32.totalorder %s188, %s189
      %p201 = scmp.eq.s32.totalorder %s38, 1
      %p202 = por %p200, %p201
      %p204 = scmp.ne.s32.totalorder %s189, %s203
      %p205 = scmp.eq.s32.totalorder %s38, 0
      %p206 = por %p204, %p205
      %s208 = sadd.s32 %s207, 1
      %p211 = scmp.eq.s32.totalorder %s32, 1
      %p212 = scmp.ne.s32.totalorder %s207, %s209
      %p213 = scmp.eq.s32.totalorder %s32, 0
      %p214 = por %p212, %p213
      %p215 = scmp.ne.s32.totalorder %s207, %s209
      %p216 = scmp.eq.s32.totalorder %s37, 1
      %p217 = por %p215, %p216
      %p218 = scmp.ne.s32.totalorder %s209, %s210
      %p219 = scmp.eq.s32.totalorder %s37, 0
      %p220 = por %p218, %p219
      %p221 = scmp.ne.s32.totalorder %s209, %s210
      %p222 = scmp.eq.s32.totalorder %s38, 1
      %p223 = por %p221, %p222
      %p225 = scmp.ne.s32.totalorder %s210, %s224
      %p226 = scmp.eq.s32.totalorder %s38, 0
      %p227 = por %p225, %p226
      %s229 = sadd.s32 %s228, 1
      %p232 = scmp.eq.s32.totalorder %s32, 1
      %p233 = scmp.ne.s32.totalorder %s228, %s230
      %p234 = scmp.eq.s32.totalorder %s32, 0
      %p235 = por %p233, %p234
      %p236 = scmp.ne.s32.totalorder %s228, %s230
      %p237 = scmp.eq.s32.totalorder %s37, 1
      %p238 = por %p236, %p237
      %p239 = scmp.ne.s32.totalorder %s230, %s231
      %p240 = scmp.eq.s32.totalorder %s37, 0
      %p241 = por %p239, %p240
      %p242 = scmp.ne.s32.totalorder %s230, %s231
      %p243 = scmp.eq.s32.totalorder %s38, 1
      %p244 = por %p242, %p243
      %p246 = scmp.ne.s32.totalorder %s231, %s245
      %p247 = scmp.eq.s32.totalorder %s38, 0
      %p248 = por %p246, %p247
      %s250 = sadd.s32 %s249, 1
      %p253 = scmp.eq.s32.totalorder %s32, 1
      %p254 = scmp.ne.s32.totalorder %s249, %s251
      %p255 = scmp.eq.s32.totalorder %s32, 0
      %p256 = por %p254, %p255
      %p257 = scmp.ne.s32.totalorder %s249, %s251
      %p258 = scmp.eq.s32.totalorder %s37, 1
      %p259 = por %p257, %p258
      %p260 = scmp.ne.s32.totalorder %s251, %s252
      %p261 = scmp.eq.s32.totalorder %s37, 0
      %p262 = por %p260, %p261
      %p263 = scmp.ne.s32.totalorder %s251, %s252
      %p264 = scmp.eq.s32.totalorder %s38, 1
      %p265 = por %p263, %p264
      %p267 = scmp.ne.s32.totalorder %s252, %s266
      %p268 = scmp.eq.s32.totalorder %s38, 0
      %p269 = por %p267, %p268
      %s271 = sadd.s32 %s270, 1
      %p274 = scmp.eq.s32.totalorder %s32, 1
      %p275 = scmp.ne.s32.totalorder %s270, %s272
      %p276 = scmp.eq.s32.totalorder %s32, 0
      %p277 = por %p275, %p276
      %p278 = scmp.ne.s32.totalorder %s270, %s272
      %p279 = scmp.eq.s32.totalorder %s37, 1
      %p280 = por %p278, %p279
      %p281 = scmp.ne.s32.totalorder %s272, %s273
      %p282 = scmp.eq.s32.totalorder %s37, 0
      %p283 = por %p281, %p282
      %p284 = scmp.ne.s32.totalorder %s272, %s273
      %p285 = scmp.eq.s32.totalorder %s38, 1
      %p286 = por %p284, %p285
      %p288 = scmp.ne.s32.totalorder %s273, %s287
      %p289 = scmp.eq.s32.totalorder %s38, 0
      %p290 = por %p288, %p289
      %s292 = sadd.s32 %s291, 1
      %p295 = scmp.eq.s32.totalorder %s32, 1
      %p296 = scmp.ne.s32.totalorder %s291, %s293
      %p297 = scmp.eq.s32.totalorder %s32, 0
      %p298 = por %p296, %p297
      %p299 = scmp.ne.s32.totalorder %s291, %s293
      %p300 = scmp.eq.s32.totalorder %s37, 1
      %p301 = por %p299, %p300
      %p302 = scmp.ne.s32.totalorder %s293, %s294
      %p303 = scmp.eq.s32.totalorder %s37, 0
      %p304 = por %p302, %p303
      %p305 = scmp.ne.s32.totalorder %s293, %s294
      %p306 = scmp.eq.s32.totalorder %s38, 1
      %p307 = por %p305, %p306
      %p309 = scmp.ne.s32.totalorder %s294, %s308
      %p310 = scmp.eq.s32.totalorder %s38, 0
      %p311 = por %p309, %p310
      %s313 = sadd.s32 %s312, 1
      %p316 = scmp.eq.s32.totalorder %s32, 1
      %p317 = scmp.ne.s32.totalorder %s312, %s314
      %p318 = scmp.eq.s32.totalorder %s32, 0
      %p319 = por %p317, %p318
      %p320 = scmp.ne.s32.totalorder %s312, %s314
      %p321 = scmp.eq.s32.totalorder %s37, 1
      %p322 = por %p320, %p321
      %p323 = scmp.ne.s32.totalorder %s314, %s315
      %p324 = scmp.eq.s32.totalorder %s37, 0
      %p325 = por %p323, %p324
      %p326 = scmp.ne.s32.totalorder %s314, %s315
      %p327 = scmp.eq.s32.totalorder %s38, 1
      %p328 = por %p326, %p327
      %p330 = scmp.ne.s32.totalorder %s315, %s329
      %p331 = scmp.eq.s32.totalorder %s38, 0
      %p332 = por %p330, %p331
      %s334 = sadd.s32 %s333, 1
      %p337 = scmp.eq.s32.totalorder %s32, 1
      %p338 = scmp.ne.s32.totalorder %s333, %s335
      %p339 = scmp.eq.s32.totalorder %s32, 0
      %p340 = por %p338, %p339
      %p341 = scmp.ne.s32.totalorder %s333, %s335
      %p342 = scmp.eq.s32.totalorder %s37, 1
      %p343 = por %p341, %p342
      %p344 = scmp.ne.s32.totalorder %s335, %s336
      %p345 = scmp.eq.s32.totalorder %s37, 0
      %p346 = por %p344, %p345
      %p347 = scmp.ne.s32.totalorder %s335, %s336
      %p348 = scmp.eq.s32.totalorder %s38, 1
      %p349 = por %p347, %p348
      %p351 = scmp.ne.s32.totalorder %s336, %s350
      %p352 = scmp.eq.s32.totalorder %s38, 0
      %p353 = por %p351, %p352
      %s354 = ssub.s32 %s32, %s39
      %p355 = scmp.eq.s32.totalorder %s354, 0
      %s357 = sadd.s32 %s356, 1
      %s358 = scalar_select %p355, %s356, %s357
      %p361 = pneg %p355
      %p362 = scmp.eq.s32.totalorder %s32, 1
      %p363 = por %p361, %p362
      %p364 = scmp.ne.s32.totalorder %s356, %s359
      %p365 = scmp.eq.s32.totalorder %s32, 0
      %p366 = por %p364, %p365
      %p367 = scmp.ne.s32.totalorder %s356, %s359
      %p368 = scmp.eq.s32.totalorder %s37, 1
      %p369 = por %p367, %p368
      %p370 = scmp.ne.s32.totalorder %s359, %s360
      %p371 = scmp.eq.s32.totalorder %s37, 0
      %p372 = por %p370, %p371
      %p373 = scmp.ne.s32.totalorder %s359, %s360
      %p374 = scmp.eq.s32.totalorder %s38, 1
      %p375 = por %p373, %p374
      %p377 = scmp.ne.s32.totalorder %s360, %s376
      %p378 = scmp.eq.s32.totalorder %s38, 0
      %p379 = por %p377, %p378
      %s380 = ssub.s32 %s32, %s39
      %p381 = scmp.eq.s32.totalorder %s380, 0
      %s383 = sadd.s32 %s382, 1
      %s384 = scalar_select %p381, %s382, %s383
      %p387 = pneg %p381
      %p388 = scmp.eq.s32.totalorder %s32, 1
      %p389 = por %p387, %p388
      %p390 = scmp.ne.s32.totalorder %s382, %s385
      %p391 = scmp.eq.s32.totalorder %s32, 0
      %p392 = por %p390, %p391
      %p393 = scmp.ne.s32.totalorder %s382, %s385
      %p394 = scmp.eq.s32.totalorder %s37, 1
      %p395 = por %p393, %p394
      %p396 = scmp.ne.s32.totalorder %s385, %s386
      %p397 = scmp.eq.s32.totalorder %s37, 0
      %p398 = por %p396, %p397
      %p399 = scmp.ne.s32.totalorder %s385, %s386
      %p400 = scmp.eq.s32.totalorder %s38, 1
      %p401 = por %p399, %p400
      %p403 = scmp.ne.s32.totalorder %s386, %s402
      %p404 = scmp.eq.s32.totalorder %s38, 0
      %p405 = por %p403, %p404
      %s406 = ssub.s32 %s32, %s39
      %p407 = scmp.eq.s32.totalorder %s406, 0
      %s409 = sadd.s32 %s408, 1
      %s410 = scalar_select %p407, %s408, %s409
      %p413 = pneg %p407
      %p414 = scmp.eq.s32.totalorder %s32, 1
      %p415 = por %p413, %p414
      %p416 = scmp.ne.s32.totalorder %s408, %s411
      %p417 = scmp.eq.s32.totalorder %s32, 0
      %p418 = por %p416, %p417
      %p419 = scmp.ne.s32.totalorder %s408, %s411
      %p420 = scmp.eq.s32.totalorder %s37, 1
      %p421 = por %p419, %p420
      %p422 = scmp.ne.s32.totalorder %s411, %s412
      %p423 = scmp.eq.s32.totalorder %s37, 0
      %p424 = por %p422, %p423
      %p425 = scmp.ne.s32.totalorder %s411, %s412
      %p426 = scmp.eq.s32.totalorder %s38, 1
      %p427 = por %p425, %p426
      %p429 = scmp.ne.s32.totalorder %s412, %s428
      %p430 = scmp.eq.s32.totalorder %s38, 0
      %p431 = por %p429, %p430
      %p432 = scmp.le.s32.totalorder 1, %s32
      %p433 = scmp.lt.s32.totalorder %s32, 3
      %p434 = pnand %p432, %p433
      %p435 = pneg %p434
      // Predicated region
      $region9: #{tpu_custom_call.1} parent=5 // pred_check
        _
      $region10: #{tpu_custom_call.1} parent=5 // pred_check_branch
        %437 = sbr.rel (%p434) target = $region12
      $region11: #{tpu_custom_call.1} parent=5 // pred_region
        %s438 = ssub.s32 %s32, 1
        // Predicated region
        $region13: #{tpu_custom_call.1} parent=11 // pred_check
          %p439 = pneg %p157
        $region14: #{tpu_custom_call.1} parent=11 // pred_check_branch
          %441 = sbr.rel (%p439) target = $region16
        $region15: #{tpu_custom_call.1} parent=11 // pred_region
          _
        $region16: #{tpu_custom_call.1} parent=11 // pred_fallthru
          _
        // Predicated region
        $region17: #{tpu_custom_call.1} parent=11 // pred_check
          %p442 = pneg %p178
        $region18: #{tpu_custom_call.1} parent=11 // pred_check_branch
          %444 = sbr.rel (%p442) target = $region20
        $region19: #{tpu_custom_call.1} parent=11 // pred_region
          _
        $region20: #{tpu_custom_call.1} parent=11 // pred_fallthru
          _
        // Predicated region
        $region21: #{tpu_custom_call.1} parent=11 // pred_check
          %p445 = pneg %p199
        $region22: #{tpu_custom_call.1} parent=11 // pred_check_branch
          %447 = sbr.rel (%p445) target = $region24
        $region23: #{tpu_custom_call.1} parent=11 // pred_region
          _
        $region24: #{tpu_custom_call.1} parent=11 // pred_fallthru
          _
        // Predicated region
        $region25: #{tpu_custom_call.1} parent=11 // pred_check
          %p448 = pneg %p220
        $region26: #{tpu_custom_call.1} parent=11 // pred_check_branch
          %450 = sbr.rel (%p448) target = $region28
        $region27: #{tpu_custom_call.1} parent=11 // pred_region
          _
        $region28: #{tpu_custom_call.1} parent=11 // pred_fallthru
          _
        // Predicated region
        $region29: #{tpu_custom_call.1} parent=11 // pred_check
          %p451 = pneg %p241
        $region30: #{tpu_custom_call.1} parent=11 // pred_check_branch
          %453 = sbr.rel (%p451) target = $region32
        $region31: #{tpu_custom_call.1} parent=11 // pred_region
          _
        $region32: #{tpu_custom_call.1} parent=11 // pred_fallthru
          _
        // Predicated region
        $region33: #{tpu_custom_call.1} parent=11 // pred_check
          %p454 = pneg %p262
        $region34: #{tpu_custom_call.1} parent=11 // pred_check_branch
          %456 = sbr.rel (%p454) target = $region36
        $region35: #{tpu_custom_call.1} parent=11 // pred_region
          _
        $region36: #{tpu_custom_call.1} parent=11 // pred_fallthru
          _
        // Predicated region
        $region37: #{tpu_custom_call.1} parent=11 // pred_check
          %p457 = pneg %p283
        $region38: #{tpu_custom_call.1} parent=11 // pred_check_branch
          %459 = sbr.rel (%p457) target = $region40
        $region39: #{tpu_custom_call.1} parent=11 // pred_region
          _
        $region40: #{tpu_custom_call.1} parent=11 // pred_fallthru
          _
        // Predicated region
        $region41: #{tpu_custom_call.1} parent=11 // pred_check
          %p460 = pneg %p304
        $region42: #{tpu_custom_call.1} parent=11 // pred_check_branch
          %462 = sbr.rel (%p460) target = $region44
        $region43: #{tpu_custom_call.1} parent=11 // pred_region
          _
        $region44: #{tpu_custom_call.1} parent=11 // pred_fallthru
          _
        // Predicated region
        $region45: #{tpu_custom_call.1} parent=11 // pred_check
          %p463 = pneg %p325
        $region46: #{tpu_custom_call.1} parent=11 // pred_check_branch
          %465 = sbr.rel (%p463) target = $region48
        $region47: #{tpu_custom_call.1} parent=11 // pred_region
          _
        $region48: #{tpu_custom_call.1} parent=11 // pred_fallthru
          _
        // Predicated region
        $region49: #{tpu_custom_call.1} parent=11 // pred_check
          %p466 = pneg %p346
        $region50: #{tpu_custom_call.1} parent=11 // pred_check_branch
          %468 = sbr.rel (%p466) target = $region52
        $region51: #{tpu_custom_call.1} parent=11 // pred_region
          _
        $region52: #{tpu_custom_call.1} parent=11 // pred_fallthru
          _
      $region12: #{tpu_custom_call.1} parent=5 // pred_fallthru
        _
      %p469 = scmp.lt.s32.totalorder %s32, 2
      // Predicated region
      $region53: #{tpu_custom_call.1} parent=5 // pred_check
        %p470 = pneg %p469
      $region54: #{tpu_custom_call.1} parent=5 // pred_check_branch
        %472 = sbr.rel (%p470) target = $region56
      $region55: #{tpu_custom_call.1} parent=5 // pred_region
        // Predicated region
        $region57: #{tpu_custom_call.1} parent=55 // pred_check
          %p473 = pneg %p52
        $region58: #{tpu_custom_call.1} parent=55 // pred_check_branch
          %475 = sbr.rel (%p473) target = $region60
        $region59: #{tpu_custom_call.1} parent=55 // pred_region
          %s476 = smul.u32 4, %s32
          %p477 = scmp.lt.s32.totalorder %s476, 7
          %s478 = scalar_select %p477, %s476, 7
          %s479 = smul.addr %s478, 8
          %s480 = scalar_lea.vmem %s0, %s479
          %s481 = smul.u32 4, %s32
        $region60: #{tpu_custom_call.1} parent=55 // pred_fallthru
          _
        // Predicated region
        $region61: #{tpu_custom_call.1} parent=55 // pred_check
          %p482 = pneg %p78
        $region62: #{tpu_custom_call.1} parent=55 // pred_check_branch
          %484 = sbr.rel (%p482) target = $region64
        $region63: #{tpu_custom_call.1} parent=55 // pred_region
          %s485 = sand.u32 %s68, 1
          %s486 = scalar_lea.sflag [#allocation3], %s485
          %s487 = sand.u32 %s68, 1
          %s488 = smul.addr %s487, 128
          %s489 = scalar_lea.vmem [#allocation2], %s488
          %s490 = smul.u32 4, %s32
          %492 = vsyncadd %s486, 0
          %s493 = smul.addr %s490, 4
          %s494 = smul.addr %s493, 8
          %s495 = scalar_lea.hbm %s1, %s494
          %s496 = sshll.u32 %s495, 4
          %s497 = int_to_ptr.hbm [resolvable:$true] %s496
          %s498 = sshll.u32 %s489, 4
          %s499 = int_to_ptr.vmem [resolvable:$true] %s498
          %504 = dma.hbm_to_vmem [thread:$0]  %s497, 2048, %s499, %s486, 128, 128, 8
        $region64: #{tpu_custom_call.1} parent=55 // pred_fallthru
          _
        // Predicated region
        $region65: #{tpu_custom_call.1} parent=55 // pred_check
          %p505 = pneg %p104
        $region66: #{tpu_custom_call.1} parent=55 // pred_check_branch
          %507 = sbr.rel (%p505) target = $region68
        $region67: #{tpu_custom_call.1} parent=55 // pred_region
          %s508 = smul.u32 4, %s32
          %p509 = scmp.lt.s32.totalorder %s508, 7
          %s510 = scalar_select %p509, %s508, 7
          %s511 = smul.addr %s510, 8
          %s512 = scalar_lea.vmem %s2, %s511
          %s513 = smul.u32 4, %s32
        $region68: #{tpu_custom_call.1} parent=55 // pred_fallthru
          _
        // Predicated region
        $region69: #{tpu_custom_call.1} parent=55 // pred_check
          %p514 = pneg %p130
        $region70: #{tpu_custom_call.1} parent=55 // pred_check_branch
          %516 = sbr.rel (%p514) target = $region72
        $region71: #{tpu_custom_call.1} parent=55 // pred_region
          %s517 = smul.u32 4, %s32
          %p518 = scmp.lt.s32.totalorder %s517, 7
          %s519 = scalar_select %p518, %s517, 7
          %s520 = scalar_lea.vmem %s3, %s519
          %s521 = smul.u32 4, %s32
        $region72: #{tpu_custom_call.1} parent=55 // pred_fallthru
          _
      $region56: #{tpu_custom_call.1} parent=5 // pred_fallthru
        _
      %p522 = scmp.le.s32.totalorder 1, %s32
      %p523 = scmp.lt.s32.totalorder %s32, 3
      %p524 = pnand %p522, %p523
      %p525 = pneg %p524
      // Predicated region
      $region73: #{tpu_custom_call.1} parent=5 // pred_check
        _
      $region74: #{tpu_custom_call.1} parent=5 // pred_check_branch
        %527 = sbr.rel (%p524) target = $region76
      $region75: #{tpu_custom_call.1} parent=5 // pred_region
        %s528 = ssub.s32 %s32, 1
        %s529 = sand.u32 %s71, 1
        %s530 = scalar_lea.sflag [#allocation3], %s529
        %s531 = sand.u32 %s71, 1
        %s532 = smul.addr %s531, 128
        %s533 = scalar_lea.vmem [#allocation2], %s532
        // Predicated region
        $region77: #{tpu_custom_call.1} parent=75 // pred_check
          %p534 = pneg %p84
        $region78: #{tpu_custom_call.1} parent=75 // pred_check_branch
          %536 = sbr.rel (%p534) target = $region80
        $region79: #{tpu_custom_call.1} parent=75 // pred_region
          %538 = dma.done %s530, 2048
        $region80: #{tpu_custom_call.1} parent=75 // pred_fallthru
          _
        %s539 = smul.u32 4, %s37
        %p540 = scmp.lt.s32.totalorder %s539, 7
        %s541 = scalar_select %p540, %s539, 7
        %s542 = smul.addr %s541, 8
        %s543 = scalar_lea.vmem %s0, %s542
        %p544 = pneg %p58
        %p545 = pneg %p55
        %s546 = sand.u32 %s71, 1
        %s547 = scalar_lea.sflag [#allocation3], %s546
        %s548 = sand.u32 %s71, 1
        %s549 = smul.addr %s548, 128
        %s550 = scalar_lea.vmem [#allocation2], %s549
        %p551 = pneg %p84
        %p552 = pneg %p81
        %s553 = smul.u32 4, %s37
        %p554 = scmp.lt.s32.totalorder %s553, 7
        %s555 = scalar_select %p554, %s553, 7
        %s556 = smul.addr %s555, 8
        %s557 = scalar_lea.vmem %s2, %s556
        %p558 = pneg %p110
        %p559 = pneg %p107
        %s560 = smul.u32 4, %s37
        %p561 = scmp.lt.s32.totalorder %s560, 7
        %s562 = scalar_select %p561, %s560, 7
        %s563 = scalar_lea.vmem %s3, %s562
        %p564 = pneg %p136
        %p565 = pneg %p133
        %p566 = pneg %p157
        %p567 = pneg %p154
        %p568 = pneg %p178
        %p569 = pneg %p175
        %p570 = pneg %p199
        %p571 = pneg %p196
        %p572 = pneg %p220
        %p573 = pneg %p217
        %p574 = pneg %p241
        %p575 = pneg %p238
        %p576 = pneg %p262
        %p577 = pneg %p259
        %p578 = pneg %p283
        %p579 = pneg %p280
        %p580 = pneg %p304
        %p581 = pneg %p301
        %p582 = pneg %p325
        %p583 = pneg %p322
        %p584 = pneg %p346
        %p585 = pneg %p343
        %p586 = pneg %p372
        %p587 = pneg %p369
        %s588 = sand.u32 %s359, 1
        %s589 = scalar_lea.sflag [#allocation4], %s588
        %s590 = sand.u32 %s359, 1
        %s591 = smul.addr %s590, 32
        %s592 = scalar_lea.vmem [#allocation5], %s591
        %p593 = pneg %p398
        %p594 = pneg %p395
        %s595 = sand.u32 %s37, 1
        %s596 = scalar_lea.sflag [#allocation7], %s595
        %s597 = sand.u32 %s385, 1
        %s598 = smul.addr %s597, 32
        %s599 = scalar_lea.vmem [#allocation6], %s598
        %p600 = pneg %p424
        %p601 = pneg %p421
        %s602 = sand.u32 %s37, 1
        %s603 = scalar_lea.sflag [#allocation7], %s602
        %s604 = sand.u32 %s411, 1
        %s605 = smul.addr %s604, 32
        %s606 = scalar_lea.vmem [#allocation8], %s605
        %s607 = smul.u32 4, %s37
        %p608 = scmp.lt.s32.totalorder %s607, 7
        %s609 = scalar_select %p608, %s607, 7
        %s610 = smul.addr %s609, 8
        %s611 = scalar_lea.vmem %s0, %s610
        %s612 = smul.u32 4, %s37
        %s613 = smul.u32 4, %s37
        %s614 = smul.u32 4, %s37
        %p615 = scmp.lt.s32.totalorder %s614, 7
        %s616 = scalar_select %p615, %s614, 7
        %s617 = smul.addr %s616, 8
        %s618 = scalar_lea.vmem %s2, %s617
        %s619 = smul.u32 4, %s37
        %s620 = smul.u32 4, %s37
        %p621 = scmp.lt.s32.totalorder %s620, 7
        %s622 = scalar_select %p621, %s620, 7
        %s623 = scalar_lea.vmem %s3, %s622
        %s624 = smul.u32 4, %s37
        %s625 = smul.u32 4, %s37
        %s626 = smul.u32 4, %s37
        %s627 = smul.u32 4, %s37
        %v629 = vld [vmem:[%s611] sm:$0xff]
        %v630 = vld [vmem:[%s611 + $0x8] sm:$0xff]
        %v631 = vld [vmem:[%s611 + $0x10] sm:$0xff]
        %v632 = vld [vmem:[%s611 + $0x18] sm:$0xff]
        %vm633 = vcmask 261120
        %v634 = vsel %vm633, %v629, 0.0
        %635 = vadd.xlane.f32.xlu0 %v634
        %v636 = vpop.xlane.xlu0 %635
        %v637 = vsel %vm633, %v630, 0.0
        %638 = vadd.xlane.f32.xlu0 %v637
        %v639 = vpop.xlane.xlu0 %638
        %v640 = vsel %vm633, %v631, 0.0
        %641 = vadd.xlane.f32.xlu0 %v640
        %v642 = vpop.xlane.xlu0 %641
        %v643 = vsel %vm633, %v632, 0.0
        %644 = vadd.xlane.f32.xlu0 %v643
        %v645 = vpop.xlane.xlu0 %644
        %v646 = vrcp.pop 32.0
        %v647 = vmul.f32 32.0, %v646
        %v648 = vsub.f32 1.0, %v647
        %v649 = vmul.f32 %v646, %v648
        %v650 = vadd.f32 %v646, %v649
        %vm651 = vweird.f32 %v646
        %v652 = vsel %vm651, %v646, %v650
        %v653 = vmul.f32 %v636, %v652
        %v654 = vmul.f32 %v639, %v652
        %v655 = vmul.f32 %v642, %v652
        %v656 = vmul.f32 %v645, %v652
        %v657 = vsub.f32 %v629, %v653
        %v658 = vsub.f32 %v630, %v654
        %v659 = vsub.f32 %v631, %v655
        %v660 = vsub.f32 %v632, %v656
        %v661 = vmul.f32 %v657, %v657
        %v662 = vmul.f32 %v658, %v658
        %v663 = vmul.f32 %v659, %v659
        %v664 = vmul.f32 %v660, %v660
        %v665 = vsel %vm633, %v661, 0.0
        %666 = vadd.xlane.f32.xlu0 %v665
        %v667 = vpop.xlane.xlu0 %666
        %v668 = vsel %vm633, %v662, 0.0
        %669 = vadd.xlane.f32.xlu0 %v668
        %v670 = vpop.xlane.xlu0 %669
        %v671 = vsel %vm633, %v663, 0.0
        %672 = vadd.xlane.f32.xlu0 %v671
        %v673 = vpop.xlane.xlu0 %672
        %v674 = vsel %vm633, %v664, 0.0
        %675 = vadd.xlane.f32.xlu0 %v674
        %v676 = vpop.xlane.xlu0 %675
        %v677 = vmul.f32 %v667, %v652
        %v678 = vmul.f32 %v670, %v652
        %v679 = vmul.f32 %v673, %v652
        %v680 = vmul.f32 %v676, %v652
        %v681 = vadd.f32 %v677, 1e-05
        %v682 = vadd.f32 %v678, 1e-05
        %v683 = vadd.f32 %v679, 1e-05
        %v684 = vadd.f32 %v680, 1e-05
        %v685 = vrsqrt.pop %v681
        %v686 = vmul.f32 %v685, %v681
        %v687 = vmul.f32 %v686, %v685
        %v688 = vmul.f32 0.5, %v687
        %v689 = vsub.f32 1.5, %v688
        %v690 = vmul.f32 %v685, %v689
        %vm691 = vweird.f32 %v681
        %vm692 = vweird.f32 %v685
        %vm693 = vmor %vm691, %vm692
        %v694 = vsel %vm693, %v685, %v690
        %v695 = vrsqrt.pop %v682
        %v696 = vmul.f32 %v695, %v682
        %v697 = vmul.f32 %v696, %v695
        %v698 = vmul.f32 0.5, %v697
        %v699 = vsub.f32 1.5, %v698
        %v700 = vmul.f32 %v695, %v699
        %vm701 = vweird.f32 %v682
        %vm702 = vweird.f32 %v695
        %vm703 = vmor %vm701, %vm702
        %v704 = vsel %vm703, %v695, %v700
        %v705 = vrsqrt.pop %v683
        %v706 = vmul.f32 %v705, %v683
        %v707 = vmul.f32 %v706, %v705
        %v708 = vmul.f32 0.5, %v707
        %v709 = vsub.f32 1.5, %v708
        %v710 = vmul.f32 %v705, %v709
        %vm711 = vweird.f32 %v683
        %vm712 = vweird.f32 %v705
        %vm713 = vmor %vm711, %vm712
        %v714 = vsel %vm713, %v705, %v710
        %v715 = vrsqrt.pop %v684
        %v716 = vmul.f32 %v715, %v684
        %v717 = vmul.f32 %v716, %v715
        %v718 = vmul.f32 0.5, %v717
        %v719 = vsub.f32 1.5, %v718
        %v720 = vmul.f32 %v715, %v719
        %vm721 = vweird.f32 %v684
        %vm722 = vweird.f32 %v715
        %vm723 = vmor %vm721, %vm722
        %v724 = vsel %vm723, %v715, %v720
        %v725 = vmul.f32 %v657, %v694
        %v726 = vmul.f32 %v658, %v704
        %v727 = vmul.f32 %v659, %v714
        %v728 = vmul.f32 %v660, %v724
        %v729 = vld [vmem:[%s4] sm:$0x1]
        %v731 = vperm.slane %v729, 0
        %v733 = vmul.f32 %v725, %v731
        %v734 = vmul.f32 %v726, %v731
        %v735 = vmul.f32 %v727, %v731
        %v736 = vmul.f32 %v728, %v731
        %v737 = vld [vmem:[%s5] sm:$0x1]
        %v739 = vperm.slane %v737, 0
        %v741 = vadd.f32 %v733, %v739
        %v742 = vadd.f32 %v734, %v739
        %v743 = vadd.f32 %v735, %v739
        %v744 = vadd.f32 %v736, %v739
        %v745 = vpack.c.bf16 %v742, %v741
        %v746 = vpack.c.bf16 %v744, %v743
        %v747 = vld [vmem:[%s6] sm:$0xf]
        %v748 = vld [vmem:[%s6 + $0x4] sm:$0xf]
        %v749 = vld [vmem:[%s6 + $0x8] sm:$0xf]
        %v750 = vld [vmem:[%s6 + $0xc] sm:$0xf]
        %v755 = vunpack.c.l.b16 %v747
        %v756 = vunpack.c.l.b16 %v748
        %v757 = vunpack.c.l.b16 %v749
        %v758 = vunpack.c.l.b16 %v750
        %v759 = vpack.c.b16 %v756, %v755
        %v760 = vpack.c.b16 %v758, %v757
        %v764 = vsel %vm633, %v745, 0
        %v767 = vsel %vm633, %v746, 0
        %769 = vmatpush.bf16.msra.mxu0 0
        %770 = vmatpush.bf16.msra.mxu0 0
        %771 = vmatpush.bf16.msra.mxu0 0
        %772 = vmatpush.bf16.msra.mxu0 0
        %773 = vmatpush.bf16.msra.mxu0 0
        %774 = vmatpush.bf16.msra.mxu0 0
        %775 = vmatpush.bf16.msra.mxu0 %v760
        %776 = vmatpush.bf16.msra.mxu0 %v759
        %777 = vmatmul.bf16.gmra.mxu0 %v764
        %v778 = vpop.f32.mrf.mxu0
        %v779 = vadd.f32 0.0, %v778
        %v780 = vpop.f32.mrf.mxu0
        %v781 = vadd.f32 0.0, %v780
        %782 = vmatmul.bf16.gmra.mxu0 %v767
        %v783 = vpop.f32.mrf.mxu0
        %v784 = vadd.f32 0.0, %v783
        %v785 = vpop.f32.mrf.mxu0
        %v786 = vadd.f32 0.0, %v785
        %787 = vdwg.mxu0
        %v788 = vld [vmem:[%s7] sm:$0xf]
        %v789 = vld [vmem:[%s7 + $0x4] sm:$0xf]
        %v790 = vld [vmem:[%s7 + $0x8] sm:$0xf]
        %v791 = vld [vmem:[%s7 + $0xc] sm:$0xf]
        %v796 = vunpack.c.l.b16 %v788
        %v797 = vunpack.c.l.b16 %v789
        %v798 = vunpack.c.l.b16 %v790
        %v799 = vunpack.c.l.b16 %v791
        %v800 = vpack.c.b16 %v797, %v796
        %v801 = vpack.c.b16 %v799, %v798
        %804 = vmatpush.bf16.msra.mxu0 0
        %805 = vmatpush.bf16.msra.mxu0 0
        %806 = vmatpush.bf16.msra.mxu0 0
        %807 = vmatpush.bf16.msra.mxu0 0
        %808 = vmatpush.bf16.msra.mxu0 0
        %809 = vmatpush.bf16.msra.mxu0 0
        %810 = vmatpush.bf16.msra.mxu0 %v801
        %811 = vmatpush.bf16.msra.mxu0 %v800
        %812 = vmatmul.bf16.gmra.mxu0 %v764
        %v813 = vpop.f32.mrf.mxu0
        %v814 = vadd.f32 0.0, %v813
        %v815 = vpop.f32.mrf.mxu0
        %v816 = vadd.f32 0.0, %v815
        %817 = vmatmul.bf16.gmra.mxu0 %v767
        %v818 = vpop.f32.mrf.mxu0
        %v819 = vadd.f32 0.0, %v818
        %v820 = vpop.f32.mrf.mxu0
        %v821 = vadd.f32 0.0, %v820
        %822 = vdwg.mxu0
        %vm823 = vcmask 523264
        %824 = vst.msk [vmem:[%s606] sm:$0xff] %vm823, %v814
        %825 = vst.msk [vmem:[%s606 + $0x8] sm:$0xff] %vm823, %v816
        %826 = vst.msk [vmem:[%s606 + $0x10] sm:$0xff] %vm823, %v819
        %827 = vst.msk [vmem:[%s606 + $0x18] sm:$0xff] %vm823, %v821
        %v828 = vmul.f32 %v779, 0.35355338
        %v829 = vmul.f32 %v781, 0.35355338
        %v830 = vmul.f32 %v784, 0.35355338
        %v831 = vmul.f32 %v786, 0.35355338
        %v832 = vpack.c.bf16 %v828, %v828
        %v833 = vpack.c.bf16 %v829, %v829
        %v834 = vpack.c.bf16 %v830, %v830
        %v835 = vpack.c.bf16 %v831, %v831
        %v836 = vpack.c.bf16 %v814, %v814
        %v837 = vpack.c.bf16 %v816, %v816
        %v838 = vpack.c.bf16 %v819, %v819
        %v839 = vpack.c.bf16 %v821, %v821
        %v840 = vld [vmem:[%s533] sm:$0xff]
        %v841 = vld [vmem:[%s533 + $0x8] sm:$0xff]
        %v842 = vld [vmem:[%s533 + $0x10] sm:$0xff]
        %v843 = vld [vmem:[%s533 + $0x18] sm:$0xff]
        %v844 = vld [vmem:[%s533 + $0x20] sm:$0xff]
        %v845 = vld [vmem:[%s533 + $0x28] sm:$0xff]
        %v846 = vld [vmem:[%s533 + $0x30] sm:$0xff]
        %v847 = vld [vmem:[%s533 + $0x38] sm:$0xff]
        %v848 = vld [vmem:[%s533 + $0x40] sm:$0xff]
        %v849 = vld [vmem:[%s533 + $0x48] sm:$0xff]
        %v850 = vld [vmem:[%s533 + $0x50] sm:$0xff]
        %v851 = vld [vmem:[%s533 + $0x58] sm:$0xff]
        %v852 = vld [vmem:[%s533 + $0x60] sm:$0xff]
        %v853 = vld [vmem:[%s533 + $0x68] sm:$0xff]
        %v854 = vld [vmem:[%s533 + $0x70] sm:$0xff]
        %v855 = vld [vmem:[%s533 + $0x78] sm:$0xff]
        %v856 = vpack.c.bf16 %v840, %v840
        %v857 = vpack.c.bf16 %v841, %v841
        %v858 = vpack.c.bf16 %v842, %v842
        %v859 = vpack.c.bf16 %v843, %v843
        %v860 = vpack.c.bf16 %v844, %v844
        %v861 = vpack.c.bf16 %v845, %v845
        %v862 = vpack.c.bf16 %v846, %v846
        %v863 = vpack.c.bf16 %v847, %v847
        %v864 = vpack.c.bf16 %v848, %v848
        %v865 = vpack.c.bf16 %v849, %v849
        %v866 = vpack.c.bf16 %v850, %v850
        %v867 = vpack.c.bf16 %v851, %v851
        %v868 = vpack.c.bf16 %v852, %v852
        %v869 = vpack.c.bf16 %v853, %v853
        %v870 = vpack.c.bf16 %v854, %v854
        %v871 = vpack.c.bf16 %v855, %v855
        %v872 = vld [vmem:[%s618] sm:$0xff]
        %v873 = vld [vmem:[%s618 + $0x8] sm:$0xff]
        %v874 = vld [vmem:[%s618 + $0x10] sm:$0xff]
        %v875 = vld [vmem:[%s618 + $0x18] sm:$0xff]
        %vm876 = vcmp.gt.f32.partialorder %v872, 0.5
        %vm877 = vcmp.gt.f32.partialorder %v873, 0.5
        %vm878 = vcmp.gt.f32.partialorder %v874, 0.5
        %vm879 = vcmp.gt.f32.partialorder %v875, 0.5
        %v880 = vld [vmem:[%s623] sm:$0x1]
        %v881 = vld [vmem:[%s623 + $0x1] sm:$0x1]
        %v882 = vld [vmem:[%s623 + $0x2] sm:$0x1]
        %v883 = vld [vmem:[%s623 + $0x3] sm:$0x1]
        %vm884 = vcmp.gt.f32.partialorder %v880, 0.5
        %vm885 = vcmp.gt.f32.partialorder %v881, 0.5
        %vm886 = vcmp.gt.f32.partialorder %v882, 0.5
        %vm887 = vcmp.gt.f32.partialorder %v883, 0.5
        %v888 = vlaneseq
        %v889 = vshrl.u32 %v888, 7
        %v890 = vlaneseq
        %v891 = vand.u32 %v890, 127
        %v892 = vadd.s32 %v889, 16
        %v893 = vadd.s32 %v891, 8
        %vm894 = vcmp.lt.s32.totalorder %v892, %v893
        %v895 = vadd.s32 %v893, 4
        %vm896 = vcmp.gt.s32.totalorder %v892, %v895
        %vm897 = vmor %vm894, %vm896
        %vm898 = vmxor %vm884, 1
        %vm899 = vmxor %vm885, 1
        %vm900 = vmxor %vm886, 1
        %vm901 = vmxor %vm887, 1
        %v902 = vsel %vm897, 1, 0
        %vm903 = vcmp.eq.s32.totalorder %v902, 1
        %v904 = vsel %vm898, 1, 0
        %v905 = vsel %vm899, 1, 0
        %v906 = vsel %vm900, 1, 0
        %v907 = vsel %vm901, 1, 0
        %v908 = vperm.slane %v904, 0
        %v909 = vperm.slane %v905, 0
        %v910 = vperm.slane %v906, 0
        %v911 = vperm.slane %v907, 0
        %vm912 = vcmp.eq.s32.totalorder %v908, 1
        %vm913 = vcmp.eq.s32.totalorder %v909, 1
        %vm914 = vcmp.eq.s32.totalorder %v910, 1
        %vm915 = vcmp.eq.s32.totalorder %v911, 1
        %vm916 = vmor %vm903, %vm912
        %vm917 = vmor %vm903, %vm913
        %vm918 = vmor %vm903, %vm914
        %vm919 = vmor %vm903, %vm915
        %vm920 = vmxor %vm876, 1
        %vm921 = vmxor %vm877, 1
        %vm922 = vmxor %vm878, 1
        %vm923 = vmxor %vm879, 1
        %v924 = vsel %vm920, 1, 0
        %v925 = vsel %vm921, 1, 0
        %v926 = vsel %vm922, 1, 0
        %v927 = vsel %vm923, 1, 0
        %928 = vset.pattern.permute.xlu0 0
        %929 = vperm.xlu0 %928, %v924
        %v930 = vpop.permute.xlu0 %929
        %931 = vset.pattern.permute.xlu0 0
        %932 = vperm.xlu0 %931, %v925
        %v933 = vpop.permute.xlu0 %932
        %934 = vset.pattern.permute.xlu0 0
        %935 = vperm.xlu0 %934, %v926
        %v936 = vpop.permute.xlu0 %935
        %937 = vset.pattern.permute.xlu0 0
        %938 = vperm.xlu0 %937, %v927
        %v939 = vpop.permute.xlu0 %938
        %vm940 = vcmp.eq.s32.totalorder %v930, 1
        %vm941 = vcmp.eq.s32.totalorder %v933, 1
        %vm942 = vcmp.eq.s32.totalorder %v936, 1
        %vm943 = vcmp.eq.s32.totalorder %v939, 1
        %vm944 = vmor %vm916, %vm940
        %vm945 = vmor %vm917, %vm941
        %vm946 = vmor %vm918, %vm942
        %vm947 = vmor %vm919, %vm943
        %vm948 = vcmask 64512
        %v950 = vsel %vm948, %v832, 0
        %v953 = vsel %vm948, %v856, 0
        %955 = vmatpush.bf16.xpose.msra.mxu0 0
        %956 = vmatpush.bf16.xpose.msra.mxu0 0
        %957 = vmatpush.bf16.xpose.msra.mxu0 0
        %958 = vmatpush.bf16.xpose.msra.mxu0 0
        %959 = vmatpush.bf16.xpose.msra.mxu0 0
        %960 = vmatpush.bf16.xpose.msra.mxu0 0
        %961 = vmatpush.bf16.xpose.msra.mxu0 0
        %962 = vmatpush.bf16.xpose.msra.mxu0 %v953
        %963 = vmatmul.bf16.gmra.mxu0 %v950
        %v964 = vpop.f32.mrf.mxu0
        %v965 = vadd.f32 0.0, %v964
        %v966 = vpop.f32.mrf.mxu0
        %967 = vdwg.mxu0
        %v969 = vsel %vm948, %v833, 0
        %v972 = vsel %vm948, %v860, 0
        %974 = vmatpush.bf16.xpose.msra.mxu0 0
        %975 = vmatpush.bf16.xpose.msra.mxu0 0
        %976 = vmatpush.bf16.xpose.msra.mxu0 0
        %977 = vmatpush.bf16.xpose.msra.mxu0 0
        %978 = vmatpush.bf16.xpose.msra.mxu0 0
        %979 = vmatpush.bf16.xpose.msra.mxu0 0
        %980 = vmatpush.bf16.xpose.msra.mxu0 0
        %981 = vmatpush.bf16.xpose.msra.mxu0 %v972
        %982 = vmatmul.bf16.gmra.mxu0 %v969
        %v983 = vpop.f32.mrf.mxu0
        %v984 = vadd.f32 0.0, %v983
        %v985 = vpop.f32.mrf.mxu0
        %986 = vdwg.mxu0
        %v988 = vsel %vm948, %v834, 0
        %v991 = vsel %vm948, %v864, 0
        %993 = vmatpush.bf16.xpose.msra.mxu0 0
        %994 = vmatpush.bf16.xpose.msra.mxu0 0
        %995 = vmatpush.bf16.xpose.msra.mxu0 0
        %996 = vmatpush.bf16.xpose.msra.mxu0 0
        %997 = vmatpush.bf16.xpose.msra.mxu0 0
        %998 = vmatpush.bf16.xpose.msra.mxu0 0
        %999 = vmatpush.bf16.xpose.msra.mxu0 0
        %1000 = vmatpush.bf16.xpose.msra.mxu0 %v991
        %1001 = vmatmul.bf16.gmra.mxu0 %v988
        %v1002 = vpop.f32.mrf.mxu0
        %v1003 = vadd.f32 0.0, %v1002
        %v1004 = vpop.f32.mrf.mxu0
        %1005 = vdwg.mxu0
        %v1007 = vsel %vm948, %v835, 0
        %v1010 = vsel %vm948, %v868, 0
        %1012 = vmatpush.bf16.xpose.msra.mxu0 0
        %1013 = vmatpush.bf16.xpose.msra.mxu0 0
        %1014 = vmatpush.bf16.xpose.msra.mxu0 0
        %1015 = vmatpush.bf16.xpose.msra.mxu0 0
        %1016 = vmatpush.bf16.xpose.msra.mxu0 0
        %1017 = vmatpush.bf16.xpose.msra.mxu0 0
        %1018 = vmatpush.bf16.xpose.msra.mxu0 0
        %1019 = vmatpush.bf16.xpose.msra.mxu0 %v1010
        %1020 = vmatmul.bf16.gmra.mxu0 %v1007
        %v1021 = vpop.f32.mrf.mxu0
        %v1022 = vadd.f32 0.0, %v1021
        %v1023 = vpop.f32.mrf.mxu0
        %1024 = vdwg.mxu0
        %v1026 = vsel %vm948, %v836, 0
        %1028 = vmatpush.bf16.xpose.msra.mxu0 0
        %1029 = vmatpush.bf16.xpose.msra.mxu0 0
        %1030 = vmatpush.bf16.xpose.msra.mxu0 0
        %1031 = vmatpush.bf16.xpose.msra.mxu0 0
        %1032 = vmatpush.bf16.xpose.msra.mxu0 0
        %1033 = vmatpush.bf16.xpose.msra.mxu0 0
        %1034 = vmatpush.bf16.xpose.msra.mxu0 0
        %1035 = vmatpush.bf16.xpose.msra.mxu0 %v1026
        %1036 = vmatmul.bf16.gmra.mxu0 %v950
        %v1037 = vpop.f32.mrf.mxu0
        %v1038 = vadd.f32 0.0, %v1037
        %v1039 = vpop.f32.mrf.mxu0
        %1040 = vdwg.mxu0
        %v1042 = vsel %vm948, %v837, 0
        %1044 = vmatpush.bf16.xpose.msra.mxu0 0
        %1045 = vmatpush.bf16.xpose.msra.mxu0 0
        %1046 = vmatpush.bf16.xpose.msra.mxu0 0
        %1047 = vmatpush.bf16.xpose.msra.mxu0 0
        %1048 = vmatpush.bf16.xpose.msra.mxu0 0
        %1049 = vmatpush.bf16.xpose.msra.mxu0 0
        %1050 = vmatpush.bf16.xpose.msra.mxu0 0
        %1051 = vmatpush.bf16.xpose.msra.mxu0 %v1042
        %1052 = vmatmul.bf16.gmra.mxu0 %v969
        %v1053 = vpop.f32.mrf.mxu0
        %v1054 = vadd.f32 0.0, %v1053
        %v1055 = vpop.f32.mrf.mxu0
        %1056 = vdwg.mxu0
        %v1058 = vsel %vm948, %v838, 0
        %1060 = vmatpush.bf16.xpose.msra.mxu0 0
        %1061 = vmatpush.bf16.xpose.msra.mxu0 0
        %1062 = vmatpush.bf16.xpose.msra.mxu0 0
        %1063 = vmatpush.bf16.xpose.msra.mxu0 0
        %1064 = vmatpush.bf16.xpose.msra.mxu0 0
        %1065 = vmatpush.bf16.xpose.msra.mxu0 0
        %1066 = vmatpush.bf16.xpose.msra.mxu0 0
        %1067 = vmatpush.bf16.xpose.msra.mxu0 %v1058
        %1068 = vmatmul.bf16.gmra.mxu0 %v988
        %v1069 = vpop.f32.mrf.mxu0
        %v1070 = vadd.f32 0.0, %v1069
        %v1071 = vpop.f32.mrf.mxu0
        %1072 = vdwg.mxu0
        %v1074 = vsel %vm948, %v839, 0
        %1076 = vmatpush.bf16.xpose.msra.mxu0 0
        %1077 = vmatpush.bf16.xpose.msra.mxu0 0
        %1078 = vmatpush.bf16.xpose.msra.mxu0 0
        %1079 = vmatpush.bf16.xpose.msra.mxu0 0
        %1080 = vmatpush.bf16.xpose.msra.mxu0 0
        %1081 = vmatpush.bf16.xpose.msra.mxu0 0
        %1082 = vmatpush.bf16.xpose.msra.mxu0 0
        %1083 = vmatpush.bf16.xpose.msra.mxu0 %v1074
        %1084 = vmatmul.bf16.gmra.mxu0 %v1007
        %v1085 = vpop.f32.mrf.mxu0
        %v1086 = vadd.f32 0.0, %v1085
        %v1087 = vpop.f32.mrf.mxu0
        %1088 = vdwg.mxu0
        %1093 = vrot.lane.b32.xlu0 %v1038, 8
        %v1094 = vpop.permute.xlu0 %1093
        %1095 = vrot.lane.b32.xlu0 %v1054, 8
        %v1096 = vpop.permute.xlu0 %1095
        %1097 = vrot.lane.b32.xlu0 %v1070, 8
        %v1098 = vpop.permute.xlu0 %1097
        %1099 = vrot.lane.b32.xlu0 %v1086, 8
        %v1100 = vpop.permute.xlu0 %1099
        %v1105 = vsel %vm948, %v965, %v1094
        %v1106 = vsel %vm948, %v984, %v1096
        %v1107 = vsel %vm948, %v1003, %v1098
        %v1108 = vsel %vm948, %v1022, %v1100
        %v1109 = vsel %vm944, -1e+30, %v1105
        %v1110 = vsel %vm945, -1e+30, %v1106
        %v1111 = vsel %vm946, -1e+30, %v1107
        %v1112 = vsel %vm947, -1e+30, %v1108
        %vm1113 = vcmask 130048
        %v1114 = vsel %vm1113, %v1109, -inf
        %1115 = vmax.xlane.f32.xlu0 %v1114
        %v1116 = vpop.xlane.xlu0 %1115
        %v1117 = vsel %vm1113, %v1110, -inf
        %1118 = vmax.xlane.f32.xlu0 %v1117
        %v1119 = vpop.xlane.xlu0 %1118
        %v1120 = vsel %vm1113, %v1111, -inf
        %1121 = vmax.xlane.f32.xlu0 %v1120
        %v1122 = vpop.xlane.xlu0 %1121
        %v1123 = vsel %vm1113, %v1112, -inf
        %1124 = vmax.xlane.f32.xlu0 %v1123
        %v1125 = vpop.xlane.xlu0 %1124
        %v1126 = vsub.f32 %v1109, %v1116
        %v1127 = vsub.f32 %v1110, %v1119
        %v1128 = vsub.f32 %v1111, %v1122
        %v1129 = vsub.f32 %v1112, %v1125
        %v1130 = vmul.f32 %v1126, 1.442695
        %v1131 = vpow.pop %v1130
        %v1132 = vmul.f32 %v1127, 1.442695
        %v1133 = vpow.pop %v1132
        %v1134 = vmul.f32 %v1128, 1.442695
        %v1135 = vpow.pop %v1134
        %v1136 = vmul.f32 %v1129, 1.442695
        %v1137 = vpow.pop %v1136
        %v1138 = vsel %vm1113, %v1131, 0.0
        %1139 = vadd.xlane.f32.xlu0 %v1138
        %v1140 = vpop.xlane.xlu0 %1139
        %v1141 = vsel %vm1113, %v1133, 0.0
        %1142 = vadd.xlane.f32.xlu0 %v1141
        %v1143 = vpop.xlane.xlu0 %1142
        %v1144 = vsel %vm1113, %v1135, 0.0
        %1145 = vadd.xlane.f32.xlu0 %v1144
        %v1146 = vpop.xlane.xlu0 %1145
        %v1147 = vsel %vm1113, %v1137, 0.0
        %1148 = vadd.xlane.f32.xlu0 %v1147
        %v1149 = vpop.xlane.xlu0 %1148
        %v1150 = vrcp.pop %v1140
        %v1151 = vmul.f32 %v1140, %v1150
        %v1152 = vsub.f32 1.0, %v1151
        %v1153 = vmul.f32 %v1150, %v1152
        %v1154 = vadd.f32 %v1150, %v1153
        %vm1155 = vweird.f32 %v1140
        %vm1156 = vweird.f32 %v1150
        %vm1157 = vmor %vm1155, %vm1156
        %v1158 = vsel %vm1157, %v1150, %v1154
        %v1159 = vand.u32 2147483647, %v1140
        %vm1160 = vcmp.eq.f32.partialorder %v1159, 8.507059e+37
        %v1161 = vand.u32 %v1140, 2147483648
        %v1162 = vor.u32 1.1754944e-38, %v1161
        %v1163 = vsel %vm1160, %v1162, %v1158
        %v1164 = vrcp.pop %v1143
        %v1165 = vmul.f32 %v1143, %v1164
        %v1166 = vsub.f32 1.0, %v1165
        %v1167 = vmul.f32 %v1164, %v1166
        %v1168 = vadd.f32 %v1164, %v1167
        %vm1169 = vweird.f32 %v1143
        %vm1170 = vweird.f32 %v1164
        %vm1171 = vmor %vm1169, %vm1170
        %v1172 = vsel %vm1171, %v1164, %v1168
        %v1173 = vand.u32 2147483647, %v1143
        %vm1174 = vcmp.eq.f32.partialorder %v1173, 8.507059e+37
        %v1175 = vand.u32 %v1143, 2147483648
        %v1176 = vor.u32 1.1754944e-38, %v1175
        %v1177 = vsel %vm1174, %v1176, %v1172
        %v1178 = vrcp.pop %v1146
        %v1179 = vmul.f32 %v1146, %v1178
        %v1180 = vsub.f32 1.0, %v1179
        %v1181 = vmul.f32 %v1178, %v1180
        %v1182 = vadd.f32 %v1178, %v1181
        %vm1183 = vweird.f32 %v1146
        %vm1184 = vweird.f32 %v1178
        %vm1185 = vmor %vm1183, %vm1184
        %v1186 = vsel %vm1185, %v1178, %v1182
        %v1187 = vand.u32 2147483647, %v1146
        %vm1188 = vcmp.eq.f32.partialorder %v1187, 8.507059e+37
        %v1189 = vand.u32 %v1146, 2147483648
        %v1190 = vor.u32 1.1754944e-38, %v1189
        %v1191 = vsel %vm1188, %v1190, %v1186
        %v1192 = vrcp.pop %v1149
        %v1193 = vmul.f32 %v1149, %v1192
        %v1194 = vsub.f32 1.0, %v1193
        %v1195 = vmul.f32 %v1192, %v1194
        %v1196 = vadd.f32 %v1192, %v1195
        %vm1197 = vweird.f32 %v1149
        %vm1198 = vweird.f32 %v1192
        %vm1199 = vmor %vm1197, %vm1198
        %v1200 = vsel %vm1199, %v1192, %v1196
        %v1201 = vand.u32 2147483647, %v1149
        %vm1202 = vcmp.eq.f32.partialorder %v1201, 8.507059e+37
        %v1203 = vand.u32 %v1149, 2147483648
        %v1204 = vor.u32 1.1754944e-38, %v1203
        %v1205 = vsel %vm1202, %v1204, %v1200
        %v1206 = vmul.f32 %v1131, %v1163
        %v1207 = vmul.f32 %v1133, %v1177
        %v1208 = vmul.f32 %v1135, %v1191
        %v1209 = vmul.f32 %v1137, %v1205
        %v1210 = vadd.f32 %v1206, 0.0
        %v1211 = vadd.f32 %v1207, 0.0
        %v1212 = vadd.f32 %v1208, 0.0
        %v1213 = vadd.f32 %v1209, 0.0
        %v1214 = vpack.c.bf16 %v1206, %v1206
        %v1215 = vpack.c.bf16 %v1207, %v1207
        %v1216 = vpack.c.bf16 %v1208, %v1208
        %v1217 = vpack.c.bf16 %v1209, %v1209
        %v1219 = vunpack.c.l.b16 %v1214
        %v1220 = vpack.c.b16 %v1219, %v1219
        %1221 = vrot.lane.b32.xlu0 %v1220, 120
        %v1222 = vpop.permute.xlu0 %1221
        %v1224 = vunpack.c.l.b16 %v836
        %v1225 = vpack.c.b16 %v1224, %v1224
        %1226 = vrot.lane.b32.xlu0 %v1225, 120
        %v1227 = vpop.permute.xlu0 %1226
        %v1229 = vsel %vm948, %v1222, 0
        %vm1231 = vcmask 1043456
        %v1233 = vsel %vm1231, %v1227, 0
        %1235 = vmatpush.bf16.msra.mxu0 0
        %1236 = vmatpush.bf16.msra.mxu0 0
        %1237 = vmatpush.bf16.msra.mxu0 0
        %1238 = vmatpush.bf16.msra.mxu0 0
        %1239 = vmatpush.bf16.msra.mxu0 0
        %1240 = vmatpush.bf16.msra.mxu0 0
        %1241 = vmatpush.bf16.msra.mxu0 0
        %1242 = vmatpush.bf16.msra.mxu0 %v1233
        %1243 = vmatmul.bf16.gmra.mxu0 %v1229
        %v1244 = vpop.f32.mrf.mxu0
        %v1245 = vadd.f32 0.0, %v1244
        %v1246 = vpop.f32.mrf.mxu0
        %1247 = vdwg.mxu0
        %v1249 = vunpack.c.l.b16 %v1215
        %v1250 = vpack.c.b16 %v1249, %v1249
        %1251 = vrot.lane.b32.xlu0 %v1250, 120
        %v1252 = vpop.permute.xlu0 %1251
        %v1254 = vunpack.c.l.b16 %v837
        %v1255 = vpack.c.b16 %v1254, %v1254
        %1256 = vrot.lane.b32.xlu0 %v1255, 120
        %v1257 = vpop.permute.xlu0 %1256
        %v1259 = vsel %vm948, %v1252, 0
        %v1262 = vsel %vm1231, %v1257, 0
        %1264 = vmatpush.bf16.msra.mxu0 0
        %1265 = vmatpush.bf16.msra.mxu0 0
        %1266 = vmatpush.bf16.msra.mxu0 0
        %1267 = vmatpush.bf16.msra.mxu0 0
        %1268 = vmatpush.bf16.msra.mxu0 0
        %1269 = vmatpush.bf16.msra.mxu0 0
        %1270 = vmatpush.bf16.msra.mxu0 0
        %1271 = vmatpush.bf16.msra.mxu0 %v1262
        %1272 = vmatmul.bf16.gmra.mxu0 %v1259
        %v1273 = vpop.f32.mrf.mxu0
        %v1274 = vadd.f32 0.0, %v1273
        %v1275 = vpop.f32.mrf.mxu0
        %1276 = vdwg.mxu0
        %v1278 = vunpack.c.l.b16 %v1216
        %v1279 = vpack.c.b16 %v1278, %v1278
        %1280 = vrot.lane.b32.xlu0 %v1279, 120
        %v1281 = vpop.permute.xlu0 %1280
        %v1283 = vunpack.c.l.b16 %v838
        %v1284 = vpack.c.b16 %v1283, %v1283
        %1285 = vrot.lane.b32.xlu0 %v1284, 120
        %v1286 = vpop.permute.xlu0 %1285
        %v1288 = vsel %vm948, %v1281, 0
        %v1291 = vsel %vm1231, %v1286, 0
        %1293 = vmatpush.bf16.msra.mxu0 0
        %1294 = vmatpush.bf16.msra.mxu0 0
        %1295 = vmatpush.bf16.msra.mxu0 0
        %1296 = vmatpush.bf16.msra.mxu0 0
        %1297 = vmatpush.bf16.msra.mxu0 0
        %1298 = vmatpush.bf16.msra.mxu0 0
        %1299 = vmatpush.bf16.msra.mxu0 0
        %1300 = vmatpush.bf16.msra.mxu0 %v1291
        %1301 = vmatmul.bf16.gmra.mxu0 %v1288
        %v1302 = vpop.f32.mrf.mxu0
        %v1303 = vadd.f32 0.0, %v1302
        %v1304 = vpop.f32.mrf.mxu0
        %1305 = vdwg.mxu0
        %v1307 = vunpack.c.l.b16 %v1217
        %v1308 = vpack.c.b16 %v1307, %v1307
        %1309 = vrot.lane.b32.xlu0 %v1308, 120
        %v1310 = vpop.permute.xlu0 %1309
        %v1312 = vunpack.c.l.b16 %v839
        %v1313 = vpack.c.b16 %v1312, %v1312
        %1314 = vrot.lane.b32.xlu0 %v1313, 120
        %v1315 = vpop.permute.xlu0 %1314
        %v1317 = vsel %vm948, %v1310, 0
        %v1320 = vsel %vm1231, %v1315, 0
        %1322 = vmatpush.bf16.msra.mxu0 0
        %1323 = vmatpush.bf16.msra.mxu0 0
        %1324 = vmatpush.bf16.msra.mxu0 0
        %1325 = vmatpush.bf16.msra.mxu0 0
        %1326 = vmatpush.bf16.msra.mxu0 0
        %1327 = vmatpush.bf16.msra.mxu0 0
        %1328 = vmatpush.bf16.msra.mxu0 0
        %1329 = vmatpush.bf16.msra.mxu0 %v1320
        %1330 = vmatmul.bf16.gmra.mxu0 %v1317
        %v1331 = vpop.f32.mrf.mxu0
        %v1332 = vadd.f32 0.0, %v1331
        %v1333 = vpop.f32.mrf.mxu0
        %1334 = vdwg.mxu0
        %v1336 = vunpack.c.l.b16 %v856
        %v1337 = vpack.c.b16 %v1336, %v1336
        %1338 = vrot.lane.b32.xlu0 %v1337, 120
        %v1339 = vpop.permute.xlu0 %1338
        %v1341 = vsel %vm948, %v1214, 0
        %v1344 = vsel %vm1231, %v1339, 0
        %1346 = vmatpush.bf16.msra.mxu0 0
        %1347 = vmatpush.bf16.msra.mxu0 0
        %1348 = vmatpush.bf16.msra.mxu0 0
        %1349 = vmatpush.bf16.msra.mxu0 0
        %1350 = vmatpush.bf16.msra.mxu0 0
        %1351 = vmatpush.bf16.msra.mxu0 0
        %1352 = vmatpush.bf16.msra.mxu0 0
        %1353 = vmatpush.bf16.msra.mxu0 %v1344
        %1354 = vmatmul.bf16.gmra.mxu0 %v1341
        %v1355 = vpop.f32.mrf.mxu0
        %v1356 = vadd.f32 %v1245, %v1355
        %v1357 = vpop.f32.mrf.mxu0
        %1358 = vdwg.mxu0
        %v1360 = vunpack.c.l.b16 %v860
        %v1361 = vpack.c.b16 %v1360, %v1360
        %1362 = vrot.lane.b32.xlu0 %v1361, 120
        %v1363 = vpop.permute.xlu0 %1362
        %v1365 = vsel %vm948, %v1215, 0
        %v1368 = vsel %vm1231, %v1363, 0
        %1370 = vmatpush.bf16.msra.mxu0 0
        %1371 = vmatpush.bf16.msra.mxu0 0
        %1372 = vmatpush.bf16.msra.mxu0 0
        %1373 = vmatpush.bf16.msra.mxu0 0
        %1374 = vmatpush.bf16.msra.mxu0 0
        %1375 = vmatpush.bf16.msra.mxu0 0
        %1376 = vmatpush.bf16.msra.mxu0 0
        %1377 = vmatpush.bf16.msra.mxu0 %v1368
        %1378 = vmatmul.bf16.gmra.mxu0 %v1365
        %v1379 = vpop.f32.mrf.mxu0
        %v1380 = vadd.f32 %v1274, %v1379
        %v1381 = vpop.f32.mrf.mxu0
        %1382 = vdwg.mxu0
        %v1384 = vunpack.c.l.b16 %v864
        %v1385 = vpack.c.b16 %v1384, %v1384
        %1386 = vrot.lane.b32.xlu0 %v1385, 120
        %v1387 = vpop.permute.xlu0 %1386
        %v1389 = vsel %vm948, %v1216, 0
        %v1392 = vsel %vm1231, %v1387, 0
        %1394 = vmatpush.bf16.msra.mxu0 0
        %1395 = vmatpush.bf16.msra.mxu0 0
        %1396 = vmatpush.bf16.msra.mxu0 0
        %1397 = vmatpush.bf16.msra.mxu0 0
        %1398 = vmatpush.bf16.msra.mxu0 0
        %1399 = vmatpush.bf16.msra.mxu0 0
        %1400 = vmatpush.bf16.msra.mxu0 0
        %1401 = vmatpush.bf16.msra.mxu0 %v1392
        %1402 = vmatmul.bf16.gmra.mxu0 %v1389
        %v1403 = vpop.f32.mrf.mxu0
        %v1404 = vadd.f32 %v1303, %v1403
        %v1405 = vpop.f32.mrf.mxu0
        %1406 = vdwg.mxu0
        %v1408 = vunpack.c.l.b16 %v868
        %v1409 = vpack.c.b16 %v1408, %v1408
        %1410 = vrot.lane.b32.xlu0 %v1409, 120
        %v1411 = vpop.permute.xlu0 %1410
        %v1413 = vsel %vm948, %v1217, 0
        %v1416 = vsel %vm1231, %v1411, 0
        %1418 = vmatpush.bf16.msra.mxu0 0
        %1419 = vmatpush.bf16.msra.mxu0 0
        %1420 = vmatpush.bf16.msra.mxu0 0
        %1421 = vmatpush.bf16.msra.mxu0 0
        %1422 = vmatpush.bf16.msra.mxu0 0
        %1423 = vmatpush.bf16.msra.mxu0 0
        %1424 = vmatpush.bf16.msra.mxu0 0
        %1425 = vmatpush.bf16.msra.mxu0 %v1416
        %1426 = vmatmul.bf16.gmra.mxu0 %v1413
        %v1427 = vpop.f32.mrf.mxu0
        %v1428 = vadd.f32 %v1332, %v1427
        %v1429 = vpop.f32.mrf.mxu0
        %1430 = vdwg.mxu0
        %v1432 = vunpack.c.l.b16 %v832
        %v1433 = vpack.c.b16 %v1432, %v1432
        %1434 = vrot.lane.b32.xlu0 %v1433, 120
        %v1435 = vpop.permute.xlu0 %1434
        %v1437 = vsel %vm948, %v1435, 0
        %v1440 = vsel %vm948, %v857, 0
        %1442 = vmatpush.bf16.xpose.msra.mxu0 0
        %1443 = vmatpush.bf16.xpose.msra.mxu0 0
        %1444 = vmatpush.bf16.xpose.msra.mxu0 0
        %1445 = vmatpush.bf16.xpose.msra.mxu0 0
        %1446 = vmatpush.bf16.xpose.msra.mxu0 0
        %1447 = vmatpush.bf16.xpose.msra.mxu0 0
        %1448 = vmatpush.bf16.xpose.msra.mxu0 0
        %1449 = vmatpush.bf16.xpose.msra.mxu0 %v1440
        %1450 = vmatmul.bf16.gmra.mxu0 %v1437
        %v1451 = vpop.f32.mrf.mxu0
        %v1452 = vadd.f32 0.0, %v1451
        %v1453 = vpop.f32.mrf.mxu0
        %1454 = vdwg.mxu0
        %v1456 = vunpack.c.l.b16 %v833
        %v1457 = vpack.c.b16 %v1456, %v1456
        %1458 = vrot.lane.b32.xlu0 %v1457, 120
        %v1459 = vpop.permute.xlu0 %1458
        %v1461 = vsel %vm948, %v1459, 0
        %v1464 = vsel %vm948, %v861, 0
        %1466 = vmatpush.bf16.xpose.msra.mxu0 0
        %1467 = vmatpush.bf16.xpose.msra.mxu0 0
        %1468 = vmatpush.bf16.xpose.msra.mxu0 0
        %1469 = vmatpush.bf16.xpose.msra.mxu0 0
        %1470 = vmatpush.bf16.xpose.msra.mxu0 0
        %1471 = vmatpush.bf16.xpose.msra.mxu0 0
        %1472 = vmatpush.bf16.xpose.msra.mxu0 0
        %1473 = vmatpush.bf16.xpose.msra.mxu0 %v1464
        %1474 = vmatmul.bf16.gmra.mxu0 %v1461
        %v1475 = vpop.f32.mrf.mxu0
        %v1476 = vadd.f32 0.0, %v1475
        %v1477 = vpop.f32.mrf.mxu0
        %1478 = vdwg.mxu0
        %v1480 = vunpack.c.l.b16 %v834
        %v1481 = vpack.c.b16 %v1480, %v1480
        %1482 = vrot.lane.b32.xlu0 %v1481, 120
        %v1483 = vpop.permute.xlu0 %1482
        %v1485 = vsel %vm948, %v1483, 0
        %v1488 = vsel %vm948, %v865, 0
        %1490 = vmatpush.bf16.xpose.msra.mxu0 0
        %1491 = vmatpush.bf16.xpose.msra.mxu0 0
        %1492 = vmatpush.bf16.xpose.msra.mxu0 0
        %1493 = vmatpush.bf16.xpose.msra.mxu0 0
        %1494 = vmatpush.bf16.xpose.msra.mxu0 0
        %1495 = vmatpush.bf16.xpose.msra.mxu0 0
        %1496 = vmatpush.bf16.xpose.msra.mxu0 0
        %1497 = vmatpush.bf16.xpose.msra.mxu0 %v1488
        %1498 = vmatmul.bf16.gmra.mxu0 %v1485
        %v1499 = vpop.f32.mrf.mxu0
        %v1500 = vadd.f32 0.0, %v1499
        %v1501 = vpop.f32.mrf.mxu0
        %1502 = vdwg.mxu0
        %v1504 = vunpack.c.l.b16 %v835
        %v1505 = vpack.c.b16 %v1504, %v1504
        %1506 = vrot.lane.b32.xlu0 %v1505, 120
        %v1507 = vpop.permute.xlu0 %1506
        %v1509 = vsel %vm948, %v1507, 0
        %v1512 = vsel %vm948, %v869, 0
        %1514 = vmatpush.bf16.xpose.msra.mxu0 0
        %1515 = vmatpush.bf16.xpose.msra.mxu0 0
        %1516 = vmatpush.bf16.xpose.msra.mxu0 0
        %1517 = vmatpush.bf16.xpose.msra.mxu0 0
        %1518 = vmatpush.bf16.xpose.msra.mxu0 0
        %1519 = vmatpush.bf16.xpose.msra.mxu0 0
        %1520 = vmatpush.bf16.xpose.msra.mxu0 0
        %1521 = vmatpush.bf16.xpose.msra.mxu0 %v1512
        %1522 = vmatmul.bf16.gmra.mxu0 %v1509
        %v1523 = vpop.f32.mrf.mxu0
        %v1524 = vadd.f32 0.0, %v1523
        %v1525 = vpop.f32.mrf.mxu0
        %1526 = vdwg.mxu0
        %1527 = vrot.lane.b32.xlu0 %v1225, 112
        %v1528 = vpop.permute.xlu0 %1527
        %v1530 = vsel %vm948, %v1528, 0
        %1532 = vmatpush.bf16.xpose.msra.mxu0 0
        %1533 = vmatpush.bf16.xpose.msra.mxu0 0
        %1534 = vmatpush.bf16.xpose.msra.mxu0 0
        %1535 = vmatpush.bf16.xpose.msra.mxu0 0
        %1536 = vmatpush.bf16.xpose.msra.mxu0 0
        %1537 = vmatpush.bf16.xpose.msra.mxu0 0
        %1538 = vmatpush.bf16.xpose.msra.mxu0 0
        %1539 = vmatpush.bf16.xpose.msra.mxu0 %v1530
        %1540 = vmatmul.bf16.gmra.mxu0 %v1437
        %v1541 = vpop.f32.mrf.mxu0
        %v1542 = vadd.f32 0.0, %v1541
        %v1543 = vpop.f32.mrf.mxu0
        %1544 = vdwg.mxu0
        %1545 = vrot.lane.b32.xlu0 %v1255, 112
        %v1546 = vpop.permute.xlu0 %1545
        %v1548 = vsel %vm948, %v1546, 0
        %1550 = vmatpush.bf16.xpose.msra.mxu0 0
        %1551 = vmatpush.bf16.xpose.msra.mxu0 0
        %1552 = vmatpush.bf16.xpose.msra.mxu0 0
        %1553 = vmatpush.bf16.xpose.msra.mxu0 0
        %1554 = vmatpush.bf16.xpose.msra.mxu0 0
        %1555 = vmatpush.bf16.xpose.msra.mxu0 0
        %1556 = vmatpush.bf16.xpose.msra.mxu0 0
        %1557 = vmatpush.bf16.xpose.msra.mxu0 %v1548
        %1558 = vmatmul.bf16.gmra.mxu0 %v1461
        %v1559 = vpop.f32.mrf.mxu0
        %v1560 = vadd.f32 0.0, %v1559
        %v1561 = vpop.f32.mrf.mxu0
        %1562 = vdwg.mxu0
        %1563 = vrot.lane.b32.xlu0 %v1284, 112
        %v1564 = vpop.permute.xlu0 %1563
        %v1566 = vsel %vm948, %v1564, 0
        %1568 = vmatpush.bf16.xpose.msra.mxu0 0
        %1569 = vmatpush.bf16.xpose.msra.mxu0 0
        %1570 = vmatpush.bf16.xpose.msra.mxu0 0
        %1571 = vmatpush.bf16.xpose.msra.mxu0 0
        %1572 = vmatpush.bf16.xpose.msra.mxu0 0
        %1573 = vmatpush.bf16.xpose.msra.mxu0 0
        %1574 = vmatpush.bf16.xpose.msra.mxu0 0
        %1575 = vmatpush.bf16.xpose.msra.mxu0 %v1566
        %1576 = vmatmul.bf16.gmra.mxu0 %v1485
        %v1577 = vpop.f32.mrf.mxu0
        %v1578 = vadd.f32 0.0, %v1577
        %v1579 = vpop.f32.mrf.mxu0
        %1580 = vdwg.mxu0
        %1581 = vrot.lane.b32.xlu0 %v1313, 112
        %v1582 = vpop.permute.xlu0 %1581
        %v1584 = vsel %vm948, %v1582, 0
        %1586 = vmatpush.bf16.xpose.msra.mxu0 0
        %1587 = vmatpush.bf16.xpose.msra.mxu0 0
        %1588 = vmatpush.bf16.xpose.msra.mxu0 0
        %1589 = vmatpush.bf16.xpose.msra.mxu0 0
        %1590 = vmatpush.bf16.xpose.msra.mxu0 0
        %1591 = vmatpush.bf16.xpose.msra.mxu0 0
        %1592 = vmatpush.bf16.xpose.msra.mxu0 0
        %1593 = vmatpush.bf16.xpose.msra.mxu0 %v1584
        %1594 = vmatmul.bf16.gmra.mxu0 %v1509
        %v1595 = vpop.f32.mrf.mxu0
        %v1596 = vadd.f32 0.0, %v1595
        %v1597 = vpop.f32.mrf.mxu0
        %1598 = vdwg.mxu0
        %1603 = vrot.lane.b32.xlu0 %v1542, 8
        %v1604 = vpop.permute.xlu0 %1603
        %1605 = vrot.lane.b32.xlu0 %v1560, 8
        %v1606 = vpop.permute.xlu0 %1605
        %1607 = vrot.lane.b32.xlu0 %v1578, 8
        %v1608 = vpop.permute.xlu0 %1607
        %1609 = vrot.lane.b32.xlu0 %v1596, 8
        %v1610 = vpop.permute.xlu0 %1609
        %v1615 = vsel %vm948, %v1452, %v1604
        %v1616 = vsel %vm948, %v1476, %v1606
        %v1617 = vsel %vm948, %v1500, %v1608
        %v1618 = vsel %vm948, %v1524, %v1610
        %v1619 = vsel %vm944, -1e+30, %v1615
        %v1620 = vsel %vm945, -1e+30, %v1616
        %v1621 = vsel %vm946, -1e+30, %v1617
        %v1622 = vsel %vm947, -1e+30, %v1618
        %v1623 = vsel %vm1113, %v1619, -inf
        %1624 = vmax.xlane.f32.xlu0 %v1623
        %v1625 = vpop.xlane.xlu0 %1624
        %v1626 = vsel %vm1113, %v1620, -inf
        %1627 = vmax.xlane.f32.xlu0 %v1626
        %v1628 = vpop.xlane.xlu0 %1627
        %v1629 = vsel %vm1113, %v1621, -inf
        %1630 = vmax.xlane.f32.xlu0 %v1629
        %v1631 = vpop.xlane.xlu0 %1630
        %v1632 = vsel %vm1113, %v1622, -inf
        %1633 = vmax.xlane.f32.xlu0 %v1632
        %v1634 = vpop.xlane.xlu0 %1633
        %v1635 = vsub.f32 %v1619, %v1625
        %v1636 = vsub.f32 %v1620, %v1628
        %v1637 = vsub.f32 %v1621, %v1631
        %v1638 = vsub.f32 %v1622, %v1634
        %v1639 = vmul.f32 %v1635, 1.442695
        %v1640 = vpow.pop %v1639
        %v1641 = vmul.f32 %v1636, 1.442695
        %v1642 = vpow.pop %v1641
        %v1643 = vmul.f32 %v1637, 1.442695
        %v1644 = vpow.pop %v1643
        %v1645 = vmul.f32 %v1638, 1.442695
        %v1646 = vpow.pop %v1645
        %v1647 = vsel %vm1113, %v1640, 0.0
        %1648 = vadd.xlane.f32.xlu0 %v1647
        %v1649 = vpop.xlane.xlu0 %1648
        %v1650 = vsel %vm1113, %v1642, 0.0
        %1651 = vadd.xlane.f32.xlu0 %v1650
        %v1652 = vpop.xlane.xlu0 %1651
        %v1653 = vsel %vm1113, %v1644, 0.0
        %1654 = vadd.xlane.f32.xlu0 %v1653
        %v1655 = vpop.xlane.xlu0 %1654
        %v1656 = vsel %vm1113, %v1646, 0.0
        %1657 = vadd.xlane.f32.xlu0 %v1656
        %v1658 = vpop.xlane.xlu0 %1657
        %v1659 = vrcp.pop %v1649
        %v1660 = vmul.f32 %v1649, %v1659
        %v1661 = vsub.f32 1.0, %v1660
        %v1662 = vmul.f32 %v1659, %v1661
        %v1663 = vadd.f32 %v1659, %v1662
        %vm1664 = vweird.f32 %v1649
        %vm1665 = vweird.f32 %v1659
        %vm1666 = vmor %vm1664, %vm1665
        %v1667 = vsel %vm1666, %v1659, %v1663
        %v1668 = vand.u32 2147483647, %v1649
        %vm1669 = vcmp.eq.f32.partialorder %v1668, 8.507059e+37
        %v1670 = vand.u32 %v1649, 2147483648
        %v1671 = vor.u32 1.1754944e-38, %v1670
        %v1672 = vsel %vm1669, %v1671, %v1667
        %v1673 = vrcp.pop %v1652
        %v1674 = vmul.f32 %v1652, %v1673
        %v1675 = vsub.f32 1.0, %v1674
        %v1676 = vmul.f32 %v1673, %v1675
        %v1677 = vadd.f32 %v1673, %v1676
        %vm1678 = vweird.f32 %v1652
        %vm1679 = vweird.f32 %v1673
        %vm1680 = vmor %vm1678, %vm1679
        %v1681 = vsel %vm1680, %v1673, %v1677
        %v1682 = vand.u32 2147483647, %v1652
        %vm1683 = vcmp.eq.f32.partialorder %v1682, 8.507059e+37
        %v1684 = vand.u32 %v1652, 2147483648
        %v1685 = vor.u32 1.1754944e-38, %v1684
        %v1686 = vsel %vm1683, %v1685, %v1681
        %v1687 = vrcp.pop %v1655
        %v1688 = vmul.f32 %v1655, %v1687
        %v1689 = vsub.f32 1.0, %v1688
        %v1690 = vmul.f32 %v1687, %v1689
        %v1691 = vadd.f32 %v1687, %v1690
        %vm1692 = vweird.f32 %v1655
        %vm1693 = vweird.f32 %v1687
        %vm1694 = vmor %vm1692, %vm1693
        %v1695 = vsel %vm1694, %v1687, %v1691
        %v1696 = vand.u32 2147483647, %v1655
        %vm1697 = vcmp.eq.f32.partialorder %v1696, 8.507059e+37
        %v1698 = vand.u32 %v1655, 2147483648
        %v1699 = vor.u32 1.1754944e-38, %v1698
        %v1700 = vsel %vm1697, %v1699, %v1695
        %v1701 = vrcp.pop %v1658
        %v1702 = vmul.f32 %v1658, %v1701
        %v1703 = vsub.f32 1.0, %v1702
        %v1704 = vmul.f32 %v1701, %v1703
        %v1705 = vadd.f32 %v1701, %v1704
        %vm1706 = vweird.f32 %v1658
        %vm1707 = vweird.f32 %v1701
        %vm1708 = vmor %vm1706, %vm1707
        %v1709 = vsel %vm1708, %v1701, %v1705
        %v1710 = vand.u32 2147483647, %v1658
        %vm1711 = vcmp.eq.f32.partialorder %v1710, 8.507059e+37
        %v1712 = vand.u32 %v1658, 2147483648
        %v1713 = vor.u32 1.1754944e-38, %v1712
        %v1714 = vsel %vm1711, %v1713, %v1709
        %v1715 = vmul.f32 %v1640, %v1672
        %v1716 = vmul.f32 %v1642, %v1686
        %v1717 = vmul.f32 %v1644, %v1700
        %v1718 = vmul.f32 %v1646, %v1714
        %v1719 = vadd.f32 %v1210, %v1715
        %v1720 = vadd.f32 %v1211, %v1716
        %v1721 = vadd.f32 %v1212, %v1717
        %v1722 = vadd.f32 %v1213, %v1718
        %v1723 = vpack.c.bf16 %v1715, %v1715
        %v1724 = vpack.c.bf16 %v1716, %v1716
        %v1725 = vpack.c.bf16 %v1717, %v1717
        %v1726 = vpack.c.bf16 %v1718, %v1718
        %v1728 = vunpack.c.l.b16 %v1723
        %v1729 = vpack.c.b16 %v1728, %v1728
        %1730 = vrot.lane.b32.xlu0 %v1729, 120
        %v1731 = vpop.permute.xlu0 %1730
        %1732 = vrot.lane.b32.xlu0 %v1225, 104
        %v1733 = vpop.permute.xlu0 %1732
        %v1735 = vsel %vm948, %v1731, 0
        %v1738 = vsel %vm1231, %v1733, 0
        %1740 = vmatpush.bf16.msra.mxu0 0
        %1741 = vmatpush.bf16.msra.mxu0 0
        %1742 = vmatpush.bf16.msra.mxu0 0
        %1743 = vmatpush.bf16.msra.mxu0 0
        %1744 = vmatpush.bf16.msra.mxu0 0
        %1745 = vmatpush.bf16.msra.mxu0 0
        %1746 = vmatpush.bf16.msra.mxu0 0
        %1747 = vmatpush.bf16.msra.mxu0 %v1738
        %1748 = vmatmul.bf16.gmra.mxu0 %v1735
        %v1749 = vpop.f32.mrf.mxu0
        %v1750 = vadd.f32 0.0, %v1749
        %v1751 = vpop.f32.mrf.mxu0
        %1752 = vdwg.mxu0
        %v1754 = vunpack.c.l.b16 %v1724
        %v1755 = vpack.c.b16 %v1754, %v1754
        %1756 = vrot.lane.b32.xlu0 %v1755, 120
        %v1757 = vpop.permute.xlu0 %1756
        %1758 = vrot.lane.b32.xlu0 %v1255, 104
        %v1759 = vpop.permute.xlu0 %1758
        %v1761 = vsel %vm948, %v1757, 0
        %v1764 = vsel %vm1231, %v1759, 0
        %1766 = vmatpush.bf16.msra.mxu0 0
        %1767 = vmatpush.bf16.msra.mxu0 0
        %1768 = vmatpush.bf16.msra.mxu0 0
        %1769 = vmatpush.bf16.msra.mxu0 0
        %1770 = vmatpush.bf16.msra.mxu0 0
        %1771 = vmatpush.bf16.msra.mxu0 0
        %1772 = vmatpush.bf16.msra.mxu0 0
        %1773 = vmatpush.bf16.msra.mxu0 %v1764
        %1774 = vmatmul.bf16.gmra.mxu0 %v1761
        %v1775 = vpop.f32.mrf.mxu0
        %v1776 = vadd.f32 0.0, %v1775
        %v1777 = vpop.f32.mrf.mxu0
        %1778 = vdwg.mxu0
        %v1780 = vunpack.c.l.b16 %v1725
        %v1781 = vpack.c.b16 %v1780, %v1780
        %1782 = vrot.lane.b32.xlu0 %v1781, 120
        %v1783 = vpop.permute.xlu0 %1782
        %1784 = vrot.lane.b32.xlu0 %v1284, 104
        %v1785 = vpop.permute.xlu0 %1784
        %v1787 = vsel %vm948, %v1783, 0
        %v1790 = vsel %vm1231, %v1785, 0
        %1792 = vmatpush.bf16.msra.mxu0 0
        %1793 = vmatpush.bf16.msra.mxu0 0
        %1794 = vmatpush.bf16.msra.mxu0 0
        %1795 = vmatpush.bf16.msra.mxu0 0
        %1796 = vmatpush.bf16.msra.mxu0 0
        %1797 = vmatpush.bf16.msra.mxu0 0
        %1798 = vmatpush.bf16.msra.mxu0 0
        %1799 = vmatpush.bf16.msra.mxu0 %v1790
        %1800 = vmatmul.bf16.gmra.mxu0 %v1787
        %v1801 = vpop.f32.mrf.mxu0
        %v1802 = vadd.f32 0.0, %v1801
        %v1803 = vpop.f32.mrf.mxu0
        %1804 = vdwg.mxu0
        %v1806 = vunpack.c.l.b16 %v1726
        %v1807 = vpack.c.b16 %v1806, %v1806
        %1808 = vrot.lane.b32.xlu0 %v1807, 120
        %v1809 = vpop.permute.xlu0 %1808
        %1810 = vrot.lane.b32.xlu0 %v1313, 104
        %v1811 = vpop.permute.xlu0 %1810
        %v1813 = vsel %vm948, %v1809, 0
        %v1816 = vsel %vm1231, %v1811, 0
        %1818 = vmatpush.bf16.msra.mxu0 0
        %1819 = vmatpush.bf16.msra.mxu0 0
        %1820 = vmatpush.bf16.msra.mxu0 0
        %1821 = vmatpush.bf16.msra.mxu0 0
        %1822 = vmatpush.bf16.msra.mxu0 0
        %1823 = vmatpush.bf16.msra.mxu0 0
        %1824 = vmatpush.bf16.msra.mxu0 0
        %1825 = vmatpush.bf16.msra.mxu0 %v1816
        %1826 = vmatmul.bf16.gmra.mxu0 %v1813
        %v1827 = vpop.f32.mrf.mxu0
        %v1828 = vadd.f32 0.0, %v1827
        %v1829 = vpop.f32.mrf.mxu0
        %1830 = vdwg.mxu0
        %v1832 = vunpack.c.l.b16 %v857
        %v1833 = vpack.c.b16 %v1832, %v1832
        %1834 = vrot.lane.b32.xlu0 %v1833, 120
        %v1835 = vpop.permute.xlu0 %1834
        %v1837 = vsel %vm948, %v1723, 0
        %v1840 = vsel %vm1231, %v1835, 0
        %1842 = vmatpush.bf16.msra.mxu0 0
        %1843 = vmatpush.bf16.msra.mxu0 0
        %1844 = vmatpush.bf16.msra.mxu0 0
        %1845 = vmatpush.bf16.msra.mxu0 0
        %1846 = vmatpush.bf16.msra.mxu0 0
        %1847 = vmatpush.bf16.msra.mxu0 0
        %1848 = vmatpush.bf16.msra.mxu0 0
        %1849 = vmatpush.bf16.msra.mxu0 %v1840
        %1850 = vmatmul.bf16.gmra.mxu0 %v1837
        %v1851 = vpop.f32.mrf.mxu0
        %v1852 = vadd.f32 %v1750, %v1851
        %v1853 = vpop.f32.mrf.mxu0
        %1854 = vdwg.mxu0
        %v1856 = vunpack.c.l.b16 %v861
        %v1857 = vpack.c.b16 %v1856, %v1856
        %1858 = vrot.lane.b32.xlu0 %v1857, 120
        %v1859 = vpop.permute.xlu0 %1858
        %v1861 = vsel %vm948, %v1724, 0
        %v1864 = vsel %vm1231, %v1859, 0
        %1866 = vmatpush.bf16.msra.mxu0 0
        %1867 = vmatpush.bf16.msra.mxu0 0
        %1868 = vmatpush.bf16.msra.mxu0 0
        %1869 = vmatpush.bf16.msra.mxu0 0
        %1870 = vmatpush.bf16.msra.mxu0 0
        %1871 = vmatpush.bf16.msra.mxu0 0
        %1872 = vmatpush.bf16.msra.mxu0 0
        %1873 = vmatpush.bf16.msra.mxu0 %v1864
        %1874 = vmatmul.bf16.gmra.mxu0 %v1861
        %v1875 = vpop.f32.mrf.mxu0
        %v1876 = vadd.f32 %v1776, %v1875
        %v1877 = vpop.f32.mrf.mxu0
        %1878 = vdwg.mxu0
        %v1880 = vunpack.c.l.b16 %v865
        %v1881 = vpack.c.b16 %v1880, %v1880
        %1882 = vrot.lane.b32.xlu0 %v1881, 120
        %v1883 = vpop.permute.xlu0 %1882
        %v1885 = vsel %vm948, %v1725, 0
        %v1888 = vsel %vm1231, %v1883, 0
        %1890 = vmatpush.bf16.msra.mxu0 0
        %1891 = vmatpush.bf16.msra.mxu0 0
        %1892 = vmatpush.bf16.msra.mxu0 0
        %1893 = vmatpush.bf16.msra.mxu0 0
        %1894 = vmatpush.bf16.msra.mxu0 0
        %1895 = vmatpush.bf16.msra.mxu0 0
        %1896 = vmatpush.bf16.msra.mxu0 0
        %1897 = vmatpush.bf16.msra.mxu0 %v1888
        %1898 = vmatmul.bf16.gmra.mxu0 %v1885
        %v1899 = vpop.f32.mrf.mxu0
        %v1900 = vadd.f32 %v1802, %v1899
        %v1901 = vpop.f32.mrf.mxu0
        %1902 = vdwg.mxu0
        %v1904 = vunpack.c.l.b16 %v869
        %v1905 = vpack.c.b16 %v1904, %v1904
        %1906 = vrot.lane.b32.xlu0 %v1905, 120
        %v1907 = vpop.permute.xlu0 %1906
        %v1909 = vsel %vm948, %v1726, 0
        %v1912 = vsel %vm1231, %v1907, 0
        %1914 = vmatpush.bf16.msra.mxu0 0
        %1915 = vmatpush.bf16.msra.mxu0 0
        %1916 = vmatpush.bf16.msra.mxu0 0
        %1917 = vmatpush.bf16.msra.mxu0 0
        %1918 = vmatpush.bf16.msra.mxu0 0
        %1919 = vmatpush.bf16.msra.mxu0 0
        %1920 = vmatpush.bf16.msra.mxu0 0
        %1921 = vmatpush.bf16.msra.mxu0 %v1912
        %1922 = vmatmul.bf16.gmra.mxu0 %v1909
        %v1923 = vpop.f32.mrf.mxu0
        %v1924 = vadd.f32 %v1828, %v1923
        %v1925 = vpop.f32.mrf.mxu0
        %1926 = vdwg.mxu0
        %1927 = vrot.lane.b32.xlu0 %v1433, 112
        %v1928 = vpop.permute.xlu0 %1927
        %v1930 = vsel %vm948, %v1928, 0
        %v1933 = vsel %vm948, %v858, 0
        %1935 = vmatpush.bf16.xpose.msra.mxu0 0
        %1936 = vmatpush.bf16.xpose.msra.mxu0 0
        %1937 = vmatpush.bf16.xpose.msra.mxu0 0
        %1938 = vmatpush.bf16.xpose.msra.mxu0 0
        %1939 = vmatpush.bf16.xpose.msra.mxu0 0
        %1940 = vmatpush.bf16.xpose.msra.mxu0 0
        %1941 = vmatpush.bf16.xpose.msra.mxu0 0
        %1942 = vmatpush.bf16.xpose.msra.mxu0 %v1933
        %1943 = vmatmul.bf16.gmra.mxu0 %v1930
        %v1944 = vpop.f32.mrf.mxu0
        %v1945 = vadd.f32 0.0, %v1944
        %v1946 = vpop.f32.mrf.mxu0
        %1947 = vdwg.mxu0
        %1948 = vrot.lane.b32.xlu0 %v1457, 112
        %v1949 = vpop.permute.xlu0 %1948
        %v1951 = vsel %vm948, %v1949, 0
        %v1954 = vsel %vm948, %v862, 0
        %1956 = vmatpush.bf16.xpose.msra.mxu0 0
        %1957 = vmatpush.bf16.xpose.msra.mxu0 0
        %1958 = vmatpush.bf16.xpose.msra.mxu0 0
        %1959 = vmatpush.bf16.xpose.msra.mxu0 0
        %1960 = vmatpush.bf16.xpose.msra.mxu0 0
        %1961 = vmatpush.bf16.xpose.msra.mxu0 0
        %1962 = vmatpush.bf16.xpose.msra.mxu0 0
        %1963 = vmatpush.bf16.xpose.msra.mxu0 %v1954
        %1964 = vmatmul.bf16.gmra.mxu0 %v1951
        %v1965 = vpop.f32.mrf.mxu0
        %v1966 = vadd.f32 0.0, %v1965
        %v1967 = vpop.f32.mrf.mxu0
        %1968 = vdwg.mxu0
        %1969 = vrot.lane.b32.xlu0 %v1481, 112
        %v1970 = vpop.permute.xlu0 %1969
        %v1972 = vsel %vm948, %v1970, 0
        %v1975 = vsel %vm948, %v866, 0
        %1977 = vmatpush.bf16.xpose.msra.mxu0 0
        %1978 = vmatpush.bf16.xpose.msra.mxu0 0
        %1979 = vmatpush.bf16.xpose.msra.mxu0 0
        %1980 = vmatpush.bf16.xpose.msra.mxu0 0
        %1981 = vmatpush.bf16.xpose.msra.mxu0 0
        %1982 = vmatpush.bf16.xpose.msra.mxu0 0
        %1983 = vmatpush.bf16.xpose.msra.mxu0 0
        %1984 = vmatpush.bf16.xpose.msra.mxu0 %v1975
        %1985 = vmatmul.bf16.gmra.mxu0 %v1972
        %v1986 = vpop.f32.mrf.mxu0
        %v1987 = vadd.f32 0.0, %v1986
        %v1988 = vpop.f32.mrf.mxu0
        %1989 = vdwg.mxu0
        %1990 = vrot.lane.b32.xlu0 %v1505, 112
        %v1991 = vpop.permute.xlu0 %1990
        %v1993 = vsel %vm948, %v1991, 0
        %v1996 = vsel %vm948, %v870, 0
        %1998 = vmatpush.bf16.xpose.msra.mxu0 0
        %1999 = vmatpush.bf16.xpose.msra.mxu0 0
        %2000 = vmatpush.bf16.xpose.msra.mxu0 0
        %2001 = vmatpush.bf16.xpose.msra.mxu0 0
        %2002 = vmatpush.bf16.xpose.msra.mxu0 0
        %2003 = vmatpush.bf16.xpose.msra.mxu0 0
        %2004 = vmatpush.bf16.xpose.msra.mxu0 0
        %2005 = vmatpush.bf16.xpose.msra.mxu0 %v1996
        %2006 = vmatmul.bf16.gmra.mxu0 %v1993
        %v2007 = vpop.f32.mrf.mxu0
        %v2008 = vadd.f32 0.0, %v2007
        %v2009 = vpop.f32.mrf.mxu0
        %2010 = vdwg.mxu0
        %2011 = vrot.lane.b32.xlu0 %v1225, 96
        %v2012 = vpop.permute.xlu0 %2011
        %v2014 = vsel %vm948, %v2012, 0
        %2016 = vmatpush.bf16.xpose.msra.mxu0 0
        %2017 = vmatpush.bf16.xpose.msra.mxu0 0
        %2018 = vmatpush.bf16.xpose.msra.mxu0 0
        %2019 = vmatpush.bf16.xpose.msra.mxu0 0
        %2020 = vmatpush.bf16.xpose.msra.mxu0 0
        %2021 = vmatpush.bf16.xpose.msra.mxu0 0
        %2022 = vmatpush.bf16.xpose.msra.mxu0 0
        %2023 = vmatpush.bf16.xpose.msra.mxu0 %v2014
        %2024 = vmatmul.bf16.gmra.mxu0 %v1930
        %v2025 = vpop.f32.mrf.mxu0
        %v2026 = vadd.f32 0.0, %v2025
        %v2027 = vpop.f32.mrf.mxu0
        %2028 = vdwg.mxu0
        %2029 = vrot.lane.b32.xlu0 %v1255, 96
        %v2030 = vpop.permute.xlu0 %2029
        %v2032 = vsel %vm948, %v2030, 0
        %2034 = vmatpush.bf16.xpose.msra.mxu0 0
        %2035 = vmatpush.bf16.xpose.msra.mxu0 0
        %2036 = vmatpush.bf16.xpose.msra.mxu0 0
        %2037 = vmatpush.bf16.xpose.msra.mxu0 0
        %2038 = vmatpush.bf16.xpose.msra.mxu0 0
        %2039 = vmatpush.bf16.xpose.msra.mxu0 0
        %2040 = vmatpush.bf16.xpose.msra.mxu0 0
        %2041 = vmatpush.bf16.xpose.msra.mxu0 %v2032
        %2042 = vmatmul.bf16.gmra.mxu0 %v1951
        %v2043 = vpop.f32.mrf.mxu0
        %v2044 = vadd.f32 0.0, %v2043
        %v2045 = vpop.f32.mrf.mxu0
        %2046 = vdwg.mxu0
        %2047 = vrot.lane.b32.xlu0 %v1284, 96
        %v2048 = vpop.permute.xlu0 %2047
        %v2050 = vsel %vm948, %v2048, 0
        %2052 = vmatpush.bf16.xpose.msra.mxu0 0
        %2053 = vmatpush.bf16.xpose.msra.mxu0 0
        %2054 = vmatpush.bf16.xpose.msra.mxu0 0
        %2055 = vmatpush.bf16.xpose.msra.mxu0 0
        %2056 = vmatpush.bf16.xpose.msra.mxu0 0
        %2057 = vmatpush.bf16.xpose.msra.mxu0 0
        %2058 = vmatpush.bf16.xpose.msra.mxu0 0
        %2059 = vmatpush.bf16.xpose.msra.mxu0 %v2050
        %2060 = vmatmul.bf16.gmra.mxu0 %v1972
        %v2061 = vpop.f32.mrf.mxu0
        %v2062 = vadd.f32 0.0, %v2061
        %v2063 = vpop.f32.mrf.mxu0
        %2064 = vdwg.mxu0
        %2065 = vrot.lane.b32.xlu0 %v1313, 96
        %v2066 = vpop.permute.xlu0 %2065
        %v2068 = vsel %vm948, %v2066, 0
        %2070 = vmatpush.bf16.xpose.msra.mxu0 0
        %2071 = vmatpush.bf16.xpose.msra.mxu0 0
        %2072 = vmatpush.bf16.xpose.msra.mxu0 0
        %2073 = vmatpush.bf16.xpose.msra.mxu0 0
        %2074 = vmatpush.bf16.xpose.msra.mxu0 0
        %2075 = vmatpush.bf16.xpose.msra.mxu0 0
        %2076 = vmatpush.bf16.xpose.msra.mxu0 0
        %2077 = vmatpush.bf16.xpose.msra.mxu0 %v2068
        %2078 = vmatmul.bf16.gmra.mxu0 %v1993
        %v2079 = vpop.f32.mrf.mxu0
        %v2080 = vadd.f32 0.0, %v2079
        %v2081 = vpop.f32.mrf.mxu0
        %2082 = vdwg.mxu0
        %2087 = vrot.lane.b32.xlu0 %v2026, 8
        %v2088 = vpop.permute.xlu0 %2087
        %2089 = vrot.lane.b32.xlu0 %v2044, 8
        %v2090 = vpop.permute.xlu0 %2089
        %2091 = vrot.lane.b32.xlu0 %v2062, 8
        %v2092 = vpop.permute.xlu0 %2091
        %2093 = vrot.lane.b32.xlu0 %v2080, 8
        %v2094 = vpop.permute.xlu0 %2093
        %v2099 = vsel %vm948, %v1945, %v2088
        %v2100 = vsel %vm948, %v1966, %v2090
        %v2101 = vsel %vm948, %v1987, %v2092
        %v2102 = vsel %vm948, %v2008, %v2094
        %v2103 = vsel %vm944, -1e+30, %v2099
        %v2104 = vsel %vm945, -1e+30, %v2100
        %v2105 = vsel %vm946, -1e+30, %v2101
        %v2106 = vsel %vm947, -1e+30, %v2102
        %v2107 = vsel %vm1113, %v2103, -inf
        %2108 = vmax.xlane.f32.xlu0 %v2107
        %v2109 = vpop.xlane.xlu0 %2108
        %v2110 = vsel %vm1113, %v2104, -inf
        %2111 = vmax.xlane.f32.xlu0 %v2110
        %v2112 = vpop.xlane.xlu0 %2111
        %v2113 = vsel %vm1113, %v2105, -inf
        %2114 = vmax.xlane.f32.xlu0 %v2113
        %v2115 = vpop.xlane.xlu0 %2114
        %v2116 = vsel %vm1113, %v2106, -inf
        %2117 = vmax.xlane.f32.xlu0 %v2116
        %v2118 = vpop.xlane.xlu0 %2117
        %v2119 = vsub.f32 %v2103, %v2109
        %v2120 = vsub.f32 %v2104, %v2112
        %v2121 = vsub.f32 %v2105, %v2115
        %v2122 = vsub.f32 %v2106, %v2118
        %v2123 = vmul.f32 %v2119, 1.442695
        %v2124 = vpow.pop %v2123
        %v2125 = vmul.f32 %v2120, 1.442695
        %v2126 = vpow.pop %v2125
        %v2127 = vmul.f32 %v2121, 1.442695
        %v2128 = vpow.pop %v2127
        %v2129 = vmul.f32 %v2122, 1.442695
        %v2130 = vpow.pop %v2129
        %v2131 = vsel %vm1113, %v2124, 0.0
        %2132 = vadd.xlane.f32.xlu0 %v2131
        %v2133 = vpop.xlane.xlu0 %2132
        %v2134 = vsel %vm1113, %v2126, 0.0
        %2135 = vadd.xlane.f32.xlu0 %v2134
        %v2136 = vpop.xlane.xlu0 %2135
        %v2137 = vsel %vm1113, %v2128, 0.0
        %2138 = vadd.xlane.f32.xlu0 %v2137
        %v2139 = vpop.xlane.xlu0 %2138
        %v2140 = vsel %vm1113, %v2130, 0.0
        %2141 = vadd.xlane.f32.xlu0 %v2140
        %v2142 = vpop.xlane.xlu0 %2141
        %v2143 = vrcp.pop %v2133
        %v2144 = vmul.f32 %v2133, %v2143
        %v2145 = vsub.f32 1.0, %v2144
        %v2146 = vmul.f32 %v2143, %v2145
        %v2147 = vadd.f32 %v2143, %v2146
        %vm2148 = vweird.f32 %v2133
        %vm2149 = vweird.f32 %v2143
        %vm2150 = vmor %vm2148, %vm2149
        %v2151 = vsel %vm2150, %v2143, %v2147
        %v2152 = vand.u32 2147483647, %v2133
        %vm2153 = vcmp.eq.f32.partialorder %v2152, 8.507059e+37
        %v2154 = vand.u32 %v2133, 2147483648
        %v2155 = vor.u32 1.1754944e-38, %v2154
        %v2156 = vsel %vm2153, %v2155, %v2151
        %v2157 = vrcp.pop %v2136
        %v2158 = vmul.f32 %v2136, %v2157
        %v2159 = vsub.f32 1.0, %v2158
        %v2160 = vmul.f32 %v2157, %v2159
        %v2161 = vadd.f32 %v2157, %v2160
        %vm2162 = vweird.f32 %v2136
        %vm2163 = vweird.f32 %v2157
        %vm2164 = vmor %vm2162, %vm2163
        %v2165 = vsel %vm2164, %v2157, %v2161
        %v2166 = vand.u32 2147483647, %v2136
        %vm2167 = vcmp.eq.f32.partialorder %v2166, 8.507059e+37
        %v2168 = vand.u32 %v2136, 2147483648
        %v2169 = vor.u32 1.1754944e-38, %v2168
        %v2170 = vsel %vm2167, %v2169, %v2165
        %v2171 = vrcp.pop %v2139
        %v2172 = vmul.f32 %v2139, %v2171
        %v2173 = vsub.f32 1.0, %v2172
        %v2174 = vmul.f32 %v2171, %v2173
        %v2175 = vadd.f32 %v2171, %v2174
        %vm2176 = vweird.f32 %v2139
        %vm2177 = vweird.f32 %v2171
        %vm2178 = vmor %vm2176, %vm2177
        %v2179 = vsel %vm2178, %v2171, %v2175
        %v2180 = vand.u32 2147483647, %v2139
        %vm2181 = vcmp.eq.f32.partialorder %v2180, 8.507059e+37
        %v2182 = vand.u32 %v2139, 2147483648
        %v2183 = vor.u32 1.1754944e-38, %v2182
        %v2184 = vsel %vm2181, %v2183, %v2179
        %v2185 = vrcp.pop %v2142
        %v2186 = vmul.f32 %v2142, %v2185
        %v2187 = vsub.f32 1.0, %v2186
        %v2188 = vmul.f32 %v2185, %v2187
        %v2189 = vadd.f32 %v2185, %v2188
        %vm2190 = vweird.f32 %v2142
        %vm2191 = vweird.f32 %v2185
        %vm2192 = vmor %vm2190, %vm2191
        %v2193 = vsel %vm2192, %v2185, %v2189
        %v2194 = vand.u32 2147483647, %v2142
        %vm2195 = vcmp.eq.f32.partialorder %v2194, 8.507059e+37
        %v2196 = vand.u32 %v2142, 2147483648
        %v2197 = vor.u32 1.1754944e-38, %v2196
        %v2198 = vsel %vm2195, %v2197, %v2193
        %v2199 = vmul.f32 %v2124, %v2156
        %v2200 = vmul.f32 %v2126, %v2170
        %v2201 = vmul.f32 %v2128, %v2184
        %v2202 = vmul.f32 %v2130, %v2198
        %v2203 = vadd.f32 %v1719, %v2199
        %v2204 = vadd.f32 %v1720, %v2200
        %v2205 = vadd.f32 %v1721, %v2201
        %v2206 = vadd.f32 %v1722, %v2202
        %v2207 = vpack.c.bf16 %v2199, %v2199
        %v2208 = vpack.c.bf16 %v2200, %v2200
        %v2209 = vpack.c.bf16 %v2201, %v2201
        %v2210 = vpack.c.bf16 %v2202, %v2202
        %v2212 = vunpack.c.l.b16 %v2207
        %v2213 = vpack.c.b16 %v2212, %v2212
        %2214 = vrot.lane.b32.xlu0 %v2213, 120
        %v2215 = vpop.permute.xlu0 %2214
        %2216 = vrot.lane.b32.xlu0 %v1225, 88
        %v2217 = vpop.permute.xlu0 %2216
        %v2219 = vsel %vm948, %v2215, 0
        %v2222 = vsel %vm1231, %v2217, 0
        %2224 = vmatpush.bf16.msra.mxu0 0
        %2225 = vmatpush.bf16.msra.mxu0 0
        %2226 = vmatpush.bf16.msra.mxu0 0
        %2227 = vmatpush.bf16.msra.mxu0 0
        %2228 = vmatpush.bf16.msra.mxu0 0
        %2229 = vmatpush.bf16.msra.mxu0 0
        %2230 = vmatpush.bf16.msra.mxu0 0
        %2231 = vmatpush.bf16.msra.mxu0 %v2222
        %2232 = vmatmul.bf16.gmra.mxu0 %v2219
        %v2233 = vpop.f32.mrf.mxu0
        %v2234 = vadd.f32 0.0, %v2233
        %v2235 = vpop.f32.mrf.mxu0
        %2236 = vdwg.mxu0
        %v2238 = vunpack.c.l.b16 %v2208
        %v2239 = vpack.c.b16 %v2238, %v2238
        %2240 = vrot.lane.b32.xlu0 %v2239, 120
        %v2241 = vpop.permute.xlu0 %2240
        %2242 = vrot.lane.b32.xlu0 %v1255, 88
        %v2243 = vpop.permute.xlu0 %2242
        %v2245 = vsel %vm948, %v2241, 0
        %v2248 = vsel %vm1231, %v2243, 0
        %2250 = vmatpush.bf16.msra.mxu0 0
        %2251 = vmatpush.bf16.msra.mxu0 0
        %2252 = vmatpush.bf16.msra.mxu0 0
        %2253 = vmatpush.bf16.msra.mxu0 0
        %2254 = vmatpush.bf16.msra.mxu0 0
        %2255 = vmatpush.bf16.msra.mxu0 0
        %2256 = vmatpush.bf16.msra.mxu0 0
        %2257 = vmatpush.bf16.msra.mxu0 %v2248
        %2258 = vmatmul.bf16.gmra.mxu0 %v2245
        %v2259 = vpop.f32.mrf.mxu0
        %v2260 = vadd.f32 0.0, %v2259
        %v2261 = vpop.f32.mrf.mxu0
        %2262 = vdwg.mxu0
        %v2264 = vunpack.c.l.b16 %v2209
        %v2265 = vpack.c.b16 %v2264, %v2264
        %2266 = vrot.lane.b32.xlu0 %v2265, 120
        %v2267 = vpop.permute.xlu0 %2266
        %2268 = vrot.lane.b32.xlu0 %v1284, 88
        %v2269 = vpop.permute.xlu0 %2268
        %v2271 = vsel %vm948, %v2267, 0
        %v2274 = vsel %vm1231, %v2269, 0
        %2276 = vmatpush.bf16.msra.mxu0 0
        %2277 = vmatpush.bf16.msra.mxu0 0
        %2278 = vmatpush.bf16.msra.mxu0 0
        %2279 = vmatpush.bf16.msra.mxu0 0
        %2280 = vmatpush.bf16.msra.mxu0 0
        %2281 = vmatpush.bf16.msra.mxu0 0
        %2282 = vmatpush.bf16.msra.mxu0 0
        %2283 = vmatpush.bf16.msra.mxu0 %v2274
        %2284 = vmatmul.bf16.gmra.mxu0 %v2271
        %v2285 = vpop.f32.mrf.mxu0
        %v2286 = vadd.f32 0.0, %v2285
        %v2287 = vpop.f32.mrf.mxu0
        %2288 = vdwg.mxu0
        %v2290 = vunpack.c.l.b16 %v2210
        %v2291 = vpack.c.b16 %v2290, %v2290
        %2292 = vrot.lane.b32.xlu0 %v2291, 120
        %v2293 = vpop.permute.xlu0 %2292
        %2294 = vrot.lane.b32.xlu0 %v1313, 88
        %v2295 = vpop.permute.xlu0 %2294
        %v2297 = vsel %vm948, %v2293, 0
        %v2300 = vsel %vm1231, %v2295, 0
        %2302 = vmatpush.bf16.msra.mxu0 0
        %2303 = vmatpush.bf16.msra.mxu0 0
        %2304 = vmatpush.bf16.msra.mxu0 0
        %2305 = vmatpush.bf16.msra.mxu0 0
        %2306 = vmatpush.bf16.msra.mxu0 0
        %2307 = vmatpush.bf16.msra.mxu0 0
        %2308 = vmatpush.bf16.msra.mxu0 0
        %2309 = vmatpush.bf16.msra.mxu0 %v2300
        %2310 = vmatmul.bf16.gmra.mxu0 %v2297
        %v2311 = vpop.f32.mrf.mxu0
        %v2312 = vadd.f32 0.0, %v2311
        %v2313 = vpop.f32.mrf.mxu0
        %2314 = vdwg.mxu0
        %v2316 = vunpack.c.l.b16 %v858
        %v2317 = vpack.c.b16 %v2316, %v2316
        %2318 = vrot.lane.b32.xlu0 %v2317, 120
        %v2319 = vpop.permute.xlu0 %2318
        %v2321 = vsel %vm948, %v2207, 0
        %v2324 = vsel %vm1231, %v2319, 0
        %2326 = vmatpush.bf16.msra.mxu0 0
        %2327 = vmatpush.bf16.msra.mxu0 0
        %2328 = vmatpush.bf16.msra.mxu0 0
        %2329 = vmatpush.bf16.msra.mxu0 0
        %2330 = vmatpush.bf16.msra.mxu0 0
        %2331 = vmatpush.bf16.msra.mxu0 0
        %2332 = vmatpush.bf16.msra.mxu0 0
        %2333 = vmatpush.bf16.msra.mxu0 %v2324
        %2334 = vmatmul.bf16.gmra.mxu0 %v2321
        %v2335 = vpop.f32.mrf.mxu0
        %v2336 = vadd.f32 %v2234, %v2335
        %v2337 = vpop.f32.mrf.mxu0
        %2338 = vdwg.mxu0
        %v2340 = vunpack.c.l.b16 %v862
        %v2341 = vpack.c.b16 %v2340, %v2340
        %2342 = vrot.lane.b32.xlu0 %v2341, 120
        %v2343 = vpop.permute.xlu0 %2342
        %v2345 = vsel %vm948, %v2208, 0
        %v2348 = vsel %vm1231, %v2343, 0
        %2350 = vmatpush.bf16.msra.mxu0 0
        %2351 = vmatpush.bf16.msra.mxu0 0
        %2352 = vmatpush.bf16.msra.mxu0 0
        %2353 = vmatpush.bf16.msra.mxu0 0
        %2354 = vmatpush.bf16.msra.mxu0 0
        %2355 = vmatpush.bf16.msra.mxu0 0
        %2356 = vmatpush.bf16.msra.mxu0 0
        %2357 = vmatpush.bf16.msra.mxu0 %v2348
        %2358 = vmatmul.bf16.gmra.mxu0 %v2345
        %v2359 = vpop.f32.mrf.mxu0
        %v2360 = vadd.f32 %v2260, %v2359
        %v2361 = vpop.f32.mrf.mxu0
        %2362 = vdwg.mxu0
        %v2364 = vunpack.c.l.b16 %v866
        %v2365 = vpack.c.b16 %v2364, %v2364
        %2366 = vrot.lane.b32.xlu0 %v2365, 120
        %v2367 = vpop.permute.xlu0 %2366
        %v2369 = vsel %vm948, %v2209, 0
        %v2372 = vsel %vm1231, %v2367, 0
        %2374 = vmatpush.bf16.msra.mxu0 0
        %2375 = vmatpush.bf16.msra.mxu0 0
        %2376 = vmatpush.bf16.msra.mxu0 0
        %2377 = vmatpush.bf16.msra.mxu0 0
        %2378 = vmatpush.bf16.msra.mxu0 0
        %2379 = vmatpush.bf16.msra.mxu0 0
        %2380 = vmatpush.bf16.msra.mxu0 0
        %2381 = vmatpush.bf16.msra.mxu0 %v2372
        %2382 = vmatmul.bf16.gmra.mxu0 %v2369
        %v2383 = vpop.f32.mrf.mxu0
        %v2384 = vadd.f32 %v2286, %v2383
        %v2385 = vpop.f32.mrf.mxu0
        %2386 = vdwg.mxu0
        %v2388 = vunpack.c.l.b16 %v870
        %v2389 = vpack.c.b16 %v2388, %v2388
        %2390 = vrot.lane.b32.xlu0 %v2389, 120
        %v2391 = vpop.permute.xlu0 %2390
        %v2393 = vsel %vm948, %v2210, 0
        %v2396 = vsel %vm1231, %v2391, 0
        %2398 = vmatpush.bf16.msra.mxu0 0
        %2399 = vmatpush.bf16.msra.mxu0 0
        %2400 = vmatpush.bf16.msra.mxu0 0
        %2401 = vmatpush.bf16.msra.mxu0 0
        %2402 = vmatpush.bf16.msra.mxu0 0
        %2403 = vmatpush.bf16.msra.mxu0 0
        %2404 = vmatpush.bf16.msra.mxu0 0
        %2405 = vmatpush.bf16.msra.mxu0 %v2396
        %2406 = vmatmul.bf16.gmra.mxu0 %v2393
        %v2407 = vpop.f32.mrf.mxu0
        %v2408 = vadd.f32 %v2312, %v2407
        %v2409 = vpop.f32.mrf.mxu0
        %2410 = vdwg.mxu0
        %2411 = vrot.lane.b32.xlu0 %v1433, 104
        %v2412 = vpop.permute.xlu0 %2411
        %v2414 = vsel %vm948, %v2412, 0
        %v2417 = vsel %vm948, %v859, 0
        %2419 = vmatpush.bf16.xpose.msra.mxu0 0
        %2420 = vmatpush.bf16.xpose.msra.mxu0 0
        %2421 = vmatpush.bf16.xpose.msra.mxu0 0
        %2422 = vmatpush.bf16.xpose.msra.mxu0 0
        %2423 = vmatpush.bf16.xpose.msra.mxu0 0
        %2424 = vmatpush.bf16.xpose.msra.mxu0 0
        %2425 = vmatpush.bf16.xpose.msra.mxu0 0
        %2426 = vmatpush.bf16.xpose.msra.mxu0 %v2417
        %2427 = vmatmul.bf16.gmra.mxu0 %v2414
        %v2428 = vpop.f32.mrf.mxu0
        %v2429 = vadd.f32 0.0, %v2428
        %v2430 = vpop.f32.mrf.mxu0
        %2431 = vdwg.mxu0
        %2432 = vrot.lane.b32.xlu0 %v1457, 104
        %v2433 = vpop.permute.xlu0 %2432
        %v2435 = vsel %vm948, %v2433, 0
        %v2438 = vsel %vm948, %v863, 0
        %2440 = vmatpush.bf16.xpose.msra.mxu0 0
        %2441 = vmatpush.bf16.xpose.msra.mxu0 0
        %2442 = vmatpush.bf16.xpose.msra.mxu0 0
        %2443 = vmatpush.bf16.xpose.msra.mxu0 0
        %2444 = vmatpush.bf16.xpose.msra.mxu0 0
        %2445 = vmatpush.bf16.xpose.msra.mxu0 0
        %2446 = vmatpush.bf16.xpose.msra.mxu0 0
        %2447 = vmatpush.bf16.xpose.msra.mxu0 %v2438
        %2448 = vmatmul.bf16.gmra.mxu0 %v2435
        %v2449 = vpop.f32.mrf.mxu0
        %v2450 = vadd.f32 0.0, %v2449
        %v2451 = vpop.f32.mrf.mxu0
        %2452 = vdwg.mxu0
        %2453 = vrot.lane.b32.xlu0 %v1481, 104
        %v2454 = vpop.permute.xlu0 %2453
        %v2456 = vsel %vm948, %v2454, 0
        %v2459 = vsel %vm948, %v867, 0
        %2461 = vmatpush.bf16.xpose.msra.mxu0 0
        %2462 = vmatpush.bf16.xpose.msra.mxu0 0
        %2463 = vmatpush.bf16.xpose.msra.mxu0 0
        %2464 = vmatpush.bf16.xpose.msra.mxu0 0
        %2465 = vmatpush.bf16.xpose.msra.mxu0 0
        %2466 = vmatpush.bf16.xpose.msra.mxu0 0
        %2467 = vmatpush.bf16.xpose.msra.mxu0 0
        %2468 = vmatpush.bf16.xpose.msra.mxu0 %v2459
        %2469 = vmatmul.bf16.gmra.mxu0 %v2456
        %v2470 = vpop.f32.mrf.mxu0
        %v2471 = vadd.f32 0.0, %v2470
        %v2472 = vpop.f32.mrf.mxu0
        %2473 = vdwg.mxu0
        %2474 = vrot.lane.b32.xlu0 %v1505, 104
        %v2475 = vpop.permute.xlu0 %2474
        %v2477 = vsel %vm948, %v2475, 0
        %v2480 = vsel %vm948, %v871, 0
        %2482 = vmatpush.bf16.xpose.msra.mxu0 0
        %2483 = vmatpush.bf16.xpose.msra.mxu0 0
        %2484 = vmatpush.bf16.xpose.msra.mxu0 0
        %2485 = vmatpush.bf16.xpose.msra.mxu0 0
        %2486 = vmatpush.bf16.xpose.msra.mxu0 0
        %2487 = vmatpush.bf16.xpose.msra.mxu0 0
        %2488 = vmatpush.bf16.xpose.msra.mxu0 0
        %2489 = vmatpush.bf16.xpose.msra.mxu0 %v2480
        %2490 = vmatmul.bf16.gmra.mxu0 %v2477
        %v2491 = vpop.f32.mrf.mxu0
        %v2492 = vadd.f32 0.0, %v2491
        %v2493 = vpop.f32.mrf.mxu0
        %2494 = vdwg.mxu0
        %2495 = vrot.lane.b32.xlu0 %v1225, 80
        %v2496 = vpop.permute.xlu0 %2495
        %v2498 = vsel %vm948, %v2496, 0
        %2500 = vmatpush.bf16.xpose.msra.mxu0 0
        %2501 = vmatpush.bf16.xpose.msra.mxu0 0
        %2502 = vmatpush.bf16.xpose.msra.mxu0 0
        %2503 = vmatpush.bf16.xpose.msra.mxu0 0
        %2504 = vmatpush.bf16.xpose.msra.mxu0 0
        %2505 = vmatpush.bf16.xpose.msra.mxu0 0
        %2506 = vmatpush.bf16.xpose.msra.mxu0 0
        %2507 = vmatpush.bf16.xpose.msra.mxu0 %v2498
        %2508 = vmatmul.bf16.gmra.mxu0 %v2414
        %v2509 = vpop.f32.mrf.mxu0
        %v2510 = vadd.f32 0.0, %v2509
        %v2511 = vpop.f32.mrf.mxu0
        %2512 = vdwg.mxu0
        %2513 = vrot.lane.b32.xlu0 %v1255, 80
        %v2514 = vpop.permute.xlu0 %2513
        %v2516 = vsel %vm948, %v2514, 0
        %2518 = vmatpush.bf16.xpose.msra.mxu0 0
        %2519 = vmatpush.bf16.xpose.msra.mxu0 0
        %2520 = vmatpush.bf16.xpose.msra.mxu0 0
        %2521 = vmatpush.bf16.xpose.msra.mxu0 0
        %2522 = vmatpush.bf16.xpose.msra.mxu0 0
        %2523 = vmatpush.bf16.xpose.msra.mxu0 0
        %2524 = vmatpush.bf16.xpose.msra.mxu0 0
        %2525 = vmatpush.bf16.xpose.msra.mxu0 %v2516
        %2526 = vmatmul.bf16.gmra.mxu0 %v2435
        %v2527 = vpop.f32.mrf.mxu0
        %v2528 = vadd.f32 0.0, %v2527
        %v2529 = vpop.f32.mrf.mxu0
        %2530 = vdwg.mxu0
        %2531 = vrot.lane.b32.xlu0 %v1284, 80
        %v2532 = vpop.permute.xlu0 %2531
        %v2534 = vsel %vm948, %v2532, 0
        %2536 = vmatpush.bf16.xpose.msra.mxu0 0
        %2537 = vmatpush.bf16.xpose.msra.mxu0 0
        %2538 = vmatpush.bf16.xpose.msra.mxu0 0
        %2539 = vmatpush.bf16.xpose.msra.mxu0 0
        %2540 = vmatpush.bf16.xpose.msra.mxu0 0
        %2541 = vmatpush.bf16.xpose.msra.mxu0 0
        %2542 = vmatpush.bf16.xpose.msra.mxu0 0
        %2543 = vmatpush.bf16.xpose.msra.mxu0 %v2534
        %2544 = vmatmul.bf16.gmra.mxu0 %v2456
        %v2545 = vpop.f32.mrf.mxu0
        %v2546 = vadd.f32 0.0, %v2545
        %v2547 = vpop.f32.mrf.mxu0
        %2548 = vdwg.mxu0
        %2549 = vrot.lane.b32.xlu0 %v1313, 80
        %v2550 = vpop.permute.xlu0 %2549
        %v2552 = vsel %vm948, %v2550, 0
        %2554 = vmatpush.bf16.xpose.msra.mxu0 0
        %2555 = vmatpush.bf16.xpose.msra.mxu0 0
        %2556 = vmatpush.bf16.xpose.msra.mxu0 0
        %2557 = vmatpush.bf16.xpose.msra.mxu0 0
        %2558 = vmatpush.bf16.xpose.msra.mxu0 0
        %2559 = vmatpush.bf16.xpose.msra.mxu0 0
        %2560 = vmatpush.bf16.xpose.msra.mxu0 0
        %2561 = vmatpush.bf16.xpose.msra.mxu0 %v2552
        %2562 = vmatmul.bf16.gmra.mxu0 %v2477
        %v2563 = vpop.f32.mrf.mxu0
        %v2564 = vadd.f32 0.0, %v2563
        %v2565 = vpop.f32.mrf.mxu0
        %2566 = vdwg.mxu0
        %2571 = vrot.lane.b32.xlu0 %v2510, 8
        %v2572 = vpop.permute.xlu0 %2571
        %2573 = vrot.lane.b32.xlu0 %v2528, 8
        %v2574 = vpop.permute.xlu0 %2573
        %2575 = vrot.lane.b32.xlu0 %v2546, 8
        %v2576 = vpop.permute.xlu0 %2575
        %2577 = vrot.lane.b32.xlu0 %v2564, 8
        %v2578 = vpop.permute.xlu0 %2577
        %v2583 = vsel %vm948, %v2429, %v2572
        %v2584 = vsel %vm948, %v2450, %v2574
        %v2585 = vsel %vm948, %v2471, %v2576
        %v2586 = vsel %vm948, %v2492, %v2578
        %v2587 = vsel %vm944, -1e+30, %v2583
        %v2588 = vsel %vm945, -1e+30, %v2584
        %v2589 = vsel %vm946, -1e+30, %v2585
        %v2590 = vsel %vm947, -1e+30, %v2586
        %v2591 = vsel %vm1113, %v2587, -inf
        %2592 = vmax.xlane.f32.xlu0 %v2591
        %v2593 = vpop.xlane.xlu0 %2592
        %v2594 = vsel %vm1113, %v2588, -inf
        %2595 = vmax.xlane.f32.xlu0 %v2594
        %v2596 = vpop.xlane.xlu0 %2595
        %v2597 = vsel %vm1113, %v2589, -inf
        %2598 = vmax.xlane.f32.xlu0 %v2597
        %v2599 = vpop.xlane.xlu0 %2598
        %v2600 = vsel %vm1113, %v2590, -inf
        %2601 = vmax.xlane.f32.xlu0 %v2600
        %v2602 = vpop.xlane.xlu0 %2601
        %v2603 = vsub.f32 %v2587, %v2593
        %v2604 = vsub.f32 %v2588, %v2596
        %v2605 = vsub.f32 %v2589, %v2599
        %v2606 = vsub.f32 %v2590, %v2602
        %v2607 = vmul.f32 %v2603, 1.442695
        %v2608 = vpow.pop %v2607
        %v2609 = vmul.f32 %v2604, 1.442695
        %v2610 = vpow.pop %v2609
        %v2611 = vmul.f32 %v2605, 1.442695
        %v2612 = vpow.pop %v2611
        %v2613 = vmul.f32 %v2606, 1.442695
        %v2614 = vpow.pop %v2613
        %v2615 = vsel %vm1113, %v2608, 0.0
        %2616 = vadd.xlane.f32.xlu0 %v2615
        %v2617 = vpop.xlane.xlu0 %2616
        %v2618 = vsel %vm1113, %v2610, 0.0
        %2619 = vadd.xlane.f32.xlu0 %v2618
        %v2620 = vpop.xlane.xlu0 %2619
        %v2621 = vsel %vm1113, %v2612, 0.0
        %2622 = vadd.xlane.f32.xlu0 %v2621
        %v2623 = vpop.xlane.xlu0 %2622
        %v2624 = vsel %vm1113, %v2614, 0.0
        %2625 = vadd.xlane.f32.xlu0 %v2624
        %v2626 = vpop.xlane.xlu0 %2625
        %v2627 = vrcp.pop %v2617
        %v2628 = vmul.f32 %v2617, %v2627
        %v2629 = vsub.f32 1.0, %v2628
        %v2630 = vmul.f32 %v2627, %v2629
        %v2631 = vadd.f32 %v2627, %v2630
        %vm2632 = vweird.f32 %v2617
        %vm2633 = vweird.f32 %v2627
        %vm2634 = vmor %vm2632, %vm2633
        %v2635 = vsel %vm2634, %v2627, %v2631
        %v2636 = vand.u32 2147483647, %v2617
        %vm2637 = vcmp.eq.f32.partialorder %v2636, 8.507059e+37
        %v2638 = vand.u32 %v2617, 2147483648
        %v2639 = vor.u32 1.1754944e-38, %v2638
        %v2640 = vsel %vm2637, %v2639, %v2635
        %v2641 = vrcp.pop %v2620
        %v2642 = vmul.f32 %v2620, %v2641
        %v2643 = vsub.f32 1.0, %v2642
        %v2644 = vmul.f32 %v2641, %v2643
        %v2645 = vadd.f32 %v2641, %v2644
        %vm2646 = vweird.f32 %v2620
        %vm2647 = vweird.f32 %v2641
        %vm2648 = vmor %vm2646, %vm2647
        %v2649 = vsel %vm2648, %v2641, %v2645
        %v2650 = vand.u32 2147483647, %v2620
        %vm2651 = vcmp.eq.f32.partialorder %v2650, 8.507059e+37
        %v2652 = vand.u32 %v2620, 2147483648
        %v2653 = vor.u32 1.1754944e-38, %v2652
        %v2654 = vsel %vm2651, %v2653, %v2649
        %v2655 = vrcp.pop %v2623
        %v2656 = vmul.f32 %v2623, %v2655
        %v2657 = vsub.f32 1.0, %v2656
        %v2658 = vmul.f32 %v2655, %v2657
        %v2659 = vadd.f32 %v2655, %v2658
        %vm2660 = vweird.f32 %v2623
        %vm2661 = vweird.f32 %v2655
        %vm2662 = vmor %vm2660, %vm2661
        %v2663 = vsel %vm2662, %v2655, %v2659
        %v2664 = vand.u32 2147483647, %v2623
        %vm2665 = vcmp.eq.f32.partialorder %v2664, 8.507059e+37
        %v2666 = vand.u32 %v2623, 2147483648
        %v2667 = vor.u32 1.1754944e-38, %v2666
        %v2668 = vsel %vm2665, %v2667, %v2663
        %v2669 = vrcp.pop %v2626
        %v2670 = vmul.f32 %v2626, %v2669
        %v2671 = vsub.f32 1.0, %v2670
        %v2672 = vmul.f32 %v2669, %v2671
        %v2673 = vadd.f32 %v2669, %v2672
        %vm2674 = vweird.f32 %v2626
        %vm2675 = vweird.f32 %v2669
        %vm2676 = vmor %vm2674, %vm2675
        %v2677 = vsel %vm2676, %v2669, %v2673
        %v2678 = vand.u32 2147483647, %v2626
        %vm2679 = vcmp.eq.f32.partialorder %v2678, 8.507059e+37
        %v2680 = vand.u32 %v2626, 2147483648
        %v2681 = vor.u32 1.1754944e-38, %v2680
        %v2682 = vsel %vm2679, %v2681, %v2677
        %v2683 = vmul.f32 %v2608, %v2640
        %v2684 = vmul.f32 %v2610, %v2654
        %v2685 = vmul.f32 %v2612, %v2668
        %v2686 = vmul.f32 %v2614, %v2682
        %v2687 = vadd.f32 %v2203, %v2683
        %v2688 = vadd.f32 %v2204, %v2684
        %v2689 = vadd.f32 %v2205, %v2685
        %v2690 = vadd.f32 %v2206, %v2686
        %v2691 = vpack.c.bf16 %v2683, %v2683
        %v2692 = vpack.c.bf16 %v2684, %v2684
        %v2693 = vpack.c.bf16 %v2685, %v2685
        %v2694 = vpack.c.bf16 %v2686, %v2686
        %v2696 = vunpack.c.l.b16 %v2691
        %v2697 = vpack.c.b16 %v2696, %v2696
        %2698 = vrot.lane.b32.xlu0 %v2697, 120
        %v2699 = vpop.permute.xlu0 %2698
        %2700 = vrot.lane.b32.xlu0 %v1225, 72
        %v2701 = vpop.permute.xlu0 %2700
        %v2703 = vsel %vm948, %v2699, 0
        %v2706 = vsel %vm1231, %v2701, 0
        %2708 = vmatpush.bf16.msra.mxu0 0
        %2709 = vmatpush.bf16.msra.mxu0 0
        %2710 = vmatpush.bf16.msra.mxu0 0
        %2711 = vmatpush.bf16.msra.mxu0 0
        %2712 = vmatpush.bf16.msra.mxu0 0
        %2713 = vmatpush.bf16.msra.mxu0 0
        %2714 = vmatpush.bf16.msra.mxu0 0
        %2715 = vmatpush.bf16.msra.mxu0 %v2706
        %2716 = vmatmul.bf16.gmra.mxu0 %v2703
        %v2717 = vpop.f32.mrf.mxu0
        %v2718 = vadd.f32 0.0, %v2717
        %v2719 = vpop.f32.mrf.mxu0
        %2720 = vdwg.mxu0
        %v2722 = vunpack.c.l.b16 %v2692
        %v2723 = vpack.c.b16 %v2722, %v2722
        %2724 = vrot.lane.b32.xlu0 %v2723, 120
        %v2725 = vpop.permute.xlu0 %2724
        %2726 = vrot.lane.b32.xlu0 %v1255, 72
        %v2727 = vpop.permute.xlu0 %2726
        %v2729 = vsel %vm948, %v2725, 0
        %v2732 = vsel %vm1231, %v2727, 0
        %2734 = vmatpush.bf16.msra.mxu0 0
        %2735 = vmatpush.bf16.msra.mxu0 0
        %2736 = vmatpush.bf16.msra.mxu0 0
        %2737 = vmatpush.bf16.msra.mxu0 0
        %2738 = vmatpush.bf16.msra.mxu0 0
        %2739 = vmatpush.bf16.msra.mxu0 0
        %2740 = vmatpush.bf16.msra.mxu0 0
        %2741 = vmatpush.bf16.msra.mxu0 %v2732
        %2742 = vmatmul.bf16.gmra.mxu0 %v2729
        %v2743 = vpop.f32.mrf.mxu0
        %v2744 = vadd.f32 0.0, %v2743
        %v2745 = vpop.f32.mrf.mxu0
        %2746 = vdwg.mxu0
        %v2748 = vunpack.c.l.b16 %v2693
        %v2749 = vpack.c.b16 %v2748, %v2748
        %2750 = vrot.lane.b32.xlu0 %v2749, 120
        %v2751 = vpop.permute.xlu0 %2750
        %2752 = vrot.lane.b32.xlu0 %v1284, 72
        %v2753 = vpop.permute.xlu0 %2752
        %v2755 = vsel %vm948, %v2751, 0
        %v2758 = vsel %vm1231, %v2753, 0
        %2760 = vmatpush.bf16.msra.mxu0 0
        %2761 = vmatpush.bf16.msra.mxu0 0
        %2762 = vmatpush.bf16.msra.mxu0 0
        %2763 = vmatpush.bf16.msra.mxu0 0
        %2764 = vmatpush.bf16.msra.mxu0 0
        %2765 = vmatpush.bf16.msra.mxu0 0
        %2766 = vmatpush.bf16.msra.mxu0 0
        %2767 = vmatpush.bf16.msra.mxu0 %v2758
        %2768 = vmatmul.bf16.gmra.mxu0 %v2755
        %v2769 = vpop.f32.mrf.mxu0
        %v2770 = vadd.f32 0.0, %v2769
        %v2771 = vpop.f32.mrf.mxu0
        %2772 = vdwg.mxu0
        %v2774 = vunpack.c.l.b16 %v2694
        %v2775 = vpack.c.b16 %v2774, %v2774
        %2776 = vrot.lane.b32.xlu0 %v2775, 120
        %v2777 = vpop.permute.xlu0 %2776
        %2778 = vrot.lane.b32.xlu0 %v1313, 72
        %v2779 = vpop.permute.xlu0 %2778
        %v2781 = vsel %vm948, %v2777, 0
        %v2784 = vsel %vm1231, %v2779, 0
        %2786 = vmatpush.bf16.msra.mxu0 0
        %2787 = vmatpush.bf16.msra.mxu0 0
        %2788 = vmatpush.bf16.msra.mxu0 0
        %2789 = vmatpush.bf16.msra.mxu0 0
        %2790 = vmatpush.bf16.msra.mxu0 0
        %2791 = vmatpush.bf16.msra.mxu0 0
        %2792 = vmatpush.bf16.msra.mxu0 0
        %2793 = vmatpush.bf16.msra.mxu0 %v2784
        %2794 = vmatmul.bf16.gmra.mxu0 %v2781
        %v2795 = vpop.f32.mrf.mxu0
        %v2796 = vadd.f32 0.0, %v2795
        %v2797 = vpop.f32.mrf.mxu0
        %2798 = vdwg.mxu0
        %v2800 = vunpack.c.l.b16 %v859
        %v2801 = vpack.c.b16 %v2800, %v2800
        %2802 = vrot.lane.b32.xlu0 %v2801, 120
        %v2803 = vpop.permute.xlu0 %2802
        %v2805 = vsel %vm948, %v2691, 0
        %v2808 = vsel %vm1231, %v2803, 0
        %2810 = vmatpush.bf16.msra.mxu0 0
        %2811 = vmatpush.bf16.msra.mxu0 0
        %2812 = vmatpush.bf16.msra.mxu0 0
        %2813 = vmatpush.bf16.msra.mxu0 0
        %2814 = vmatpush.bf16.msra.mxu0 0
        %2815 = vmatpush.bf16.msra.mxu0 0
        %2816 = vmatpush.bf16.msra.mxu0 0
        %2817 = vmatpush.bf16.msra.mxu0 %v2808
        %2818 = vmatmul.bf16.gmra.mxu0 %v2805
        %v2819 = vpop.f32.mrf.mxu0
        %v2820 = vadd.f32 %v2718, %v2819
        %v2821 = vpop.f32.mrf.mxu0
        %2822 = vdwg.mxu0
        %v2824 = vunpack.c.l.b16 %v863
        %v2825 = vpack.c.b16 %v2824, %v2824
        %2826 = vrot.lane.b32.xlu0 %v2825, 120
        %v2827 = vpop.permute.xlu0 %2826
        %v2829 = vsel %vm948, %v2692, 0
        %v2832 = vsel %vm1231, %v2827, 0
        %2834 = vmatpush.bf16.msra.mxu0 0
        %2835 = vmatpush.bf16.msra.mxu0 0
        %2836 = vmatpush.bf16.msra.mxu0 0
        %2837 = vmatpush.bf16.msra.mxu0 0
        %2838 = vmatpush.bf16.msra.mxu0 0
        %2839 = vmatpush.bf16.msra.mxu0 0
        %2840 = vmatpush.bf16.msra.mxu0 0
        %2841 = vmatpush.bf16.msra.mxu0 %v2832
        %2842 = vmatmul.bf16.gmra.mxu0 %v2829
        %v2843 = vpop.f32.mrf.mxu0
        %v2844 = vadd.f32 %v2744, %v2843
        %v2845 = vpop.f32.mrf.mxu0
        %2846 = vdwg.mxu0
        %v2848 = vunpack.c.l.b16 %v867
        %v2849 = vpack.c.b16 %v2848, %v2848
        %2850 = vrot.lane.b32.xlu0 %v2849, 120
        %v2851 = vpop.permute.xlu0 %2850
        %v2853 = vsel %vm948, %v2693, 0
        %v2856 = vsel %vm1231, %v2851, 0
        %2858 = vmatpush.bf16.msra.mxu0 0
        %2859 = vmatpush.bf16.msra.mxu0 0
        %2860 = vmatpush.bf16.msra.mxu0 0
        %2861 = vmatpush.bf16.msra.mxu0 0
        %2862 = vmatpush.bf16.msra.mxu0 0
        %2863 = vmatpush.bf16.msra.mxu0 0
        %2864 = vmatpush.bf16.msra.mxu0 0
        %2865 = vmatpush.bf16.msra.mxu0 %v2856
        %2866 = vmatmul.bf16.gmra.mxu0 %v2853
        %v2867 = vpop.f32.mrf.mxu0
        %v2868 = vadd.f32 %v2770, %v2867
        %v2869 = vpop.f32.mrf.mxu0
        %2870 = vdwg.mxu0
        %v2872 = vunpack.c.l.b16 %v871
        %v2873 = vpack.c.b16 %v2872, %v2872
        %2874 = vrot.lane.b32.xlu0 %v2873, 120
        %v2875 = vpop.permute.xlu0 %2874
        %v2877 = vsel %vm948, %v2694, 0
        %v2880 = vsel %vm1231, %v2875, 0
        %2882 = vmatpush.bf16.msra.mxu0 0
        %2883 = vmatpush.bf16.msra.mxu0 0
        %2884 = vmatpush.bf16.msra.mxu0 0
        %2885 = vmatpush.bf16.msra.mxu0 0
        %2886 = vmatpush.bf16.msra.mxu0 0
        %2887 = vmatpush.bf16.msra.mxu0 0
        %2888 = vmatpush.bf16.msra.mxu0 0
        %2889 = vmatpush.bf16.msra.mxu0 %v2880
        %2890 = vmatmul.bf16.gmra.mxu0 %v2877
        %v2891 = vpop.f32.mrf.mxu0
        %v2892 = vadd.f32 %v2796, %v2891
        %v2893 = vpop.f32.mrf.mxu0
        %2894 = vdwg.mxu0
        %v2895 = vmul.f32 %v2687, 0.25
        %v2896 = vmul.f32 %v2688, 0.25
        %v2897 = vmul.f32 %v2689, 0.25
        %v2898 = vmul.f32 %v2690, 0.25
        %2899 = vst.msk [vmem:[%s599] sm:$0xff] %vm1113, %v2895
        %2900 = vst.msk [vmem:[%s599 + $0x8] sm:$0xff] %vm1113, %v2896
        %2901 = vst.msk [vmem:[%s599 + $0x10] sm:$0xff] %vm1113, %v2897
        %2902 = vst.msk [vmem:[%s599 + $0x18] sm:$0xff] %vm1113, %v2898
        %2907 = vrot.lane.b32.xlu0 %v1852, 8
        %v2908 = vpop.permute.xlu0 %2907
        %2909 = vrot.lane.b32.xlu0 %v1876, 8
        %v2910 = vpop.permute.xlu0 %2909
        %2911 = vrot.lane.b32.xlu0 %v1900, 8
        %v2912 = vpop.permute.xlu0 %2911
        %2913 = vrot.lane.b32.xlu0 %v1924, 8
        %v2914 = vpop.permute.xlu0 %2913
        %2923 = vrot.lane.b32.xlu0 %v2336, 16
        %v2924 = vpop.permute.xlu0 %2923
        %2925 = vrot.lane.b32.xlu0 %v2360, 16
        %v2926 = vpop.permute.xlu0 %2925
        %2927 = vrot.lane.b32.xlu0 %v2384, 16
        %v2928 = vpop.permute.xlu0 %2927
        %2929 = vrot.lane.b32.xlu0 %v2408, 16
        %v2930 = vpop.permute.xlu0 %2929
        %2939 = vrot.lane.b32.xlu0 %v2820, 24
        %v2940 = vpop.permute.xlu0 %2939
        %2941 = vrot.lane.b32.xlu0 %v2844, 24
        %v2942 = vpop.permute.xlu0 %2941
        %2943 = vrot.lane.b32.xlu0 %v2868, 24
        %v2944 = vpop.permute.xlu0 %2943
        %2945 = vrot.lane.b32.xlu0 %v2892, 24
        %v2946 = vpop.permute.xlu0 %2945
        %v2951 = vsel %vm948, %v1356, %v2908
        %v2952 = vsel %vm948, %v1380, %v2910
        %v2953 = vsel %vm948, %v1404, %v2912
        %v2954 = vsel %vm948, %v1428, %v2914
        %v2955 = vsel %vm1113, %v2951, %v2924
        %v2956 = vsel %vm1113, %v2952, %v2926
        %v2957 = vsel %vm1113, %v2953, %v2928
        %v2958 = vsel %vm1113, %v2954, %v2930
        %vm2959 = vcmask 195584
        %v2960 = vsel %vm2959, %v2955, %v2940
        %v2961 = vsel %vm2959, %v2956, %v2942
        %v2962 = vsel %vm2959, %v2957, %v2944
        %v2963 = vsel %vm2959, %v2958, %v2946
        %v2964 = vadd.f32 %v2960, %v629
        %v2965 = vadd.f32 %v2961, %v630
        %v2966 = vadd.f32 %v2962, %v631
        %v2967 = vadd.f32 %v2963, %v632
        %v2968 = vsel %vm633, %v2964, 0.0
        %2969 = vadd.xlane.f32.xlu0 %v2968
        %v2970 = vpop.xlane.xlu0 %2969
        %v2971 = vsel %vm633, %v2965, 0.0
        %2972 = vadd.xlane.f32.xlu0 %v2971
        %v2973 = vpop.xlane.xlu0 %2972
        %v2974 = vsel %vm633, %v2966, 0.0
        %2975 = vadd.xlane.f32.xlu0 %v2974
        %v2976 = vpop.xlane.xlu0 %2975
        %v2977 = vsel %vm633, %v2967, 0.0
        %2978 = vadd.xlane.f32.xlu0 %v2977
        %v2979 = vpop.xlane.xlu0 %2978
        %v2980 = vmul.f32 %v2970, %v652
        %v2981 = vmul.f32 %v2973, %v652
        %v2982 = vmul.f32 %v2976, %v652
        %v2983 = vmul.f32 %v2979, %v652
        %v2984 = vsub.f32 %v2964, %v2980
        %v2985 = vsub.f32 %v2965, %v2981
        %v2986 = vsub.f32 %v2966, %v2982
        %v2987 = vsub.f32 %v2967, %v2983
        %v2988 = vmul.f32 %v2984, %v2984
        %v2989 = vmul.f32 %v2985, %v2985
        %v2990 = vmul.f32 %v2986, %v2986
        %v2991 = vmul.f32 %v2987, %v2987
        %v2992 = vsel %vm633, %v2988, 0.0
        %2993 = vadd.xlane.f32.xlu0 %v2992
        %v2994 = vpop.xlane.xlu0 %2993
        %v2995 = vsel %vm633, %v2989, 0.0
        %2996 = vadd.xlane.f32.xlu0 %v2995
        %v2997 = vpop.xlane.xlu0 %2996
        %v2998 = vsel %vm633, %v2990, 0.0
        %2999 = vadd.xlane.f32.xlu0 %v2998
        %v3000 = vpop.xlane.xlu0 %2999
        %v3001 = vsel %vm633, %v2991, 0.0
        %3002 = vadd.xlane.f32.xlu0 %v3001
        %v3003 = vpop.xlane.xlu0 %3002
        %v3004 = vmul.f32 %v2994, %v652
        %v3005 = vmul.f32 %v2997, %v652
        %v3006 = vmul.f32 %v3000, %v652
        %v3007 = vmul.f32 %v3003, %v652
        %v3008 = vadd.f32 %v3004, 1e-05
        %v3009 = vadd.f32 %v3005, 1e-05
        %v3010 = vadd.f32 %v3006, 1e-05
        %v3011 = vadd.f32 %v3007, 1e-05
        %v3012 = vrsqrt.pop %v3008
        %v3013 = vmul.f32 %v3012, %v3008
        %v3014 = vmul.f32 %v3013, %v3012
        %v3015 = vmul.f32 0.5, %v3014
        %v3016 = vsub.f32 1.5, %v3015
        %v3017 = vmul.f32 %v3012, %v3016
        %vm3018 = vweird.f32 %v3008
        %vm3019 = vweird.f32 %v3012
        %vm3020 = vmor %vm3018, %vm3019
        %v3021 = vsel %vm3020, %v3012, %v3017
        %v3022 = vrsqrt.pop %v3009
        %v3023 = vmul.f32 %v3022, %v3009
        %v3024 = vmul.f32 %v3023, %v3022
        %v3025 = vmul.f32 0.5, %v3024
        %v3026 = vsub.f32 1.5, %v3025
        %v3027 = vmul.f32 %v3022, %v3026
        %vm3028 = vweird.f32 %v3009
        %vm3029 = vweird.f32 %v3022
        %vm3030 = vmor %vm3028, %vm3029
        %v3031 = vsel %vm3030, %v3022, %v3027
        %v3032 = vrsqrt.pop %v3010
        %v3033 = vmul.f32 %v3032, %v3010
        %v3034 = vmul.f32 %v3033, %v3032
        %v3035 = vmul.f32 0.5, %v3034
        %v3036 = vsub.f32 1.5, %v3035
        %v3037 = vmul.f32 %v3032, %v3036
        %vm3038 = vweird.f32 %v3010
        %vm3039 = vweird.f32 %v3032
        %vm3040 = vmor %vm3038, %vm3039
        %v3041 = vsel %vm3040, %v3032, %v3037
        %v3042 = vrsqrt.pop %v3011
        %v3043 = vmul.f32 %v3042, %v3011
        %v3044 = vmul.f32 %v3043, %v3042
        %v3045 = vmul.f32 0.5, %v3044
        %v3046 = vsub.f32 1.5, %v3045
        %v3047 = vmul.f32 %v3042, %v3046
        %vm3048 = vweird.f32 %v3011
        %vm3049 = vweird.f32 %v3042
        %vm3050 = vmor %vm3048, %vm3049
        %v3051 = vsel %vm3050, %v3042, %v3047
        %v3052 = vmul.f32 %v2984, %v3021
        %v3053 = vmul.f32 %v2985, %v3031
        %v3054 = vmul.f32 %v2986, %v3041
        %v3055 = vmul.f32 %v2987, %v3051
        %v3056 = vld [vmem:[%s8] sm:$0x1]
        %v3058 = vperm.slane %v3056, 0
        %v3060 = vmul.f32 %v3052, %v3058
        %v3061 = vmul.f32 %v3053, %v3058
        %v3062 = vmul.f32 %v3054, %v3058
        %v3063 = vmul.f32 %v3055, %v3058
        %v3064 = vld [vmem:[%s9] sm:$0x1]
        %v3066 = vperm.slane %v3064, 0
        %v3068 = vadd.f32 %v3060, %v3066
        %v3069 = vadd.f32 %v3061, %v3066
        %v3070 = vadd.f32 %v3062, %v3066
        %v3071 = vadd.f32 %v3063, %v3066
        %v3072 = vpack.c.bf16 %v3069, %v3068
        %v3073 = vpack.c.bf16 %v3071, %v3070
        %v3074 = vld [vmem:[%s10] sm:$0xf]
        %v3075 = vld [vmem:[%s10 + $0x4] sm:$0xf]
        %v3076 = vld [vmem:[%s10 + $0x8] sm:$0xf]
        %v3077 = vld [vmem:[%s10 + $0xc] sm:$0xf]
        %v3078 = vld [vmem:[%s11] sm:$0x1]
        %v3080 = vperm.slane %v3078, 0
        %v3086 = vunpack.c.l.b16 %v3074
        %v3087 = vunpack.c.l.b16 %v3075
        %v3088 = vunpack.c.l.b16 %v3076
        %v3089 = vunpack.c.l.b16 %v3077
        %v3090 = vpack.c.b16 %v3087, %v3086
        %v3091 = vpack.c.b16 %v3089, %v3088
        %v3095 = vsel %vm633, %v3072, 0
        %v3098 = vsel %vm633, %v3073, 0
        %3100 = vmatpush.bf16.msra.mxu0 0
        %3101 = vmatpush.bf16.msra.mxu0 0
        %3102 = vmatpush.bf16.msra.mxu0 0
        %3103 = vmatpush.bf16.msra.mxu0 0
        %3104 = vmatpush.bf16.msra.mxu0 0
        %3105 = vmatpush.bf16.msra.mxu0 0
        %3106 = vmatpush.bf16.msra.mxu0 %v3091
        %3107 = vmatpush.bf16.msra.mxu0 %v3090
        %3108 = vmatmul.bf16.gmra.mxu0 %v3095
        %v3109 = vpop.f32.mrf.mxu0
        %v3110 = vadd.f32 %v3080, %v3109
        %v3111 = vpop.f32.mrf.mxu0
        %v3112 = vadd.f32 %v3080, %v3111
        %3113 = vmatmul.bf16.gmra.mxu0 %v3098
        %v3114 = vpop.f32.mrf.mxu0
        %v3115 = vadd.f32 %v3080, %v3114
        %v3116 = vpop.f32.mrf.mxu0
        %v3117 = vadd.f32 %v3080, %v3116
        %3118 = vdwg.mxu0
        %v3119 = vmax.f32 %v3110, 0.0
        %v3120 = vmax.f32 %v3112, 0.0
        %v3121 = vmax.f32 %v3115, 0.0
        %v3122 = vmax.f32 %v3117, 0.0
        %v3123 = vpack.c.bf16 %v3120, %v3119
        %v3124 = vpack.c.bf16 %v3122, %v3121
        %v3125 = vld [vmem:[%s12] sm:$0xf]
        %v3126 = vld [vmem:[%s12 + $0x4] sm:$0xf]
        %v3127 = vld [vmem:[%s12 + $0x8] sm:$0xf]
        %v3128 = vld [vmem:[%s12 + $0xc] sm:$0xf]
        %v3129 = vld [vmem:[%s12 + $0x10] sm:$0xf]
        %v3130 = vld [vmem:[%s12 + $0x14] sm:$0xf]
        %v3131 = vld [vmem:[%s12 + $0x18] sm:$0xf]
        %v3132 = vld [vmem:[%s12 + $0x1c] sm:$0xf]
        %v3133 = vld [vmem:[%s12 + $0x20] sm:$0xf]
        %v3134 = vld [vmem:[%s12 + $0x24] sm:$0xf]
        %v3135 = vld [vmem:[%s12 + $0x28] sm:$0xf]
        %v3136 = vld [vmem:[%s12 + $0x2c] sm:$0xf]
        %v3137 = vld [vmem:[%s12 + $0x30] sm:$0xf]
        %v3138 = vld [vmem:[%s12 + $0x34] sm:$0xf]
        %v3139 = vld [vmem:[%s12 + $0x38] sm:$0xf]
        %v3140 = vld [vmem:[%s12 + $0x3c] sm:$0xf]
        %v3141 = vld [vmem:[%s13] sm:$0x1]
        %v3143 = vperm.slane %v3141, 0
        %v3161 = vunpack.c.l.b16 %v3125
        %v3162 = vunpack.c.l.b16 %v3126
        %v3163 = vunpack.c.l.b16 %v3127
        %v3164 = vunpack.c.l.b16 %v3128
        %v3165 = vunpack.c.l.b16 %v3129
        %v3166 = vunpack.c.l.b16 %v3130
        %v3167 = vunpack.c.l.b16 %v3131
        %v3168 = vunpack.c.l.b16 %v3132
        %v3169 = vunpack.c.l.b16 %v3133
        %v3170 = vunpack.c.l.b16 %v3134
        %v3171 = vunpack.c.l.b16 %v3135
        %v3172 = vunpack.c.l.b16 %v3136
        %v3173 = vunpack.c.l.b16 %v3137
        %v3174 = vunpack.c.l.b16 %v3138
        %v3175 = vunpack.c.l.b16 %v3139
        %v3176 = vunpack.c.l.b16 %v3140
        %v3177 = vpack.c.b16 %v3162, %v3161
        %v3178 = vpack.c.b16 %v3164, %v3163
        %v3179 = vpack.c.b16 %v3166, %v3165
        %v3180 = vpack.c.b16 %v3168, %v3167
        %v3181 = vpack.c.b16 %v3170, %v3169
        %v3182 = vpack.c.b16 %v3172, %v3171
        %v3183 = vpack.c.b16 %v3174, %v3173
        %v3184 = vpack.c.b16 %v3176, %v3175
        %3193 = vmatpush.bf16.msra.mxu0 %v3184
        %3194 = vmatpush.bf16.msra.mxu0 %v3183
        %3195 = vmatpush.bf16.msra.mxu0 %v3182
        %3196 = vmatpush.bf16.msra.mxu0 %v3181
        %3197 = vmatpush.bf16.msra.mxu0 %v3180
        %3198 = vmatpush.bf16.msra.mxu0 %v3179
        %3199 = vmatpush.bf16.msra.mxu0 %v3178
        %3200 = vmatpush.bf16.msra.mxu0 %v3177
        %3201 = vmatmul.bf16.gmra.mxu0 %v3123
        %v3202 = vpop.f32.mrf.mxu0
        %v3203 = vadd.f32 %v3143, %v3202
        %v3204 = vpop.f32.mrf.mxu0
        %v3205 = vadd.f32 %v3143, %v3204
        %3206 = vmatmul.bf16.gmra.mxu0 %v3124
        %v3207 = vpop.f32.mrf.mxu0
        %v3208 = vadd.f32 %v3143, %v3207
        %v3209 = vpop.f32.mrf.mxu0
        %v3210 = vadd.f32 %v3143, %v3209
        %3211 = vdwg.mxu0
        %v3212 = vadd.f32 %v3203, %v2964
        %v3213 = vadd.f32 %v3205, %v2965
        %v3214 = vadd.f32 %v3208, %v2966
        %v3215 = vadd.f32 %v3210, %v2967
        %3216 = vst.msk [vmem:[%s592] sm:$0xff] %vm633, %v3212
        %3217 = vst.msk [vmem:[%s592 + $0x8] sm:$0xff] %vm633, %v3213
        %3218 = vst.msk [vmem:[%s592 + $0x10] sm:$0xff] %vm633, %v3214
        %3219 = vst.msk [vmem:[%s592 + $0x18] sm:$0xff] %vm633, %v3215
        %s3220 = sand.u32 %s359, 1
        %s3221 = scalar_lea.sflag [#allocation4], %s3220
        %s3222 = sand.u32 %s359, 1
        %s3223 = smul.addr %s3222, 32
        %s3224 = scalar_lea.vmem [#allocation5], %s3223
        %s3225 = sand.u32 %s37, 1
        %s3226 = scalar_lea.sflag [#allocation7], %s3225
        %s3227 = sand.u32 %s385, 1
        %s3228 = smul.addr %s3227, 32
        %s3229 = scalar_lea.vmem [#allocation6], %s3228
        %s3230 = sand.u32 %s37, 1
        %s3231 = scalar_lea.sflag [#allocation7], %s3230
        %s3232 = sand.u32 %s411, 1
        %s3233 = smul.addr %s3232, 32
        %s3234 = scalar_lea.vmem [#allocation8], %s3233
        // Predicated region
        $region81: #{tpu_custom_call.1} parent=75 // pred_check
          %p3235 = pneg %p369
        $region82: #{tpu_custom_call.1} parent=75 // pred_check_branch
          %3237 = sbr.rel (%p3235) target = $region84
        $region83: #{tpu_custom_call.1} parent=75 // pred_region
          %s3238 = smul.u32 4, %s37
          %3240 = vsyncadd %s3221, 0
          %s3241 = smul.addr %s3238, 8
          %s3242 = scalar_lea.hbm %s14, %s3241
          %s3243 = sshll.u32 %s3224, 4
          %s3244 = int_to_ptr.vmem [resolvable:$true] %s3243
          %s3245 = sshll.u32 %s3242, 4
          %s3246 = int_to_ptr.hbm [resolvable:$true] %s3245
          %3251 = dma.vmem_to_hbm [thread:$0]  %s3244, 512, %s3246, %s3221, 128, 128, 8
        $region84: #{tpu_custom_call.1} parent=75 // pred_fallthru
          _
        // Predicated region
        $region85: #{tpu_custom_call.1} parent=75 // pred_check
          %p3252 = pneg %p395
        $region86: #{tpu_custom_call.1} parent=75 // pred_check_branch
          %3254 = sbr.rel (%p3252) target = $region88
        $region87: #{tpu_custom_call.1} parent=75 // pred_region
          %s3255 = smul.u32 4, %s37
          %3257 = vsyncadd %s3226, 0
          %s3258 = smul.addr %s3255, 8
          %s3259 = scalar_lea.hbm %s15, %s3258
          %s3260 = sshll.u32 %s3229, 4
          %s3261 = int_to_ptr.vmem [resolvable:$true] %s3260
          %s3262 = sshll.u32 %s3259, 4
          %s3263 = int_to_ptr.hbm [resolvable:$true] %s3262
          %3268 = dma.vmem_to_hbm [thread:$0]  %s3261, 512, %s3263, %s3226, 128, 128, 8
        $region88: #{tpu_custom_call.1} parent=75 // pred_fallthru
          _
        // Predicated region
        $region89: #{tpu_custom_call.1} parent=75 // pred_check
          %p3269 = pneg %p421
        $region90: #{tpu_custom_call.1} parent=75 // pred_check_branch
          %3271 = sbr.rel (%p3269) target = $region92
        $region91: #{tpu_custom_call.1} parent=75 // pred_region
          %s3272 = smul.u32 4, %s37
          %3274 = vsyncadd %s3231, 0
          %s3275 = smul.addr %s3272, 8
          %s3276 = scalar_lea.hbm %s16, %s3275
          %s3277 = sshll.u32 %s3234, 4
          %s3278 = int_to_ptr.vmem [resolvable:$true] %s3277
          %s3279 = sshll.u32 %s3276, 4
          %s3280 = int_to_ptr.hbm [resolvable:$true] %s3279
          %3285 = dma.vmem_to_hbm [thread:$0]  %s3278, 512, %s3280, %s3231, 128, 128, 8
        $region92: #{tpu_custom_call.1} parent=75 // pred_fallthru
          _
      $region76: #{tpu_custom_call.1} parent=5 // pred_fallthru
        _
      %p3286 = scmp.le.s32.totalorder 2, %s32
      // Predicated region
      $region93: #{tpu_custom_call.1} parent=5 // pred_check
        %p3287 = pneg %p3286
      $region94: #{tpu_custom_call.1} parent=5 // pred_check_branch
        %3289 = sbr.rel (%p3287) target = $region96
      $region95: #{tpu_custom_call.1} parent=5 // pred_region
        %s3290 = ssub.s32 %s32, 2
        // Predicated region
        $region97: #{tpu_custom_call.1} parent=95 // pred_check
          %p3291 = pneg %p375
        $region98: #{tpu_custom_call.1} parent=95 // pred_check_branch
          %3293 = sbr.rel (%p3291) target = $region100
        $region99: #{tpu_custom_call.1} parent=95 // pred_region
          %s3294 = sand.u32 %s360, 1
          %s3295 = scalar_lea.sflag [#allocation4], %s3294
          %s3296 = sand.u32 %s360, 1
          %s3297 = smul.addr %s3296, 32
          %s3298 = scalar_lea.vmem [#allocation5], %s3297
          %3300 = dma.done %s3295, 512
        $region100: #{tpu_custom_call.1} parent=95 // pred_fallthru
          _
        // Predicated region
        $region101: #{tpu_custom_call.1} parent=95 // pred_check
          %p3301 = pneg %p401
        $region102: #{tpu_custom_call.1} parent=95 // pred_check_branch
          %3303 = sbr.rel (%p3301) target = $region104
        $region103: #{tpu_custom_call.1} parent=95 // pred_region
          %s3304 = sand.u32 %s38, 1
          %s3305 = scalar_lea.sflag [#allocation7], %s3304
          %s3306 = sand.u32 %s386, 1
          %s3307 = smul.addr %s3306, 32
          %s3308 = scalar_lea.vmem [#allocation6], %s3307
          %3310 = dma.done %s3305, 512
        $region104: #{tpu_custom_call.1} parent=95 // pred_fallthru
          _
        // Predicated region
        $region105: #{tpu_custom_call.1} parent=95 // pred_check
          %p3311 = pneg %p427
        $region106: #{tpu_custom_call.1} parent=95 // pred_check_branch
          %3313 = sbr.rel (%p3311) target = $region108
        $region107: #{tpu_custom_call.1} parent=95 // pred_region
          %s3314 = sand.u32 %s38, 1
          %s3315 = scalar_lea.sflag [#allocation7], %s3314
          %s3316 = sand.u32 %s412, 1
          %s3317 = smul.addr %s3316, 32
          %s3318 = scalar_lea.vmem [#allocation8], %s3317
          %3320 = dma.done %s3315, 512
        $region108: #{tpu_custom_call.1} parent=95 // pred_fallthru
          _
      $region96: #{tpu_custom_call.1} parent=5 // pred_fallthru
        _
    $region6: #{tpu_custom_call.1} parent=1 // loop_footer
      %s36 = sadd.s32 1, %s32
    $region7: #{tpu_custom_call.1} parent=1 // loop_footer_branch
      %31 = sbr.rel target = $region3
    $region8: #{tpu_custom_call.1} parent=1 // loop_exit
      _
    %3321 = vsyncpa [#allocation3], 1
    %s3322 = scalar_lea.sflag [#allocation3], 1
    %3323 = vsyncpa %s3322, 1
    %3324 = vsyncpa [#allocation4], 1
    %s3325 = scalar_lea.sflag [#allocation4], 1
    %3326 = vsyncpa %s3325, 1
    %3327 = vsyncpa [#allocation7], 1
    %s3328 = scalar_lea.sflag [#allocation7], 1
    %3329 = vsyncpa %s3328, 1

</llo_original>
